<compile_context>
chip_gen: v5e
topology: v5e:2x2
jax: 0.10.0
libtpu: 0.0.40
codegen_flags: <defaults>
</compile_context>

<pallas_src>
import functools
import math

import jax
import jax.numpy as jnp
from jax.experimental import pallas as pl
from jax.experimental.pallas import tpu as pltpu


# ----------------------------------------------------------------------------
# Fused kernel: grid = (batch, res_block). One grid step = one ResBlock
# (plus conv_first on the first step and conv_last on the last step).
# ----------------------------------------------------------------------------
def _resnet_shape_kernel(x_ref, masks_ref, wf_ref, bf_ref, wb_ref, bb_ref,
                         wl_ref, bl_ref, o_ref, feat_ref, *, H, W):
    HW = H * W
    F = feat_ref.shape[0]
    i = pl.program_id(1)
    last = pl.num_programs(1) - 1

    def lrelu(v):
        return jnp.where(v >= 0, v, 0.1 * v)

    def shift_lanes(a, s):
        # out[:, p] = a[:, (p + s) % HW]; wrapped entries are zeroed by the
        # caller's mask.  Explicit slice+concat keeps the direction unambiguous.
        k = s % HW
        if k == 0:
            return a
        return jnp.concatenate([a[:, k:], a[:, :k]], axis=1)

    def conv3x3(a, w, b_col):
        # a: (Cin, HW) f32   w: (9, Cout, Cin) bf16   b_col: (Cout, 1) f32
        cout = w.shape[1]
        acc = jnp.zeros((cout, HW), jnp.float32)
        t = 0
        for dy in range(3):
            for dx in range(3):
                s = (dy - 1) * W + (dx - 1)
                if s == 0:                      # centre tap: no shift, no mask
                    piece = a.astype(jnp.bfloat16)
                else:
                    piece = (shift_lanes(a, s) * masks_ref[t]).astype(jnp.bfloat16)
                # Transposed, lane-dense dot: output axis is HW (256 lanes).
                acc = acc + jnp.dot(w[t], piece,
                                    preferred_element_type=jnp.float32)
                t += 1
        return acc + b_col

    # ---- feat = lrelu(conv_first(x))  (first block step only) --------------
    @pl.when(i == 0)
    def _():
        x = x_ref[0].astype(jnp.float32)                         # (Cin_p, HW)
        feat_ref[...] = lrelu(conv3x3(x, wf_ref[...], bf_ref[...]))

    # ---- ResBlock i:  feat = feat + conv2(relu(conv1(feat))) ---------------
    feat = feat_ref[...]                                         # (F, HW) f32
    wb = wb_ref[0]                                               # (18, F, F) bf16
    bb = bb_ref[0]                                               # (2F, 1) f32
    r = jnp.maximum(conv3x3(feat, wb[0:9], bb[0:F]), 0.0)
    r = conv3x3(r, wb[9:18], bb[F:2 * F])
    feat = feat + r
    feat_ref[...] = feat

    # ---- out = conv_last(lrelu(feat))  (last block step only) --------------
    @pl.when(i == last)
    def _():
        out = conv3x3(lrelu(feat), wl_ref[...], bl_ref[...])     # (Cout, HW)
        o_ref[0] = out.astype(o_ref.dtype)


# ----------------------------------------------------------------------------
# Public wrapper: NCHW in / NCHW out, one pallas_call for the whole network.
# ----------------------------------------------------------------------------
def resnet_shape_forward(x_nchw, params):
    N, Cin, H, W = x_nchw.shape
    F = params["conv_first_w"].shape[-1]
    Cout = params["conv_last_w"].shape[-1]
    num_block = len(params["blocks"])
    HW = H * W
    assert num_block >= 1 and F % 8 == 0

    Cin_p = ((Cin + 7) // 8) * 8   # pad tiny Cin up to a sublane multiple

    # NCHW -> (N, Cin_p, H*W): contiguous reshape + zero channel padding only.
    x_flat = x_nchw.reshape(N, Cin, HW).astype(jnp.float32)
    if Cin_p != Cin:
        x_flat = jnp.pad(x_flat, ((0, 0), (0, Cin_p - Cin), (0, 0)))

    # Per-tap in-bounds masks for SAME zero padding: (9, HW) f32 (1 = valid).
    ys, xs = jnp.meshgrid(jnp.arange(H), jnp.arange(W), indexing="ij")
    ys = ys.reshape(HW)
    xs = xs.reshape(HW)
    mask_rows = []
    for dy in range(3):
        for dx in range(3):
            ok = ((ys + dy - 1 >= 0) & (ys + dy - 1 <= H - 1) &
                  (xs + dx - 1 >= 0) & (xs + dx - 1 <= W - 1))
            mask_rows.append(ok.astype(jnp.float32))
    masks = jnp.stack(mask_rows)                                   # (9, HW)

    # Pack weights HWIO (3,3,ci,co) -> (9, co, ci); tap order (dy, dx)
    # row-major matches the kernel loop.  (Real PyTorch OIHW weights must be
    # permuted to HWIO (2,3,1,0) before this packing.)
    def pack(w):
        return jnp.transpose(w, (0, 1, 3, 2)).reshape(9, w.shape[3], w.shape[2])

    wf = params["conv_first_w"]
    if Cin_p != Cin:
        wf = jnp.pad(wf, ((0, 0), (0, 0), (0, Cin_p - Cin), (0, 0)))
    wf_p = pack(wf).astype(jnp.bfloat16)                           # (9, F, Cin_p)
    bf_p = params["conv_first_b"].reshape(F, 1).astype(jnp.float32)

    wb_p = jnp.stack(
        [jnp.concatenate([pack(b["w1"]), pack(b["w2"])], axis=0)
         for b in params["blocks"]]).astype(jnp.bfloat16)          # (B, 18, F, F)
    bb_p = jnp.stack(
        [jnp.concatenate([b["b1"].reshape(F, 1), b["b2"].reshape(F, 1)], axis=0)
         for b in params["blocks"]]).astype(jnp.float32)           # (B, 2F, 1)

    wl_p = pack(params["conv_last_w"]).astype(jnp.bfloat16)        # (9, Cout, F)
    bl_p = params["conv_last_b"].reshape(Cout, 1).astype(jnp.float32)

    kernel = functools.partial(_resnet_shape_kernel, H=H, W=W)

    out_flat = pl.pallas_call(
        kernel,
        out_shape=jax.ShapeDtypeStruct((N, Cout, HW), x_nchw.dtype),
        grid_spec=pltpu.PrefetchScalarGridSpec(
            num_scalar_prefetch=0,
            grid=(N, num_block),
            in_specs=[
                pl.BlockSpec((1, Cin_p, HW), lambda n, i: (n, 0, 0)),      # x
                pl.BlockSpec((9, HW), lambda n, i: (0, 0)),                # masks
                pl.BlockSpec((9, F, Cin_p), lambda n, i: (0, 0, 0)),       # conv_first w
                pl.BlockSpec((F, 1), lambda n, i: (0, 0)),                 # conv_first b
                pl.BlockSpec((1, 18, F, F), lambda n, i: (i, 0, 0, 0)),    # block i w
                pl.BlockSpec((1, 2 * F, 1), lambda n, i: (i, 0, 0)),       # block i b
                pl.BlockSpec((9, Cout, F), lambda n, i: (0, 0, 0)),        # conv_last w
                pl.BlockSpec((Cout, 1), lambda n, i: (0, 0)),              # conv_last b
            ],
            out_specs=pl.BlockSpec((1, Cout, HW), lambda n, i: (n, 0, 0)),
            scratch_shapes=[pltpu.VMEM((F, HW), jnp.float32)],             # feat
        ),
        compiler_params=pltpu.CompilerParams(
            dimension_semantics=("parallel", "arbitrary")),
    )(x_flat, masks, wf_p, bf_p, wb_p, bb_p, wl_p, bl_p)

    # (N, Cout, H*W) -> (N, Cout, H, W): contiguous reshape, no transpose.
    return out_flat.reshape(N, Cout, H, W)


# ----------------------------------------------------------------------------
# Deterministic synthetic parameters (module's conv shapes, HWIO layout)
# ----------------------------------------------------------------------------
def init_params(key, num_in_ch, num_out_ch, num_feat, num_block):
    def conv_w(k, cin, cout, scale=1.0):
        fan_in = cin * 9
        std = math.sqrt(2.0 / fan_in)              # kaiming_normal_-style
        return scale * std * jax.random.normal(k, (3, 3, cin, cout), jnp.float32)

    keys = jax.random.split(key, 2 + 3 * num_block)
    params = {
        # default_init_weights([conv_first, conv_last], 0.1): w *= 0.1, b = 0
        "conv_first_w": conv_w(keys[0], num_in_ch, num_feat, scale=0.1),
        "conv_first_b": jnp.zeros((num_feat,), jnp.float32),
        "conv_last_w": conv_w(keys[1], num_feat, num_out_ch, scale=0.1),
        "conv_last_b": jnp.zeros((num_out_ch,), jnp.float32),
        "blocks": [],
    }
    for i in range(num_block):
        k1, k2, kb = keys[2 + 3 * i], keys[3 + 3 * i], keys[4 + 3 * i]
        params["blocks"].append({
            "w1": conv_w(k1, num_feat, num_feat),
            "b1": 0.01 * jax.random.normal(kb, (num_feat,), jnp.float32),
            "w2": conv_w(k2, num_feat, num_feat),
            "b2": jnp.zeros((num_feat,), jnp.float32),
        })
    return params


# ----------------------------------------------------------------------------
# Pure-JAX reference (XLA convs) for a numerical sanity check
# ----------------------------------------------------------------------------
def _reference_forward(x_nchw, params):
    def conv(x, w, b):  # x: NHWC, w: HWIO
        y = jax.lax.conv_general_dilated(
            x, w, window_strides=(1, 1), padding="SAME",
            dimension_numbers=("NHWC", "HWIO", "NHWC"))
        return y + b[None, None, None, :]

    def lrelu(v):
        return jnp.where(v >= 0, v, 0.1 * v)

    x = jnp.transpose(x_nchw, (0, 2, 3, 1))
    feat = lrelu(conv(x, params["conv_first_w"], params["conv_first_b"]))
    for blk in params["blocks"]:
        r = jnp.maximum(conv(feat, blk["w1"], blk["b1"]), 0.0)
        r = conv(r, blk["w2"], blk["b2"])
        feat = feat + r
    out = conv(lrelu(feat), params["conv_last_w"], params["conv_last_b"])
    return jnp.transpose(out, (0, 3, 1, 2))


if __name__ == "__main__":
    # Small shapes consistent with the module (defaults num_in_ch=1,
    # num_out_ch=1; feat / blocks / spatial shrunk for the test).
    N, num_in_ch, num_out_ch, num_feat, num_block, H, W = 2, 1, 1, 32, 2, 16, 16

    key = jax.random.PRNGKey(0)
    kx, kp = jax.random.split(key)
    x = jax.random.normal(kx, (N, num_in_ch, H, W), jnp.float32)
    params = init_params(kp, num_in_ch, num_out_ch, num_feat, num_block)

    out = jax.jit(resnet_shape_forward)(x, params)
    jax.block_until_ready(out)
    assert out.shape == (N, num_out_ch, H, W), out.shape

    # Numerical check vs. pure-JAX reference (kernel uses bf16 MXU inputs with
    # f32 accumulation and an f32 residual stream, so allow a small tolerance).
    ref = _reference_forward(x, params)
    err = float(jnp.max(jnp.abs(out - ref)))
    scale = float(jnp.max(jnp.abs(ref)))
    assert err <= 5e-2 * scale + 2e-3, ("mismatch vs reference", err, scale)

    print("KERNEL_OK")
</pallas_src>

<mosaic_0001>
module attributes {stable_mosaic.version = 11 : i64} {
  func.func @_resnet_shape_kernel(%arg0: i32, %arg1: i32, %arg2: memref<1x8x256xf32, #tpu.memory_space<vmem>>, %arg3: memref<9x256xf32, #tpu.memory_space<vmem>>, %arg4: memref<9x32x8xbf16, #tpu.memory_space<vmem>>, %arg5: memref<32x1xf32, #tpu.memory_space<vmem>>, %arg6: memref<1x18x32x32xbf16, #tpu.memory_space<vmem>>, %arg7: memref<1x64x1xf32, #tpu.memory_space<vmem>>, %arg8: memref<9x1x32xbf16, #tpu.memory_space<vmem>>, %arg9: memref<1x1xf32, #tpu.memory_space<vmem>>, %arg10: memref<1x1x256xf32, #tpu.memory_space<vmem>>, %arg11: memref<32x256xf32, #tpu.memory_space<vmem>>) attributes {dimension_semantics = [#tpu.dimension_semantics<parallel>, #tpu.dimension_semantics<arbitrary>], iteration_bounds = array<i64: 2, 2>, scalar_prefetch = 0 : i64, scratch_operands = 1 : i64, tpu.core_type = #tpu.core_type<tc>, window_params = [{transform_indices = @transform_0, window_bounds = array<i64: 1, 8, 256>}, {pipeline_mode = #tpu.pipeline_mode<synchronous>, transform_indices = @transform_1, window_bounds = array<i64: 9, 256>}, {pipeline_mode = #tpu.pipeline_mode<synchronous>, transform_indices = @transform_2, window_bounds = array<i64: 9, 32, 8>}, {pipeline_mode = #tpu.pipeline_mode<synchronous>, transform_indices = @transform_3, window_bounds = array<i64: 32, 1>}, {transform_indices = @transform_4, window_bounds = array<i64: 1, 18, 32, 32>}, {transform_indices = @transform_5, window_bounds = array<i64: 1, 64, 1>}, {pipeline_mode = #tpu.pipeline_mode<synchronous>, transform_indices = @transform_6, window_bounds = array<i64: 9, 1, 32>}, {pipeline_mode = #tpu.pipeline_mode<synchronous>, transform_indices = @transform_7, window_bounds = array<i64: 1, 1>}, {transform_indices = @transform_8, window_bounds = array<i64: 1, 1, 256>}]} {
    %c0_i32 = arith.constant 0 : i32
    %0 = arith.cmpi eq, %arg1, %c0_i32 : i32
    %1 = arith.extui %0 : i1 to i32
    %c0_i32_0 = arith.constant 0 : i32
    %2 = arith.cmpi ne, %1, %c0_i32_0 : i32
    scf.if %2 {
      %c0_57 = arith.constant 0 : index
      %c0_58 = arith.constant 0 : index
      %c0_59 = arith.constant 0 : index
      %243 = vector.load %arg2[%c0_57, %c0_58, %c0_59] : memref<1x8x256xf32, #tpu.memory_space<vmem>>, vector<1x8x256xf32>
      %244 = vector.shape_cast %243 : vector<1x8x256xf32> to vector<8x256xf32>
      %c0_60 = arith.constant 0 : index
      %c0_61 = arith.constant 0 : index
      %c0_62 = arith.constant 0 : index
      %245 = vector.load %arg4[%c0_60, %c0_61, %c0_62] : memref<9x32x8xbf16, #tpu.memory_space<vmem>>, vector<9x32x8xbf16>
      %c0_63 = arith.constant 0 : index
      %c0_64 = arith.constant 0 : index
      %246 = vector.load %arg5[%c0_63, %c0_64] : memref<32x1xf32, #tpu.memory_space<vmem>>, vector<32x1xf32>
      %cst_65 = arith.constant 0.000000e+00 : f32
      %247 = vector.broadcast %cst_65 : f32 to vector<32x256xf32>
      %248 = vector.extract_strided_slice %244 {offsets = [0, 239], sizes = [8, 17], strides = [1, 1]} : vector<8x256xf32> to vector<8x17xf32>
      %249 = vector.extract_strided_slice %244 {offsets = [0, 0], sizes = [8, 239], strides = [1, 1]} : vector<8x256xf32> to vector<8x239xf32>
      %250 = tpu.concatenate %248, %249 in 1 : vector<8x17xf32>, vector<8x239xf32> -> vector<8x256xf32>
      %c0_66 = arith.constant 0 : index
      %c0_67 = arith.constant 0 : index
      %251 = vector.load %arg3[%c0_66, %c0_67] : memref<9x256xf32, #tpu.memory_space<vmem>>, vector<1x256xf32>
      %252 = vector.shape_cast %251 : vector<1x256xf32> to vector<256xf32>
      %253 = vector.shape_cast %252 : vector<256xf32> to vector<1x256xf32>
      %254 = vector.broadcast %253 : vector<1x256xf32> to vector<8x256xf32>
      %255 = arith.mulf %250, %254 : vector<8x256xf32>
      %256 = arith.truncf %255 : vector<8x256xf32> to vector<8x256xbf16>
      %257 = vector.extract_strided_slice %245 {offsets = [0, 0, 0], sizes = [1, 32, 8], strides = [1, 1, 1]} : vector<9x32x8xbf16> to vector<1x32x8xbf16>
      %258 = vector.shape_cast %257 : vector<1x32x8xbf16> to vector<32x8xbf16>
      %cst_68 = arith.constant dense<0.000000e+00> : vector<32x256xf32>
      %259 = tpu.matmul %258, %256, %cst_68 {dimension_numbers = #tpu.dot_dimension_numbers<[1], [0], [0], [1], [0, 0, 1, 1], [], []>} : vector<32x8xbf16>, vector<8x256xbf16>, vector<32x256xf32> -> vector<32x256xf32>
      %260 = arith.addf %247, %259 : vector<32x256xf32>
      %261 = vector.extract_strided_slice %244 {offsets = [0, 240], sizes = [8, 16], strides = [1, 1]} : vector<8x256xf32> to vector<8x16xf32>
      %262 = vector.extract_strided_slice %244 {offsets = [0, 0], sizes = [8, 240], strides = [1, 1]} : vector<8x256xf32> to vector<8x240xf32>
      %263 = tpu.concatenate %261, %262 in 1 : vector<8x16xf32>, vector<8x240xf32> -> vector<8x256xf32>
      %c1_69 = arith.constant 1 : index
      %c0_70 = arith.constant 0 : index
      %264 = vector.load %arg3[%c1_69, %c0_70] : memref<9x256xf32, #tpu.memory_space<vmem>>, vector<1x256xf32>
      %265 = vector.shape_cast %264 : vector<1x256xf32> to vector<256xf32>
      %266 = vector.shape_cast %265 : vector<256xf32> to vector<1x256xf32>
      %267 = vector.broadcast %266 : vector<1x256xf32> to vector<8x256xf32>
      %268 = arith.mulf %263, %267 : vector<8x256xf32>
      %269 = arith.truncf %268 : vector<8x256xf32> to vector<8x256xbf16>
      %270 = vector.extract_strided_slice %245 {offsets = [1, 0, 0], sizes = [1, 32, 8], strides = [1, 1, 1]} : vector<9x32x8xbf16> to vector<1x32x8xbf16>
      %271 = vector.shape_cast %270 : vector<1x32x8xbf16> to vector<32x8xbf16>
      %cst_71 = arith.constant dense<0.000000e+00> : vector<32x256xf32>
      %272 = tpu.matmul %271, %269, %cst_71 {dimension_numbers = #tpu.dot_dimension_numbers<[1], [0], [0], [1], [0, 0, 1, 1], [], []>} : vector<32x8xbf16>, vector<8x256xbf16>, vector<32x256xf32> -> vector<32x256xf32>
      %273 = arith.addf %260, %272 : vector<32x256xf32>
      %274 = vector.extract_strided_slice %244 {offsets = [0, 241], sizes = [8, 15], strides = [1, 1]} : vector<8x256xf32> to vector<8x15xf32>
      %275 = vector.extract_strided_slice %244 {offsets = [0, 0], sizes = [8, 241], strides = [1, 1]} : vector<8x256xf32> to vector<8x241xf32>
      %276 = tpu.concatenate %274, %275 in 1 : vector<8x15xf32>, vector<8x241xf32> -> vector<8x256xf32>
      %c2_72 = arith.constant 2 : index
      %c0_73 = arith.constant 0 : index
      %277 = vector.load %arg3[%c2_72, %c0_73] : memref<9x256xf32, #tpu.memory_space<vmem>>, vector<1x256xf32>
      %278 = vector.shape_cast %277 : vector<1x256xf32> to vector<256xf32>
      %279 = vector.shape_cast %278 : vector<256xf32> to vector<1x256xf32>
      %280 = vector.broadcast %279 : vector<1x256xf32> to vector<8x256xf32>
      %281 = arith.mulf %276, %280 : vector<8x256xf32>
      %282 = arith.truncf %281 : vector<8x256xf32> to vector<8x256xbf16>
      %283 = vector.extract_strided_slice %245 {offsets = [2, 0, 0], sizes = [1, 32, 8], strides = [1, 1, 1]} : vector<9x32x8xbf16> to vector<1x32x8xbf16>
      %284 = vector.shape_cast %283 : vector<1x32x8xbf16> to vector<32x8xbf16>
      %cst_74 = arith.constant dense<0.000000e+00> : vector<32x256xf32>
      %285 = tpu.matmul %284, %282, %cst_74 {dimension_numbers = #tpu.dot_dimension_numbers<[1], [0], [0], [1], [0, 0, 1, 1], [], []>} : vector<32x8xbf16>, vector<8x256xbf16>, vector<32x256xf32> -> vector<32x256xf32>
      %286 = arith.addf %273, %285 : vector<32x256xf32>
      %287 = vector.extract_strided_slice %244 {offsets = [0, 255], sizes = [8, 1], strides = [1, 1]} : vector<8x256xf32> to vector<8x1xf32>
      %288 = vector.extract_strided_slice %244 {offsets = [0, 0], sizes = [8, 255], strides = [1, 1]} : vector<8x256xf32> to vector<8x255xf32>
      %289 = tpu.concatenate %287, %288 in 1 : vector<8x1xf32>, vector<8x255xf32> -> vector<8x256xf32>
      %c3_75 = arith.constant 3 : index
      %c0_76 = arith.constant 0 : index
      %290 = vector.load %arg3[%c3_75, %c0_76] : memref<9x256xf32, #tpu.memory_space<vmem>>, vector<1x256xf32>
      %291 = vector.shape_cast %290 : vector<1x256xf32> to vector<256xf32>
      %292 = vector.shape_cast %291 : vector<256xf32> to vector<1x256xf32>
      %293 = vector.broadcast %292 : vector<1x256xf32> to vector<8x256xf32>
      %294 = arith.mulf %289, %293 : vector<8x256xf32>
      %295 = arith.truncf %294 : vector<8x256xf32> to vector<8x256xbf16>
      %296 = vector.extract_strided_slice %245 {offsets = [3, 0, 0], sizes = [1, 32, 8], strides = [1, 1, 1]} : vector<9x32x8xbf16> to vector<1x32x8xbf16>
      %297 = vector.shape_cast %296 : vector<1x32x8xbf16> to vector<32x8xbf16>
      %cst_77 = arith.constant dense<0.000000e+00> : vector<32x256xf32>
      %298 = tpu.matmul %297, %295, %cst_77 {dimension_numbers = #tpu.dot_dimension_numbers<[1], [0], [0], [1], [0, 0, 1, 1], [], []>} : vector<32x8xbf16>, vector<8x256xbf16>, vector<32x256xf32> -> vector<32x256xf32>
      %299 = arith.addf %286, %298 : vector<32x256xf32>
      %300 = arith.truncf %244 : vector<8x256xf32> to vector<8x256xbf16>
      %301 = vector.extract_strided_slice %245 {offsets = [4, 0, 0], sizes = [1, 32, 8], strides = [1, 1, 1]} : vector<9x32x8xbf16> to vector<1x32x8xbf16>
      %302 = vector.shape_cast %301 : vector<1x32x8xbf16> to vector<32x8xbf16>
      %cst_78 = arith.constant dense<0.000000e+00> : vector<32x256xf32>
      %303 = tpu.matmul %302, %300, %cst_78 {dimension_numbers = #tpu.dot_dimension_numbers<[1], [0], [0], [1], [0, 0, 1, 1], [], []>} : vector<32x8xbf16>, vector<8x256xbf16>, vector<32x256xf32> -> vector<32x256xf32>
      %304 = arith.addf %299, %303 : vector<32x256xf32>
      %305 = vector.extract_strided_slice %244 {offsets = [0, 1], sizes = [8, 255], strides = [1, 1]} : vector<8x256xf32> to vector<8x255xf32>
      %306 = vector.extract_strided_slice %244 {offsets = [0, 0], sizes = [8, 1], strides = [1, 1]} : vector<8x256xf32> to vector<8x1xf32>
      %307 = tpu.concatenate %305, %306 in 1 : vector<8x255xf32>, vector<8x1xf32> -> vector<8x256xf32>
      %c5_79 = arith.constant 5 : index
      %c0_80 = arith.constant 0 : index
      %308 = vector.load %arg3[%c5_79, %c0_80] : memref<9x256xf32, #tpu.memory_space<vmem>>, vector<1x256xf32>
      %309 = vector.shape_cast %308 : vector<1x256xf32> to vector<256xf32>
      %310 = vector.shape_cast %309 : vector<256xf32> to vector<1x256xf32>
      %311 = vector.broadcast %310 : vector<1x256xf32> to vector<8x256xf32>
      %312 = arith.mulf %307, %311 : vector<8x256xf32>
      %313 = arith.truncf %312 : vector<8x256xf32> to vector<8x256xbf16>
      %314 = vector.extract_strided_slice %245 {offsets = [5, 0, 0], sizes = [1, 32, 8], strides = [1, 1, 1]} : vector<9x32x8xbf16> to vector<1x32x8xbf16>
      %315 = vector.shape_cast %314 : vector<1x32x8xbf16> to vector<32x8xbf16>
      %cst_81 = arith.constant dense<0.000000e+00> : vector<32x256xf32>
      %316 = tpu.matmul %315, %313, %cst_81 {dimension_numbers = #tpu.dot_dimension_numbers<[1], [0], [0], [1], [0, 0, 1, 1], [], []>} : vector<32x8xbf16>, vector<8x256xbf16>, vector<32x256xf32> -> vector<32x256xf32>
      %317 = arith.addf %304, %316 : vector<32x256xf32>
      %318 = vector.extract_strided_slice %244 {offsets = [0, 15], sizes = [8, 241], strides = [1, 1]} : vector<8x256xf32> to vector<8x241xf32>
      %319 = vector.extract_strided_slice %244 {offsets = [0, 0], sizes = [8, 15], strides = [1, 1]} : vector<8x256xf32> to vector<8x15xf32>
      %320 = tpu.concatenate %318, %319 in 1 : vector<8x241xf32>, vector<8x15xf32> -> vector<8x256xf32>
      %c6_82 = arith.constant 6 : index
      %c0_83 = arith.constant 0 : index
      %321 = vector.load %arg3[%c6_82, %c0_83] : memref<9x256xf32, #tpu.memory_space<vmem>>, vector<1x256xf32>
      %322 = vector.shape_cast %321 : vector<1x256xf32> to vector<256xf32>
      %323 = vector.shape_cast %322 : vector<256xf32> to vector<1x256xf32>
      %324 = vector.broadcast %323 : vector<1x256xf32> to vector<8x256xf32>
      %325 = arith.mulf %320, %324 : vector<8x256xf32>
      %326 = arith.truncf %325 : vector<8x256xf32> to vector<8x256xbf16>
      %327 = vector.extract_strided_slice %245 {offsets = [6, 0, 0], sizes = [1, 32, 8], strides = [1, 1, 1]} : vector<9x32x8xbf16> to vector<1x32x8xbf16>
      %328 = vector.shape_cast %327 : vector<1x32x8xbf16> to vector<32x8xbf16>
      %cst_84 = arith.constant dense<0.000000e+00> : vector<32x256xf32>
      %329 = tpu.matmul %328, %326, %cst_84 {dimension_numbers = #tpu.dot_dimension_numbers<[1], [0], [0], [1], [0, 0, 1, 1], [], []>} : vector<32x8xbf16>, vector<8x256xbf16>, vector<32x256xf32> -> vector<32x256xf32>
      %330 = arith.addf %317, %329 : vector<32x256xf32>
      %331 = vector.extract_strided_slice %244 {offsets = [0, 16], sizes = [8, 240], strides = [1, 1]} : vector<8x256xf32> to vector<8x240xf32>
      %332 = vector.extract_strided_slice %244 {offsets = [0, 0], sizes = [8, 16], strides = [1, 1]} : vector<8x256xf32> to vector<8x16xf32>
      %333 = tpu.concatenate %331, %332 in 1 : vector<8x240xf32>, vector<8x16xf32> -> vector<8x256xf32>
      %c7_85 = arith.constant 7 : index
      %c0_86 = arith.constant 0 : index
      %334 = vector.load %arg3[%c7_85, %c0_86] : memref<9x256xf32, #tpu.memory_space<vmem>>, vector<1x256xf32>
      %335 = vector.shape_cast %334 : vector<1x256xf32> to vector<256xf32>
      %336 = vector.shape_cast %335 : vector<256xf32> to vector<1x256xf32>
      %337 = vector.broadcast %336 : vector<1x256xf32> to vector<8x256xf32>
      %338 = arith.mulf %333, %337 : vector<8x256xf32>
      %339 = arith.truncf %338 : vector<8x256xf32> to vector<8x256xbf16>
      %340 = vector.extract_strided_slice %245 {offsets = [7, 0, 0], sizes = [1, 32, 8], strides = [1, 1, 1]} : vector<9x32x8xbf16> to vector<1x32x8xbf16>
      %341 = vector.shape_cast %340 : vector<1x32x8xbf16> to vector<32x8xbf16>
      %cst_87 = arith.constant dense<0.000000e+00> : vector<32x256xf32>
      %342 = tpu.matmul %341, %339, %cst_87 {dimension_numbers = #tpu.dot_dimension_numbers<[1], [0], [0], [1], [0, 0, 1, 1], [], []>} : vector<32x8xbf16>, vector<8x256xbf16>, vector<32x256xf32> -> vector<32x256xf32>
      %343 = arith.addf %330, %342 : vector<32x256xf32>
      %344 = vector.extract_strided_slice %244 {offsets = [0, 17], sizes = [8, 239], strides = [1, 1]} : vector<8x256xf32> to vector<8x239xf32>
      %345 = vector.extract_strided_slice %244 {offsets = [0, 0], sizes = [8, 17], strides = [1, 1]} : vector<8x256xf32> to vector<8x17xf32>
      %346 = tpu.concatenate %344, %345 in 1 : vector<8x239xf32>, vector<8x17xf32> -> vector<8x256xf32>
      %c8_88 = arith.constant 8 : index
      %c0_89 = arith.constant 0 : index
      %347 = vector.load %arg3[%c8_88, %c0_89] : memref<9x256xf32, #tpu.memory_space<vmem>>, vector<1x256xf32>
      %348 = vector.shape_cast %347 : vector<1x256xf32> to vector<256xf32>
      %349 = vector.shape_cast %348 : vector<256xf32> to vector<1x256xf32>
      %350 = vector.broadcast %349 : vector<1x256xf32> to vector<8x256xf32>
      %351 = arith.mulf %346, %350 : vector<8x256xf32>
      %352 = arith.truncf %351 : vector<8x256xf32> to vector<8x256xbf16>
      %353 = vector.extract_strided_slice %245 {offsets = [8, 0, 0], sizes = [1, 32, 8], strides = [1, 1, 1]} : vector<9x32x8xbf16> to vector<1x32x8xbf16>
      %354 = vector.shape_cast %353 : vector<1x32x8xbf16> to vector<32x8xbf16>
      %cst_90 = arith.constant dense<0.000000e+00> : vector<32x256xf32>
      %355 = tpu.matmul %354, %352, %cst_90 {dimension_numbers = #tpu.dot_dimension_numbers<[1], [0], [0], [1], [0, 0, 1, 1], [], []>} : vector<32x8xbf16>, vector<8x256xbf16>, vector<32x256xf32> -> vector<32x256xf32>
      %356 = arith.addf %343, %355 : vector<32x256xf32>
      %357 = vector.broadcast %246 : vector<32x1xf32> to vector<32x256xf32>
      %358 = arith.addf %356, %357 : vector<32x256xf32>
      %cst_91 = arith.constant 0.000000e+00 : f32
      %359 = vector.broadcast %cst_91 : f32 to vector<32x256xf32>
      %360 = arith.cmpf oge, %358, %359 : vector<32x256xf32>
      %cst_92 = arith.constant 1.000000e-01 : f32
      %361 = vector.broadcast %cst_92 : f32 to vector<32x256xf32>
      %362 = arith.mulf %361, %358 : vector<32x256xf32>
      %363 = arith.select %360, %358, %362 : vector<32x256xi1>, vector<32x256xf32>
      %c0_93 = arith.constant 0 : index
      %c0_94 = arith.constant 0 : index
      %364 = vector.load %arg11[%c0_93, %c0_94] : memref<32x256xf32, #tpu.memory_space<vmem>>, vector<32x256xf32>
      tpu.vector_store %arg11[%c0_93, %c0_94], %363 {strides = array<i32>} : memref<32x256xf32, #tpu.memory_space<vmem>>, vector<32x256xf32>,
    } else {
    }
    %c0 = arith.constant 0 : index
    %c0_1 = arith.constant 0 : index
    %3 = vector.load %arg11[%c0, %c0_1] : memref<32x256xf32, #tpu.memory_space<vmem>>, vector<32x256xf32>
    %c0_2 = arith.constant 0 : index
    %c0_3 = arith.constant 0 : index
    %c0_4 = arith.constant 0 : index
    %c0_5 = arith.constant 0 : index
    %4 = vector.load %arg6[%c0_2, %c0_3, %c0_4, %c0_5] : memref<1x18x32x32xbf16, #tpu.memory_space<vmem>>, vector<1x18x32x32xbf16>
    %5 = vector.shape_cast %4 : vector<1x18x32x32xbf16> to vector<18x32x32xbf16>
    %c0_6 = arith.constant 0 : index
    %c0_7 = arith.constant 0 : index
    %c0_8 = arith.constant 0 : index
    %6 = vector.load %arg7[%c0_6, %c0_7, %c0_8] : memref<1x64x1xf32, #tpu.memory_space<vmem>>, vector<1x64x1xf32>
    %7 = vector.shape_cast %6 : vector<1x64x1xf32> to vector<64x1xf32>
    %8 = vector.extract_strided_slice %5 {offsets = [0, 0, 0], sizes = [9, 32, 32], strides = [1, 1, 1]} : vector<18x32x32xbf16> to vector<9x32x32xbf16>
    %9 = vector.extract_strided_slice %7 {offsets = [0, 0], sizes = [32, 1], strides = [1, 1]} : vector<64x1xf32> to vector<32x1xf32>
    %cst = arith.constant 0.000000e+00 : f32
    %10 = vector.broadcast %cst : f32 to vector<32x256xf32>
    %11 = vector.extract_strided_slice %3 {offsets = [0, 239], sizes = [32, 17], strides = [1, 1]} : vector<32x256xf32> to vector<32x17xf32>
    %12 = vector.extract_strided_slice %3 {offsets = [0, 0], sizes = [32, 239], strides = [1, 1]} : vector<32x256xf32> to vector<32x239xf32>
    %13 = tpu.concatenate %11, %12 in 1 : vector<32x17xf32>, vector<32x239xf32> -> vector<32x256xf32>
    %c0_9 = arith.constant 0 : index
    %c0_10 = arith.constant 0 : index
    %14 = vector.load %arg3[%c0_9, %c0_10] : memref<9x256xf32, #tpu.memory_space<vmem>>, vector<1x256xf32>
    %15 = vector.shape_cast %14 : vector<1x256xf32> to vector<256xf32>
    %16 = vector.shape_cast %15 : vector<256xf32> to vector<1x256xf32>
    %17 = vector.broadcast %16 : vector<1x256xf32> to vector<32x256xf32>
    %18 = arith.mulf %13, %17 : vector<32x256xf32>
    %19 = arith.truncf %18 : vector<32x256xf32> to vector<32x256xbf16>
    %20 = vector.extract_strided_slice %8 {offsets = [0, 0, 0], sizes = [1, 32, 32], strides = [1, 1, 1]} : vector<9x32x32xbf16> to vector<1x32x32xbf16>
    %21 = vector.shape_cast %20 : vector<1x32x32xbf16> to vector<32x32xbf16>
    %cst_11 = arith.constant dense<0.000000e+00> : vector<32x256xf32>
    %22 = tpu.matmul %21, %19, %cst_11 {dimension_numbers = #tpu.dot_dimension_numbers<[1], [0], [0], [1], [0, 0, 1, 1], [], []>} : vector<32x32xbf16>, vector<32x256xbf16>, vector<32x256xf32> -> vector<32x256xf32>
    %23 = arith.addf %10, %22 : vector<32x256xf32>
    %24 = vector.extract_strided_slice %3 {offsets = [0, 240], sizes = [32, 16], strides = [1, 1]} : vector<32x256xf32> to vector<32x16xf32>
    %25 = vector.extract_strided_slice %3 {offsets = [0, 0], sizes = [32, 240], strides = [1, 1]} : vector<32x256xf32> to vector<32x240xf32>
    %26 = tpu.concatenate %24, %25 in 1 : vector<32x16xf32>, vector<32x240xf32> -> vector<32x256xf32>
    %c1 = arith.constant 1 : index
    %c0_12 = arith.constant 0 : index
    %27 = vector.load %arg3[%c1, %c0_12] : memref<9x256xf32, #tpu.memory_space<vmem>>, vector<1x256xf32>
    %28 = vector.shape_cast %27 : vector<1x256xf32> to vector<256xf32>
    %29 = vector.shape_cast %28 : vector<256xf32> to vector<1x256xf32>
    %30 = vector.broadcast %29 : vector<1x256xf32> to vector<32x256xf32>
    %31 = arith.mulf %26, %30 : vector<32x256xf32>
    %32 = arith.truncf %31 : vector<32x256xf32> to vector<32x256xbf16>
    %33 = vector.extract_strided_slice %8 {offsets = [1, 0, 0], sizes = [1, 32, 32], strides = [1, 1, 1]} : vector<9x32x32xbf16> to vector<1x32x32xbf16>
    %34 = vector.shape_cast %33 : vector<1x32x32xbf16> to vector<32x32xbf16>
    %cst_13 = arith.constant dense<0.000000e+00> : vector<32x256xf32>
    %35 = tpu.matmul %34, %32, %cst_13 {dimension_numbers = #tpu.dot_dimension_numbers<[1], [0], [0], [1], [0, 0, 1, 1], [], []>} : vector<32x32xbf16>, vector<32x256xbf16>, vector<32x256xf32> -> vector<32x256xf32>
    %36 = arith.addf %23, %35 : vector<32x256xf32>
    %37 = vector.extract_strided_slice %3 {offsets = [0, 241], sizes = [32, 15], strides = [1, 1]} : vector<32x256xf32> to vector<32x15xf32>
    %38 = vector.extract_strided_slice %3 {offsets = [0, 0], sizes = [32, 241], strides = [1, 1]} : vector<32x256xf32> to vector<32x241xf32>
    %39 = tpu.concatenate %37, %38 in 1 : vector<32x15xf32>, vector<32x241xf32> -> vector<32x256xf32>
    %c2 = arith.constant 2 : index
    %c0_14 = arith.constant 0 : index
    %40 = vector.load %arg3[%c2, %c0_14] : memref<9x256xf32, #tpu.memory_space<vmem>>, vector<1x256xf32>
    %41 = vector.shape_cast %40 : vector<1x256xf32> to vector<256xf32>
    %42 = vector.shape_cast %41 : vector<256xf32> to vector<1x256xf32>
    %43 = vector.broadcast %42 : vector<1x256xf32> to vector<32x256xf32>
    %44 = arith.mulf %39, %43 : vector<32x256xf32>
    %45 = arith.truncf %44 : vector<32x256xf32> to vector<32x256xbf16>
    %46 = vector.extract_strided_slice %8 {offsets = [2, 0, 0], sizes = [1, 32, 32], strides = [1, 1, 1]} : vector<9x32x32xbf16> to vector<1x32x32xbf16>
    %47 = vector.shape_cast %46 : vector<1x32x32xbf16> to vector<32x32xbf16>
    %cst_15 = arith.constant dense<0.000000e+00> : vector<32x256xf32>
    %48 = tpu.matmul %47, %45, %cst_15 {dimension_numbers = #tpu.dot_dimension_numbers<[1], [0], [0], [1], [0, 0, 1, 1], [], []>} : vector<32x32xbf16>, vector<32x256xbf16>, vector<32x256xf32> -> vector<32x256xf32>
    %49 = arith.addf %36, %48 : vector<32x256xf32>
    %50 = vector.extract_strided_slice %3 {offsets = [0, 255], sizes = [32, 1], strides = [1, 1]} : vector<32x256xf32> to vector<32x1xf32>
    %51 = vector.extract_strided_slice %3 {offsets = [0, 0], sizes = [32, 255], strides = [1, 1]} : vector<32x256xf32> to vector<32x255xf32>
    %52 = tpu.concatenate %50, %51 in 1 : vector<32x1xf32>, vector<32x255xf32> -> vector<32x256xf32>
    %c3 = arith.constant 3 : index
    %c0_16 = arith.constant 0 : index
    %53 = vector.load %arg3[%c3, %c0_16] : memref<9x256xf32, #tpu.memory_space<vmem>>, vector<1x256xf32>
    %54 = vector.shape_cast %53 : vector<1x256xf32> to vector<256xf32>
    %55 = vector.shape_cast %54 : vector<256xf32> to vector<1x256xf32>
    %56 = vector.broadcast %55 : vector<1x256xf32> to vector<32x256xf32>
    %57 = arith.mulf %52, %56 : vector<32x256xf32>
    %58 = arith.truncf %57 : vector<32x256xf32> to vector<32x256xbf16>
    %59 = vector.extract_strided_slice %8 {offsets = [3, 0, 0], sizes = [1, 32, 32], strides = [1, 1, 1]} : vector<9x32x32xbf16> to vector<1x32x32xbf16>
    %60 = vector.shape_cast %59 : vector<1x32x32xbf16> to vector<32x32xbf16>
    %cst_17 = arith.constant dense<0.000000e+00> : vector<32x256xf32>
    %61 = tpu.matmul %60, %58, %cst_17 {dimension_numbers = #tpu.dot_dimension_numbers<[1], [0], [0], [1], [0, 0, 1, 1], [], []>} : vector<32x32xbf16>, vector<32x256xbf16>, vector<32x256xf32> -> vector<32x256xf32>
    %62 = arith.addf %49, %61 : vector<32x256xf32>
    %63 = arith.truncf %3 : vector<32x256xf32> to vector<32x256xbf16>
    %64 = vector.extract_strided_slice %8 {offsets = [4, 0, 0], sizes = [1, 32, 32], strides = [1, 1, 1]} : vector<9x32x32xbf16> to vector<1x32x32xbf16>
    %65 = vector.shape_cast %64 : vector<1x32x32xbf16> to vector<32x32xbf16>
    %cst_18 = arith.constant dense<0.000000e+00> : vector<32x256xf32>
    %66 = tpu.matmul %65, %63, %cst_18 {dimension_numbers = #tpu.dot_dimension_numbers<[1], [0], [0], [1], [0, 0, 1, 1], [], []>} : vector<32x32xbf16>, vector<32x256xbf16>, vector<32x256xf32> -> vector<32x256xf32>
    %67 = arith.addf %62, %66 : vector<32x256xf32>
    %68 = vector.extract_strided_slice %3 {offsets = [0, 1], sizes = [32, 255], strides = [1, 1]} : vector<32x256xf32> to vector<32x255xf32>
    %69 = vector.extract_strided_slice %3 {offsets = [0, 0], sizes = [32, 1], strides = [1, 1]} : vector<32x256xf32> to vector<32x1xf32>
    %70 = tpu.concatenate %68, %69 in 1 : vector<32x255xf32>, vector<32x1xf32> -> vector<32x256xf32>
    %c5 = arith.constant 5 : index
    %c0_19 = arith.constant 0 : index
    %71 = vector.load %arg3[%c5, %c0_19] : memref<9x256xf32, #tpu.memory_space<vmem>>, vector<1x256xf32>
    %72 = vector.shape_cast %71 : vector<1x256xf32> to vector<256xf32>
    %73 = vector.shape_cast %72 : vector<256xf32> to vector<1x256xf32>
    %74 = vector.broadcast %73 : vector<1x256xf32> to vector<32x256xf32>
    %75 = arith.mulf %70, %74 : vector<32x256xf32>
    %76 = arith.truncf %75 : vector<32x256xf32> to vector<32x256xbf16>
    %77 = vector.extract_strided_slice %8 {offsets = [5, 0, 0], sizes = [1, 32, 32], strides = [1, 1, 1]} : vector<9x32x32xbf16> to vector<1x32x32xbf16>
    %78 = vector.shape_cast %77 : vector<1x32x32xbf16> to vector<32x32xbf16>
    %cst_20 = arith.constant dense<0.000000e+00> : vector<32x256xf32>
    %79 = tpu.matmul %78, %76, %cst_20 {dimension_numbers = #tpu.dot_dimension_numbers<[1], [0], [0], [1], [0, 0, 1, 1], [], []>} : vector<32x32xbf16>, vector<32x256xbf16>, vector<32x256xf32> -> vector<32x256xf32>
    %80 = arith.addf %67, %79 : vector<32x256xf32>
    %81 = vector.extract_strided_slice %3 {offsets = [0, 15], sizes = [32, 241], strides = [1, 1]} : vector<32x256xf32> to vector<32x241xf32>
    %82 = vector.extract_strided_slice %3 {offsets = [0, 0], sizes = [32, 15], strides = [1, 1]} : vector<32x256xf32> to vector<32x15xf32>
    %83 = tpu.concatenate %81, %82 in 1 : vector<32x241xf32>, vector<32x15xf32> -> vector<32x256xf32>
    %c6 = arith.constant 6 : index
    %c0_21 = arith.constant 0 : index
    %84 = vector.load %arg3[%c6, %c0_21] : memref<9x256xf32, #tpu.memory_space<vmem>>, vector<1x256xf32>
    %85 = vector.shape_cast %84 : vector<1x256xf32> to vector<256xf32>
    %86 = vector.shape_cast %85 : vector<256xf32> to vector<1x256xf32>
    %87 = vector.broadcast %86 : vector<1x256xf32> to vector<32x256xf32>
    %88 = arith.mulf %83, %87 : vector<32x256xf32>
    %89 = arith.truncf %88 : vector<32x256xf32> to vector<32x256xbf16>
    %90 = vector.extract_strided_slice %8 {offsets = [6, 0, 0], sizes = [1, 32, 32], strides = [1, 1, 1]} : vector<9x32x32xbf16> to vector<1x32x32xbf16>
    %91 = vector.shape_cast %90 : vector<1x32x32xbf16> to vector<32x32xbf16>
    %cst_22 = arith.constant dense<0.000000e+00> : vector<32x256xf32>
    %92 = tpu.matmul %91, %89, %cst_22 {dimension_numbers = #tpu.dot_dimension_numbers<[1], [0], [0], [1], [0, 0, 1, 1], [], []>} : vector<32x32xbf16>, vector<32x256xbf16>, vector<32x256xf32> -> vector<32x256xf32>
    %93 = arith.addf %80, %92 : vector<32x256xf32>
    %94 = vector.extract_strided_slice %3 {offsets = [0, 16], sizes = [32, 240], strides = [1, 1]} : vector<32x256xf32> to vector<32x240xf32>
    %95 = vector.extract_strided_slice %3 {offsets = [0, 0], sizes = [32, 16], strides = [1, 1]} : vector<32x256xf32> to vector<32x16xf32>
    %96 = tpu.concatenate %94, %95 in 1 : vector<32x240xf32>, vector<32x16xf32> -> vector<32x256xf32>
    %c7 = arith.constant 7 : index
    %c0_23 = arith.constant 0 : index
    %97 = vector.load %arg3[%c7, %c0_23] : memref<9x256xf32, #tpu.memory_space<vmem>>, vector<1x256xf32>
    %98 = vector.shape_cast %97 : vector<1x256xf32> to vector<256xf32>
    %99 = vector.shape_cast %98 : vector<256xf32> to vector<1x256xf32>
    %100 = vector.broadcast %99 : vector<1x256xf32> to vector<32x256xf32>
    %101 = arith.mulf %96, %100 : vector<32x256xf32>
    %102 = arith.truncf %101 : vector<32x256xf32> to vector<32x256xbf16>
    %103 = vector.extract_strided_slice %8 {offsets = [7, 0, 0], sizes = [1, 32, 32], strides = [1, 1, 1]} : vector<9x32x32xbf16> to vector<1x32x32xbf16>
    %104 = vector.shape_cast %103 : vector<1x32x32xbf16> to vector<32x32xbf16>
    %cst_24 = arith.constant dense<0.000000e+00> : vector<32x256xf32>
    %105 = tpu.matmul %104, %102, %cst_24 {dimension_numbers = #tpu.dot_dimension_numbers<[1], [0], [0], [1], [0, 0, 1, 1], [], []>} : vector<32x32xbf16>, vector<32x256xbf16>, vector<32x256xf32> -> vector<32x256xf32>
    %106 = arith.addf %93, %105 : vector<32x256xf32>
    %107 = vector.extract_strided_slice %3 {offsets = [0, 17], sizes = [32, 239], strides = [1, 1]} : vector<32x256xf32> to vector<32x239xf32>
    %108 = vector.extract_strided_slice %3 {offsets = [0, 0], sizes = [32, 17], strides = [1, 1]} : vector<32x256xf32> to vector<32x17xf32>
    %109 = tpu.concatenate %107, %108 in 1 : vector<32x239xf32>, vector<32x17xf32> -> vector<32x256xf32>
    %c8 = arith.constant 8 : index
    %c0_25 = arith.constant 0 : index
    %110 = vector.load %arg3[%c8, %c0_25] : memref<9x256xf32, #tpu.memory_space<vmem>>, vector<1x256xf32>
    %111 = vector.shape_cast %110 : vector<1x256xf32> to vector<256xf32>
    %112 = vector.shape_cast %111 : vector<256xf32> to vector<1x256xf32>
    %113 = vector.broadcast %112 : vector<1x256xf32> to vector<32x256xf32>
    %114 = arith.mulf %109, %113 : vector<32x256xf32>
    %115 = arith.truncf %114 : vector<32x256xf32> to vector<32x256xbf16>
    %116 = vector.extract_strided_slice %8 {offsets = [8, 0, 0], sizes = [1, 32, 32], strides = [1, 1, 1]} : vector<9x32x32xbf16> to vector<1x32x32xbf16>
    %117 = vector.shape_cast %116 : vector<1x32x32xbf16> to vector<32x32xbf16>
    %cst_26 = arith.constant dense<0.000000e+00> : vector<32x256xf32>
    %118 = tpu.matmul %117, %115, %cst_26 {dimension_numbers = #tpu.dot_dimension_numbers<[1], [0], [0], [1], [0, 0, 1, 1], [], []>} : vector<32x32xbf16>, vector<32x256xbf16>, vector<32x256xf32> -> vector<32x256xf32>
    %119 = arith.addf %106, %118 : vector<32x256xf32>
    %120 = vector.broadcast %9 : vector<32x1xf32> to vector<32x256xf32>
    %121 = arith.addf %119, %120 : vector<32x256xf32>
    %cst_27 = arith.constant 0.000000e+00 : f32
    %122 = vector.broadcast %cst_27 : f32 to vector<32x256xf32>
    %123 = arith.maximumf %121, %122 : vector<32x256xf32>
    %124 = vector.extract_strided_slice %5 {offsets = [9, 0, 0], sizes = [9, 32, 32], strides = [1, 1, 1]} : vector<18x32x32xbf16> to vector<9x32x32xbf16>
    %125 = vector.extract_strided_slice %7 {offsets = [32, 0], sizes = [32, 1], strides = [1, 1]} : vector<64x1xf32> to vector<32x1xf32>
    %cst_28 = arith.constant 0.000000e+00 : f32
    %126 = vector.broadcast %cst_28 : f32 to vector<32x256xf32>
    %127 = vector.extract_strided_slice %123 {offsets = [0, 239], sizes = [32, 17], strides = [1, 1]} : vector<32x256xf32> to vector<32x17xf32>
    %128 = vector.extract_strided_slice %123 {offsets = [0, 0], sizes = [32, 239], strides = [1, 1]} : vector<32x256xf32> to vector<32x239xf32>
    %129 = tpu.concatenate %127, %128 in 1 : vector<32x17xf32>, vector<32x239xf32> -> vector<32x256xf32>
    %c0_29 = arith.constant 0 : index
    %c0_30 = arith.constant 0 : index
    %130 = vector.load %arg3[%c0_29, %c0_30] : memref<9x256xf32, #tpu.memory_space<vmem>>, vector<1x256xf32>
    %131 = vector.shape_cast %130 : vector<1x256xf32> to vector<256xf32>
    %132 = vector.shape_cast %131 : vector<256xf32> to vector<1x256xf32>
    %133 = vector.broadcast %132 : vector<1x256xf32> to vector<32x256xf32>
    %134 = arith.mulf %129, %133 : vector<32x256xf32>
    %135 = arith.truncf %134 : vector<32x256xf32> to vector<32x256xbf16>
    %136 = vector.extract_strided_slice %124 {offsets = [0, 0, 0], sizes = [1, 32, 32], strides = [1, 1, 1]} : vector<9x32x32xbf16> to vector<1x32x32xbf16>
    %137 = vector.shape_cast %136 : vector<1x32x32xbf16> to vector<32x32xbf16>
    %cst_31 = arith.constant dense<0.000000e+00> : vector<32x256xf32>
    %138 = tpu.matmul %137, %135, %cst_31 {dimension_numbers = #tpu.dot_dimension_numbers<[1], [0], [0], [1], [0, 0, 1, 1], [], []>} : vector<32x32xbf16>, vector<32x256xbf16>, vector<32x256xf32> -> vector<32x256xf32>
    %139 = arith.addf %126, %138 : vector<32x256xf32>
    %140 = vector.extract_strided_slice %123 {offsets = [0, 240], sizes = [32, 16], strides = [1, 1]} : vector<32x256xf32> to vector<32x16xf32>
    %141 = vector.extract_strided_slice %123 {offsets = [0, 0], sizes = [32, 240], strides = [1, 1]} : vector<32x256xf32> to vector<32x240xf32>
    %142 = tpu.concatenate %140, %141 in 1 : vector<32x16xf32>, vector<32x240xf32> -> vector<32x256xf32>
    %c1_32 = arith.constant 1 : index
    %c0_33 = arith.constant 0 : index
    %143 = vector.load %arg3[%c1_32, %c0_33] : memref<9x256xf32, #tpu.memory_space<vmem>>, vector<1x256xf32>
    %144 = vector.shape_cast %143 : vector<1x256xf32> to vector<256xf32>
    %145 = vector.shape_cast %144 : vector<256xf32> to vector<1x256xf32>
    %146 = vector.broadcast %145 : vector<1x256xf32> to vector<32x256xf32>
    %147 = arith.mulf %142, %146 : vector<32x256xf32>
    %148 = arith.truncf %147 : vector<32x256xf32> to vector<32x256xbf16>
    %149 = vector.extract_strided_slice %124 {offsets = [1, 0, 0], sizes = [1, 32, 32], strides = [1, 1, 1]} : vector<9x32x32xbf16> to vector<1x32x32xbf16>
    %150 = vector.shape_cast %149 : vector<1x32x32xbf16> to vector<32x32xbf16>
    %cst_34 = arith.constant dense<0.000000e+00> : vector<32x256xf32>
    %151 = tpu.matmul %150, %148, %cst_34 {dimension_numbers = #tpu.dot_dimension_numbers<[1], [0], [0], [1], [0, 0, 1, 1], [], []>} : vector<32x32xbf16>, vector<32x256xbf16>, vector<32x256xf32> -> vector<32x256xf32>
    %152 = arith.addf %139, %151 : vector<32x256xf32>
    %153 = vector.extract_strided_slice %123 {offsets = [0, 241], sizes = [32, 15], strides = [1, 1]} : vector<32x256xf32> to vector<32x15xf32>
    %154 = vector.extract_strided_slice %123 {offsets = [0, 0], sizes = [32, 241], strides = [1, 1]} : vector<32x256xf32> to vector<32x241xf32>
    %155 = tpu.concatenate %153, %154 in 1 : vector<32x15xf32>, vector<32x241xf32> -> vector<32x256xf32>
    %c2_35 = arith.constant 2 : index
    %c0_36 = arith.constant 0 : index
    %156 = vector.load %arg3[%c2_35, %c0_36] : memref<9x256xf32, #tpu.memory_space<vmem>>, vector<1x256xf32>
    %157 = vector.shape_cast %156 : vector<1x256xf32> to vector<256xf32>
    %158 = vector.shape_cast %157 : vector<256xf32> to vector<1x256xf32>
    %159 = vector.broadcast %158 : vector<1x256xf32> to vector<32x256xf32>
    %160 = arith.mulf %155, %159 : vector<32x256xf32>
    %161 = arith.truncf %160 : vector<32x256xf32> to vector<32x256xbf16>
    %162 = vector.extract_strided_slice %124 {offsets = [2, 0, 0], sizes = [1, 32, 32], strides = [1, 1, 1]} : vector<9x32x32xbf16> to vector<1x32x32xbf16>
    %163 = vector.shape_cast %162 : vector<1x32x32xbf16> to vector<32x32xbf16>
    %cst_37 = arith.constant dense<0.000000e+00> : vector<32x256xf32>
    %164 = tpu.matmul %163, %161, %cst_37 {dimension_numbers = #tpu.dot_dimension_numbers<[1], [0], [0], [1], [0, 0, 1, 1], [], []>} : vector<32x32xbf16>, vector<32x256xbf16>, vector<32x256xf32> -> vector<32x256xf32>
    %165 = arith.addf %152, %164 : vector<32x256xf32>
    %166 = vector.extract_strided_slice %123 {offsets = [0, 255], sizes = [32, 1], strides = [1, 1]} : vector<32x256xf32> to vector<32x1xf32>
    %167 = vector.extract_strided_slice %123 {offsets = [0, 0], sizes = [32, 255], strides = [1, 1]} : vector<32x256xf32> to vector<32x255xf32>
    %168 = tpu.concatenate %166, %167 in 1 : vector<32x1xf32>, vector<32x255xf32> -> vector<32x256xf32>
    %c3_38 = arith.constant 3 : index
    %c0_39 = arith.constant 0 : index
    %169 = vector.load %arg3[%c3_38, %c0_39] : memref<9x256xf32, #tpu.memory_space<vmem>>, vector<1x256xf32>
    %170 = vector.shape_cast %169 : vector<1x256xf32> to vector<256xf32>
    %171 = vector.shape_cast %170 : vector<256xf32> to vector<1x256xf32>
    %172 = vector.broadcast %171 : vector<1x256xf32> to vector<32x256xf32>
    %173 = arith.mulf %168, %172 : vector<32x256xf32>
    %174 = arith.truncf %173 : vector<32x256xf32> to vector<32x256xbf16>
    %175 = vector.extract_strided_slice %124 {offsets = [3, 0, 0], sizes = [1, 32, 32], strides = [1, 1, 1]} : vector<9x32x32xbf16> to vector<1x32x32xbf16>
    %176 = vector.shape_cast %175 : vector<1x32x32xbf16> to vector<32x32xbf16>
    %cst_40 = arith.constant dense<0.000000e+00> : vector<32x256xf32>
    %177 = tpu.matmul %176, %174, %cst_40 {dimension_numbers = #tpu.dot_dimension_numbers<[1], [0], [0], [1], [0, 0, 1, 1], [], []>} : vector<32x32xbf16>, vector<32x256xbf16>, vector<32x256xf32> -> vector<32x256xf32>
    %178 = arith.addf %165, %177 : vector<32x256xf32>
    %179 = arith.truncf %123 : vector<32x256xf32> to vector<32x256xbf16>
    %180 = vector.extract_strided_slice %124 {offsets = [4, 0, 0], sizes = [1, 32, 32], strides = [1, 1, 1]} : vector<9x32x32xbf16> to vector<1x32x32xbf16>
    %181 = vector.shape_cast %180 : vector<1x32x32xbf16> to vector<32x32xbf16>
    %cst_41 = arith.constant dense<0.000000e+00> : vector<32x256xf32>
    %182 = tpu.matmul %181, %179, %cst_41 {dimension_numbers = #tpu.dot_dimension_numbers<[1], [0], [0], [1], [0, 0, 1, 1], [], []>} : vector<32x32xbf16>, vector<32x256xbf16>, vector<32x256xf32> -> vector<32x256xf32>
    %183 = arith.addf %178, %182 : vector<32x256xf32>
    %184 = vector.extract_strided_slice %123 {offsets = [0, 1], sizes = [32, 255], strides = [1, 1]} : vector<32x256xf32> to vector<32x255xf32>
    %185 = vector.extract_strided_slice %123 {offsets = [0, 0], sizes = [32, 1], strides = [1, 1]} : vector<32x256xf32> to vector<32x1xf32>
    %186 = tpu.concatenate %184, %185 in 1 : vector<32x255xf32>, vector<32x1xf32> -> vector<32x256xf32>
    %c5_42 = arith.constant 5 : index
    %c0_43 = arith.constant 0 : index
    %187 = vector.load %arg3[%c5_42, %c0_43] : memref<9x256xf32, #tpu.memory_space<vmem>>, vector<1x256xf32>
    %188 = vector.shape_cast %187 : vector<1x256xf32> to vector<256xf32>
    %189 = vector.shape_cast %188 : vector<256xf32> to vector<1x256xf32>
    %190 = vector.broadcast %189 : vector<1x256xf32> to vector<32x256xf32>
    %191 = arith.mulf %186, %190 : vector<32x256xf32>
    %192 = arith.truncf %191 : vector<32x256xf32> to vector<32x256xbf16>
    %193 = vector.extract_strided_slice %124 {offsets = [5, 0, 0], sizes = [1, 32, 32], strides = [1, 1, 1]} : vector<9x32x32xbf16> to vector<1x32x32xbf16>
    %194 = vector.shape_cast %193 : vector<1x32x32xbf16> to vector<32x32xbf16>
    %cst_44 = arith.constant dense<0.000000e+00> : vector<32x256xf32>
    %195 = tpu.matmul %194, %192, %cst_44 {dimension_numbers = #tpu.dot_dimension_numbers<[1], [0], [0], [1], [0, 0, 1, 1], [], []>} : vector<32x32xbf16>, vector<32x256xbf16>, vector<32x256xf32> -> vector<32x256xf32>
    %196 = arith.addf %183, %195 : vector<32x256xf32>
    %197 = vector.extract_strided_slice %123 {offsets = [0, 15], sizes = [32, 241], strides = [1, 1]} : vector<32x256xf32> to vector<32x241xf32>
    %198 = vector.extract_strided_slice %123 {offsets = [0, 0], sizes = [32, 15], strides = [1, 1]} : vector<32x256xf32> to vector<32x15xf32>
    %199 = tpu.concatenate %197, %198 in 1 : vector<32x241xf32>, vector<32x15xf32> -> vector<32x256xf32>
    %c6_45 = arith.constant 6 : index
    %c0_46 = arith.constant 0 : index
    %200 = vector.load %arg3[%c6_45, %c0_46] : memref<9x256xf32, #tpu.memory_space<vmem>>, vector<1x256xf32>
    %201 = vector.shape_cast %200 : vector<1x256xf32> to vector<256xf32>
    %202 = vector.shape_cast %201 : vector<256xf32> to vector<1x256xf32>
    %203 = vector.broadcast %202 : vector<1x256xf32> to vector<32x256xf32>
    %204 = arith.mulf %199, %203 : vector<32x256xf32>
    %205 = arith.truncf %204 : vector<32x256xf32> to vector<32x256xbf16>
    %206 = vector.extract_strided_slice %124 {offsets = [6, 0, 0], sizes = [1, 32, 32], strides = [1, 1, 1]} : vector<9x32x32xbf16> to vector<1x32x32xbf16>
    %207 = vector.shape_cast %206 : vector<1x32x32xbf16> to vector<32x32xbf16>
    %cst_47 = arith.constant dense<0.000000e+00> : vector<32x256xf32>
    %208 = tpu.matmul %207, %205, %cst_47 {dimension_numbers = #tpu.dot_dimension_numbers<[1], [0], [0], [1], [0, 0, 1, 1], [], []>} : vector<32x32xbf16>, vector<32x256xbf16>, vector<32x256xf32> -> vector<32x256xf32>
    %209 = arith.addf %196, %208 : vector<32x256xf32>
    %210 = vector.extract_strided_slice %123 {offsets = [0, 16], sizes = [32, 240], strides = [1, 1]} : vector<32x256xf32> to vector<32x240xf32>
    %211 = vector.extract_strided_slice %123 {offsets = [0, 0], sizes = [32, 16], strides = [1, 1]} : vector<32x256xf32> to vector<32x16xf32>
    %212 = tpu.concatenate %210, %211 in 1 : vector<32x240xf32>, vector<32x16xf32> -> vector<32x256xf32>
    %c7_48 = arith.constant 7 : index
    %c0_49 = arith.constant 0 : index
    %213 = vector.load %arg3[%c7_48, %c0_49] : memref<9x256xf32, #tpu.memory_space<vmem>>, vector<1x256xf32>
    %214 = vector.shape_cast %213 : vector<1x256xf32> to vector<256xf32>
    %215 = vector.shape_cast %214 : vector<256xf32> to vector<1x256xf32>
    %216 = vector.broadcast %215 : vector<1x256xf32> to vector<32x256xf32>
    %217 = arith.mulf %212, %216 : vector<32x256xf32>
    %218 = arith.truncf %217 : vector<32x256xf32> to vector<32x256xbf16>
    %219 = vector.extract_strided_slice %124 {offsets = [7, 0, 0], sizes = [1, 32, 32], strides = [1, 1, 1]} : vector<9x32x32xbf16> to vector<1x32x32xbf16>
    %220 = vector.shape_cast %219 : vector<1x32x32xbf16> to vector<32x32xbf16>
    %cst_50 = arith.constant dense<0.000000e+00> : vector<32x256xf32>
    %221 = tpu.matmul %220, %218, %cst_50 {dimension_numbers = #tpu.dot_dimension_numbers<[1], [0], [0], [1], [0, 0, 1, 1], [], []>} : vector<32x32xbf16>, vector<32x256xbf16>, vector<32x256xf32> -> vector<32x256xf32>
    %222 = arith.addf %209, %221 : vector<32x256xf32>
    %223 = vector.extract_strided_slice %123 {offsets = [0, 17], sizes = [32, 239], strides = [1, 1]} : vector<32x256xf32> to vector<32x239xf32>
    %224 = vector.extract_strided_slice %123 {offsets = [0, 0], sizes = [32, 17], strides = [1, 1]} : vector<32x256xf32> to vector<32x17xf32>
    %225 = tpu.concatenate %223, %224 in 1 : vector<32x239xf32>, vector<32x17xf32> -> vector<32x256xf32>
    %c8_51 = arith.constant 8 : index
    %c0_52 = arith.constant 0 : index
    %226 = vector.load %arg3[%c8_51, %c0_52] : memref<9x256xf32, #tpu.memory_space<vmem>>, vector<1x256xf32>
    %227 = vector.shape_cast %226 : vector<1x256xf32> to vector<256xf32>
    %228 = vector.shape_cast %227 : vector<256xf32> to vector<1x256xf32>
    %229 = vector.broadcast %228 : vector<1x256xf32> to vector<32x256xf32>
    %230 = arith.mulf %225, %229 : vector<32x256xf32>
    %231 = arith.truncf %230 : vector<32x256xf32> to vector<32x256xbf16>
    %232 = vector.extract_strided_slice %124 {offsets = [8, 0, 0], sizes = [1, 32, 32], strides = [1, 1, 1]} : vector<9x32x32xbf16> to vector<1x32x32xbf16>
    %233 = vector.shape_cast %232 : vector<1x32x32xbf16> to vector<32x32xbf16>
    %cst_53 = arith.constant dense<0.000000e+00> : vector<32x256xf32>
    %234 = tpu.matmul %233, %231, %cst_53 {dimension_numbers = #tpu.dot_dimension_numbers<[1], [0], [0], [1], [0, 0, 1, 1], [], []>} : vector<32x32xbf16>, vector<32x256xbf16>, vector<32x256xf32> -> vector<32x256xf32>
    %235 = arith.addf %222, %234 : vector<32x256xf32>
    %236 = vector.broadcast %125 : vector<32x1xf32> to vector<32x256xf32>
    %237 = arith.addf %235, %236 : vector<32x256xf32>
    %238 = arith.addf %3, %237 : vector<32x256xf32>
    %c0_54 = arith.constant 0 : index
    %c0_55 = arith.constant 0 : index
    %239 = vector.load %arg11[%c0_54, %c0_55] : memref<32x256xf32, #tpu.memory_space<vmem>>, vector<32x256xf32>
    tpu.vector_store %arg11[%c0_54, %c0_55], %238 {strides = array<i32>} : memref<32x256xf32, #tpu.memory_space<vmem>>, vector<32x256xf32>,
    %c1_i32 = arith.constant 1 : i32
    %240 = arith.cmpi eq, %arg1, %c1_i32 : i32
    %241 = arith.extui %240 : i1 to i32
    %c0_i32_56 = arith.constant 0 : i32
    %242 = arith.cmpi ne, %241, %c0_i32_56 : i32
    scf.if %242 {
      %cst_57 = arith.constant 0.000000e+00 : f32
      %243 = vector.broadcast %cst_57 : f32 to vector<32x256xf32>
      %244 = arith.cmpf oge, %238, %243 : vector<32x256xf32>
      %cst_58 = arith.constant 1.000000e-01 : f32
      %245 = vector.broadcast %cst_58 : f32 to vector<32x256xf32>
      %246 = arith.mulf %245, %238 : vector<32x256xf32>
      %247 = arith.select %244, %238, %246 : vector<32x256xi1>, vector<32x256xf32>
      %c0_59 = arith.constant 0 : index
      %c0_60 = arith.constant 0 : index
      %c0_61 = arith.constant 0 : index
      %248 = vector.load %arg8[%c0_59, %c0_60, %c0_61] : memref<9x1x32xbf16, #tpu.memory_space<vmem>>, vector<9x1x32xbf16>
      %c0_62 = arith.constant 0 : index
      %c0_63 = arith.constant 0 : index
      %249 = vector.load %arg9[%c0_62, %c0_63] : memref<1x1xf32, #tpu.memory_space<vmem>>, vector<1x1xf32>
      %cst_64 = arith.constant 0.000000e+00 : f32
      %250 = vector.broadcast %cst_64 : f32 to vector<1x256xf32>
      %251 = vector.extract_strided_slice %247 {offsets = [0, 239], sizes = [32, 17], strides = [1, 1]} : vector<32x256xf32> to vector<32x17xf32>
      %252 = vector.extract_strided_slice %247 {offsets = [0, 0], sizes = [32, 239], strides = [1, 1]} : vector<32x256xf32> to vector<32x239xf32>
      %253 = tpu.concatenate %251, %252 in 1 : vector<32x17xf32>, vector<32x239xf32> -> vector<32x256xf32>
      %c0_65 = arith.constant 0 : index
      %c0_66 = arith.constant 0 : index
      %254 = vector.load %arg3[%c0_65, %c0_66] : memref<9x256xf32, #tpu.memory_space<vmem>>, vector<1x256xf32>
      %255 = vector.shape_cast %254 : vector<1x256xf32> to vector<256xf32>
      %256 = vector.shape_cast %255 : vector<256xf32> to vector<1x256xf32>
      %257 = vector.broadcast %256 : vector<1x256xf32> to vector<32x256xf32>
      %258 = arith.mulf %253, %257 : vector<32x256xf32>
      %259 = arith.truncf %258 : vector<32x256xf32> to vector<32x256xbf16>
      %260 = vector.extract_strided_slice %248 {offsets = [0, 0, 0], sizes = [1, 1, 32], strides = [1, 1, 1]} : vector<9x1x32xbf16> to vector<1x1x32xbf16>
      %261 = vector.shape_cast %260 : vector<1x1x32xbf16> to vector<1x32xbf16>
      %cst_67 = arith.constant dense<0.000000e+00> : vector<1x256xf32>
      %262 = tpu.matmul %261, %259, %cst_67 {dimension_numbers = #tpu.dot_dimension_numbers<[1], [0], [0], [1], [0, 0, 1, 1], [], []>} : vector<1x32xbf16>, vector<32x256xbf16>, vector<1x256xf32> -> vector<1x256xf32>
      %263 = arith.addf %250, %262 : vector<1x256xf32>
      %264 = vector.extract_strided_slice %247 {offsets = [0, 240], sizes = [32, 16], strides = [1, 1]} : vector<32x256xf32> to vector<32x16xf32>
      %265 = vector.extract_strided_slice %247 {offsets = [0, 0], sizes = [32, 240], strides = [1, 1]} : vector<32x256xf32> to vector<32x240xf32>
      %266 = tpu.concatenate %264, %265 in 1 : vector<32x16xf32>, vector<32x240xf32> -> vector<32x256xf32>
      %c1_68 = arith.constant 1 : index
      %c0_69 = arith.constant 0 : index
      %267 = vector.load %arg3[%c1_68, %c0_69] : memref<9x256xf32, #tpu.memory_space<vmem>>, vector<1x256xf32>
      %268 = vector.shape_cast %267 : vector<1x256xf32> to vector<256xf32>
      %269 = vector.shape_cast %268 : vector<256xf32> to vector<1x256xf32>
      %270 = vector.broadcast %269 : vector<1x256xf32> to vector<32x256xf32>
      %271 = arith.mulf %266, %270 : vector<32x256xf32>
      %272 = arith.truncf %271 : vector<32x256xf32> to vector<32x256xbf16>
      %273 = vector.extract_strided_slice %248 {offsets = [1, 0, 0], sizes = [1, 1, 32], strides = [1, 1, 1]} : vector<9x1x32xbf16> to vector<1x1x32xbf16>
      %274 = vector.shape_cast %273 : vector<1x1x32xbf16> to vector<1x32xbf16>
      %cst_70 = arith.constant dense<0.000000e+00> : vector<1x256xf32>
      %275 = tpu.matmul %274, %272, %cst_70 {dimension_numbers = #tpu.dot_dimension_numbers<[1], [0], [0], [1], [0, 0, 1, 1], [], []>} : vector<1x32xbf16>, vector<32x256xbf16>, vector<1x256xf32> -> vector<1x256xf32>
      %276 = arith.addf %263, %275 : vector<1x256xf32>
      %277 = vector.extract_strided_slice %247 {offsets = [0, 241], sizes = [32, 15], strides = [1, 1]} : vector<32x256xf32> to vector<32x15xf32>
      %278 = vector.extract_strided_slice %247 {offsets = [0, 0], sizes = [32, 241], strides = [1, 1]} : vector<32x256xf32> to vector<32x241xf32>
      %279 = tpu.concatenate %277, %278 in 1 : vector<32x15xf32>, vector<32x241xf32> -> vector<32x256xf32>
      %c2_71 = arith.constant 2 : index
      %c0_72 = arith.constant 0 : index
      %280 = vector.load %arg3[%c2_71, %c0_72] : memref<9x256xf32, #tpu.memory_space<vmem>>, vector<1x256xf32>
      %281 = vector.shape_cast %280 : vector<1x256xf32> to vector<256xf32>
      %282 = vector.shape_cast %281 : vector<256xf32> to vector<1x256xf32>
      %283 = vector.broadcast %282 : vector<1x256xf32> to vector<32x256xf32>
      %284 = arith.mulf %279, %283 : vector<32x256xf32>
      %285 = arith.truncf %284 : vector<32x256xf32> to vector<32x256xbf16>
      %286 = vector.extract_strided_slice %248 {offsets = [2, 0, 0], sizes = [1, 1, 32], strides = [1, 1, 1]} : vector<9x1x32xbf16> to vector<1x1x32xbf16>
      %287 = vector.shape_cast %286 : vector<1x1x32xbf16> to vector<1x32xbf16>
      %cst_73 = arith.constant dense<0.000000e+00> : vector<1x256xf32>
      %288 = tpu.matmul %287, %285, %cst_73 {dimension_numbers = #tpu.dot_dimension_numbers<[1], [0], [0], [1], [0, 0, 1, 1], [], []>} : vector<1x32xbf16>, vector<32x256xbf16>, vector<1x256xf32> -> vector<1x256xf32>
      %289 = arith.addf %276, %288 : vector<1x256xf32>
      %290 = vector.extract_strided_slice %247 {offsets = [0, 255], sizes = [32, 1], strides = [1, 1]} : vector<32x256xf32> to vector<32x1xf32>
      %291 = vector.extract_strided_slice %247 {offsets = [0, 0], sizes = [32, 255], strides = [1, 1]} : vector<32x256xf32> to vector<32x255xf32>
      %292 = tpu.concatenate %290, %291 in 1 : vector<32x1xf32>, vector<32x255xf32> -> vector<32x256xf32>
      %c3_74 = arith.constant 3 : index
      %c0_75 = arith.constant 0 : index
      %293 = vector.load %arg3[%c3_74, %c0_75] : memref<9x256xf32, #tpu.memory_space<vmem>>, vector<1x256xf32>
      %294 = vector.shape_cast %293 : vector<1x256xf32> to vector<256xf32>
      %295 = vector.shape_cast %294 : vector<256xf32> to vector<1x256xf32>
      %296 = vector.broadcast %295 : vector<1x256xf32> to vector<32x256xf32>
      %297 = arith.mulf %292, %296 : vector<32x256xf32>
      %298 = arith.truncf %297 : vector<32x256xf32> to vector<32x256xbf16>
      %299 = vector.extract_strided_slice %248 {offsets = [3, 0, 0], sizes = [1, 1, 32], strides = [1, 1, 1]} : vector<9x1x32xbf16> to vector<1x1x32xbf16>
      %300 = vector.shape_cast %299 : vector<1x1x32xbf16> to vector<1x32xbf16>
      %cst_76 = arith.constant dense<0.000000e+00> : vector<1x256xf32>
      %301 = tpu.matmul %300, %298, %cst_76 {dimension_numbers = #tpu.dot_dimension_numbers<[1], [0], [0], [1], [0, 0, 1, 1], [], []>} : vector<1x32xbf16>, vector<32x256xbf16>, vector<1x256xf32> -> vector<1x256xf32>
      %302 = arith.addf %289, %301 : vector<1x256xf32>
      %303 = arith.truncf %247 : vector<32x256xf32> to vector<32x256xbf16>
      %304 = vector.extract_strided_slice %248 {offsets = [4, 0, 0], sizes = [1, 1, 32], strides = [1, 1, 1]} : vector<9x1x32xbf16> to vector<1x1x32xbf16>
      %305 = vector.shape_cast %304 : vector<1x1x32xbf16> to vector<1x32xbf16>
      %cst_77 = arith.constant dense<0.000000e+00> : vector<1x256xf32>
      %306 = tpu.matmul %305, %303, %cst_77 {dimension_numbers = #tpu.dot_dimension_numbers<[1], [0], [0], [1], [0, 0, 1, 1], [], []>} : vector<1x32xbf16>, vector<32x256xbf16>, vector<1x256xf32> -> vector<1x256xf32>
      %307 = arith.addf %302, %306 : vector<1x256xf32>
      %308 = vector.extract_strided_slice %247 {offsets = [0, 1], sizes = [32, 255], strides = [1, 1]} : vector<32x256xf32> to vector<32x255xf32>
      %309 = vector.extract_strided_slice %247 {offsets = [0, 0], sizes = [32, 1], strides = [1, 1]} : vector<32x256xf32> to vector<32x1xf32>
      %310 = tpu.concatenate %308, %309 in 1 : vector<32x255xf32>, vector<32x1xf32> -> vector<32x256xf32>
      %c5_78 = arith.constant 5 : index
      %c0_79 = arith.constant 0 : index
      %311 = vector.load %arg3[%c5_78, %c0_79] : memref<9x256xf32, #tpu.memory_space<vmem>>, vector<1x256xf32>
      %312 = vector.shape_cast %311 : vector<1x256xf32> to vector<256xf32>
      %313 = vector.shape_cast %312 : vector<256xf32> to vector<1x256xf32>
      %314 = vector.broadcast %313 : vector<1x256xf32> to vector<32x256xf32>
      %315 = arith.mulf %310, %314 : vector<32x256xf32>
      %316 = arith.truncf %315 : vector<32x256xf32> to vector<32x256xbf16>
      %317 = vector.extract_strided_slice %248 {offsets = [5, 0, 0], sizes = [1, 1, 32], strides = [1, 1, 1]} : vector<9x1x32xbf16> to vector<1x1x32xbf16>
      %318 = vector.shape_cast %317 : vector<1x1x32xbf16> to vector<1x32xbf16>
      %cst_80 = arith.constant dense<0.000000e+00> : vector<1x256xf32>
      %319 = tpu.matmul %318, %316, %cst_80 {dimension_numbers = #tpu.dot_dimension_numbers<[1], [0], [0], [1], [0, 0, 1, 1], [], []>} : vector<1x32xbf16>, vector<32x256xbf16>, vector<1x256xf32> -> vector<1x256xf32>
      %320 = arith.addf %307, %319 : vector<1x256xf32>
      %321 = vector.extract_strided_slice %247 {offsets = [0, 15], sizes = [32, 241], strides = [1, 1]} : vector<32x256xf32> to vector<32x241xf32>
      %322 = vector.extract_strided_slice %247 {offsets = [0, 0], sizes = [32, 15], strides = [1, 1]} : vector<32x256xf32> to vector<32x15xf32>
      %323 = tpu.concatenate %321, %322 in 1 : vector<32x241xf32>, vector<32x15xf32> -> vector<32x256xf32>
      %c6_81 = arith.constant 6 : index
      %c0_82 = arith.constant 0 : index
      %324 = vector.load %arg3[%c6_81, %c0_82] : memref<9x256xf32, #tpu.memory_space<vmem>>, vector<1x256xf32>
      %325 = vector.shape_cast %324 : vector<1x256xf32> to vector<256xf32>
      %326 = vector.shape_cast %325 : vector<256xf32> to vector<1x256xf32>
      %327 = vector.broadcast %326 : vector<1x256xf32> to vector<32x256xf32>
      %328 = arith.mulf %323, %327 : vector<32x256xf32>
      %329 = arith.truncf %328 : vector<32x256xf32> to vector<32x256xbf16>
      %330 = vector.extract_strided_slice %248 {offsets = [6, 0, 0], sizes = [1, 1, 32], strides = [1, 1, 1]} : vector<9x1x32xbf16> to vector<1x1x32xbf16>
      %331 = vector.shape_cast %330 : vector<1x1x32xbf16> to vector<1x32xbf16>
      %cst_83 = arith.constant dense<0.000000e+00> : vector<1x256xf32>
      %332 = tpu.matmul %331, %329, %cst_83 {dimension_numbers = #tpu.dot_dimension_numbers<[1], [0], [0], [1], [0, 0, 1, 1], [], []>} : vector<1x32xbf16>, vector<32x256xbf16>, vector<1x256xf32> -> vector<1x256xf32>
      %333 = arith.addf %320, %332 : vector<1x256xf32>
      %334 = vector.extract_strided_slice %247 {offsets = [0, 16], sizes = [32, 240], strides = [1, 1]} : vector<32x256xf32> to vector<32x240xf32>
      %335 = vector.extract_strided_slice %247 {offsets = [0, 0], sizes = [32, 16], strides = [1, 1]} : vector<32x256xf32> to vector<32x16xf32>
      %336 = tpu.concatenate %334, %335 in 1 : vector<32x240xf32>, vector<32x16xf32> -> vector<32x256xf32>
      %c7_84 = arith.constant 7 : index
      %c0_85 = arith.constant 0 : index
      %337 = vector.load %arg3[%c7_84, %c0_85] : memref<9x256xf32, #tpu.memory_space<vmem>>, vector<1x256xf32>
      %338 = vector.shape_cast %337 : vector<1x256xf32> to vector<256xf32>
      %339 = vector.shape_cast %338 : vector<256xf32> to vector<1x256xf32>
      %340 = vector.broadcast %339 : vector<1x256xf32> to vector<32x256xf32>
      %341 = arith.mulf %336, %340 : vector<32x256xf32>
      %342 = arith.truncf %341 : vector<32x256xf32> to vector<32x256xbf16>
      %343 = vector.extract_strided_slice %248 {offsets = [7, 0, 0], sizes = [1, 1, 32], strides = [1, 1, 1]} : vector<9x1x32xbf16> to vector<1x1x32xbf16>
      %344 = vector.shape_cast %343 : vector<1x1x32xbf16> to vector<1x32xbf16>
      %cst_86 = arith.constant dense<0.000000e+00> : vector<1x256xf32>
      %345 = tpu.matmul %344, %342, %cst_86 {dimension_numbers = #tpu.dot_dimension_numbers<[1], [0], [0], [1], [0, 0, 1, 1], [], []>} : vector<1x32xbf16>, vector<32x256xbf16>, vector<1x256xf32> -> vector<1x256xf32>
      %346 = arith.addf %333, %345 : vector<1x256xf32>
      %347 = vector.extract_strided_slice %247 {offsets = [0, 17], sizes = [32, 239], strides = [1, 1]} : vector<32x256xf32> to vector<32x239xf32>
      %348 = vector.extract_strided_slice %247 {offsets = [0, 0], sizes = [32, 17], strides = [1, 1]} : vector<32x256xf32> to vector<32x17xf32>
      %349 = tpu.concatenate %347, %348 in 1 : vector<32x239xf32>, vector<32x17xf32> -> vector<32x256xf32>
      %c8_87 = arith.constant 8 : index
      %c0_88 = arith.constant 0 : index
      %350 = vector.load %arg3[%c8_87, %c0_88] : memref<9x256xf32, #tpu.memory_space<vmem>>, vector<1x256xf32>
      %351 = vector.shape_cast %350 : vector<1x256xf32> to vector<256xf32>
      %352 = vector.shape_cast %351 : vector<256xf32> to vector<1x256xf32>
      %353 = vector.broadcast %352 : vector<1x256xf32> to vector<32x256xf32>
      %354 = arith.mulf %349, %353 : vector<32x256xf32>
      %355 = arith.truncf %354 : vector<32x256xf32> to vector<32x256xbf16>
      %356 = vector.extract_strided_slice %248 {offsets = [8, 0, 0], sizes = [1, 1, 32], strides = [1, 1, 1]} : vector<9x1x32xbf16> to vector<1x1x32xbf16>
      %357 = vector.shape_cast %356 : vector<1x1x32xbf16> to vector<1x32xbf16>
      %cst_89 = arith.constant dense<0.000000e+00> : vector<1x256xf32>
      %358 = tpu.matmul %357, %355, %cst_89 {dimension_numbers = #tpu.dot_dimension_numbers<[1], [0], [0], [1], [0, 0, 1, 1], [], []>} : vector<1x32xbf16>, vector<32x256xbf16>, vector<1x256xf32> -> vector<1x256xf32>
      %359 = arith.addf %346, %358 : vector<1x256xf32>
      %360 = vector.broadcast %249 : vector<1x1xf32> to vector<1x256xf32>
      %361 = arith.addf %359, %360 : vector<1x256xf32>
      %c0_90 = arith.constant 0 : index
      %c0_91 = arith.constant 0 : index
      %c0_92 = arith.constant 0 : index
      %362 = vector.load %arg10[%c0_90, %c0_91, %c0_92] : memref<1x1x256xf32, #tpu.memory_space<vmem>>, vector<1x1x256xf32>
      %363 = vector.shape_cast %362 : vector<1x1x256xf32> to vector<1x256xf32>
      %364 = vector.shape_cast %361 : vector<1x256xf32> to vector<1x1x256xf32>
      tpu.vector_store %arg10[%c0_90, %c0_91, %c0_92], %364 {strides = array<i32>} : memref<1x1x256xf32, #tpu.memory_space<vmem>>, vector<1x1x256xf32>,
    } else {
    }
    return
  }
  func.func @transform_0(%arg0: i32, %arg1: i32) -> (i32, i32, i32) {
    %c0_i32 = arith.constant 0 : i32
    %c0_i32_0 = arith.constant 0 : i32
    %c0_i32_1 = arith.constant 0 : i32
    return %arg0, %c0_i32, %c0_i32_0 : i32, i32, i32
  }
  func.func @transform_1(%arg0: i32, %arg1: i32) -> (i32, i32) {
    %c0_i32 = arith.constant 0 : i32
    %c0_i32_0 = arith.constant 0 : i32
    %c0_i32_1 = arith.constant 0 : i32
    return %c0_i32, %c0_i32_0 : i32, i32
  }
  func.func @transform_2(%arg0: i32, %arg1: i32) -> (i32, i32, i32) {
    %c0_i32 = arith.constant 0 : i32
    %c0_i32_0 = arith.constant 0 : i32
    %c0_i32_1 = arith.constant 0 : i32
    %c0_i32_2 = arith.constant 0 : i32
    return %c0_i32, %c0_i32_0, %c0_i32_1 : i32, i32, i32
  }
  func.func @transform_3(%arg0: i32, %arg1: i32) -> (i32, i32) {
    %c0_i32 = arith.constant 0 : i32
    %c0_i32_0 = arith.constant 0 : i32
    %c0_i32_1 = arith.constant 0 : i32
    return %c0_i32, %c0_i32_0 : i32, i32
  }
  func.func @transform_4(%arg0: i32, %arg1: i32) -> (i32, i32, i32, i32) {
    %c0_i32 = arith.constant 0 : i32
    %c0_i32_0 = arith.constant 0 : i32
    %c0_i32_1 = arith.constant 0 : i32
    %c0_i32_2 = arith.constant 0 : i32
    return %arg1, %c0_i32, %c0_i32_0, %c0_i32_1 : i32, i32, i32, i32
  }
  func.func @transform_5(%arg0: i32, %arg1: i32) -> (i32, i32, i32) {
    %c0_i32 = arith.constant 0 : i32
    %c0_i32_0 = arith.constant 0 : i32
    %c0_i32_1 = arith.constant 0 : i32
    return %arg1, %c0_i32, %c0_i32_0 : i32, i32, i32
  }
  func.func @transform_6(%arg0: i32, %arg1: i32) -> (i32, i32, i32) {
    %c0_i32 = arith.constant 0 : i32
    %c0_i32_0 = arith.constant 0 : i32
    %c0_i32_1 = arith.constant 0 : i32
    %c0_i32_2 = arith.constant 0 : i32
    return %c0_i32, %c0_i32_0, %c0_i32_1 : i32, i32, i32
  }
  func.func @transform_7(%arg0: i32, %arg1: i32) -> (i32, i32) {
    %c0_i32 = arith.constant 0 : i32
    %c0_i32_0 = arith.constant 0 : i32
    %c0_i32_1 = arith.constant 0 : i32
    return %c0_i32, %c0_i32_0 : i32, i32
  }
  func.func @transform_8(%arg0: i32, %arg1: i32) -> (i32, i32, i32) {
    %c0_i32 = arith.constant 0 : i32
    %c0_i32_0 = arith.constant 0 : i32
    %c0_i32_1 = arith.constant 0 : i32
    return %arg0, %c0_i32, %c0_i32_0 : i32, i32, i32
  }
}

</mosaic_0001>

<llo_original>
// kernel: resnet_shape_forward.1
$region0: #{resnet_shape_forward.1}
  #allocation0 [shape = 'u32[]', space=smem, size = 0x4, offset = 0x4, fixed_abs, tag = 'smem constant byte address 0x4 - core index']
  #allocation1 [shape = 'u32[72,128]{1,0:T(1,128)}', space=vmem, size = 0x9000, scoped, tag = 'internal scratch']
  #allocation2 [shape = 'f32[32,256]{1,0:T(8,128)}', space=vmem, size = 0x8000, scoped, tag = 'scratch operand']
  #allocation3 [shape = 'f32[1,1]{1,0:T(1,128)S(1)}', space=vmem, size = 0x200, scoped, tag = 'scoped memory for resnet_shape_forward.1']
  %s0 = inlined_call_operand.vmem [shape: f32[2,8,256], index: 0, kind: input, shape index: {}]
  %s1 = inlined_call_operand.vmem [shape: f32[9,256], index: 1, kind: input, shape index: {}]
  %s2 = inlined_call_operand.vmem [shape: bf16[9,32,8], index: 2, kind: input, shape index: {}]
  %s3 = inlined_call_operand.vmem [shape: f32[32,1], index: 3, kind: input, shape index: {}]
  %s4 = inlined_call_operand.vmem [shape: bf16[2,18,32,32], index: 4, kind: input, shape index: {}]
  %s5 = inlined_call_operand.vmem [shape: f32[2,64,1], index: 5, kind: input, shape index: {}]
  %s6 = inlined_call_operand.vmem [shape: bf16[9,1,32], index: 6, kind: input, shape index: {}]
  %s7 = inlined_call_operand.<no memory space> [shape: f32[1,1], index: 7, kind: input, shape index: {}]
  %s8 = inlined_call_operand.vmem [shape: f32[2,1,256], index: 8, kind: output, shape index: {}]
  %s9 = sld [smem:[#allocation0]]
  $region73: #{resnet_shape_forward.1} parent=0
    _
  %s11 = ssub.s32 1, %s9
  %s12 = scalar_select 0, %s11, %s9
  %v13 = vstv %s7
  %14 = vst [vmem:[#allocation3] sm:$0x1] %v13
  loop: start=0, step=1, limit=6
  $region2: #{resnet_shape_forward.1} parent=0 // loop_pre_header
    _
  $region3: #{resnet_shape_forward.1} parent=0 // loop_header
    %s16 = sphi 0, %s20
    %p17 = scmp.ge.s32.totalorder %s16, 6
    %s23 = sphi 0, %s35
    %s24 = sphi 0, %s31
    %s25 = sphi 0, %s23
    %s26 = sphi 0, %s24
    %s27 = sphi 0, %s25
    %s28 = sphi 0, %s26
    %s38 = sphi 0, %s40
    %s41 = sphi 0, %s38
    %s42 = sphi 0, %s41
    %s58 = sphi 0, %s42
    %s62 = sphi 0, %s62
    %s64 = sphi 0, %s62
    %s65 = sphi 0, %s64
    %s79 = sphi 0, %s65
    %s83 = sphi 0, %s83
    %s85 = sphi 0, %s83
    %s86 = sphi 0, %s85
    %s100 = sphi 0, %s86
    %s104 = sphi 0, %s104
    %s106 = sphi 0, %s104
    %s107 = sphi 0, %s106
    %s121 = sphi 0, %s107
    %s127 = sphi 0, %s129
    %s130 = sphi 0, %s127
    %s131 = sphi 0, %s130
    %s147 = sphi 0, %s131
    %s153 = sphi 0, %s155
    %s156 = sphi 0, %s153
    %s157 = sphi 0, %s156
    %s173 = sphi 0, %s157
    %s177 = sphi 0, %s177
    %s179 = sphi 0, %s177
    %s180 = sphi 0, %s179
    %s194 = sphi 0, %s180
    %s198 = sphi 0, %s198
    %s200 = sphi 0, %s198
    %s201 = sphi 0, %s200
    %s215 = sphi 0, %s201
    %s221 = sphi 0, %s223
    %s224 = sphi 0, %s221
    %s225 = sphi 0, %s224
    %s241 = sphi 0, %s225
  $region4: #{resnet_shape_forward.1} parent=0 // loop_header_branch
    %19 = sbr.rel (%p17) target = $region8
  $region5: #{resnet_shape_forward.1} parent=0 // loop_body
    %s21 = ssub.s32 %s16, 1
    %s22 = ssub.s32 %s16, 2
    %s29 = sadd.s32 1, %s24
    %p30 = scmp.ge.s32.totalorder %s29, 2
    %s31 = scalar_select %p30, 0, %s29
    %s32 = sadd.s32 1, %s23
    %s33 = scalar_select %p30, %s32, %s23
    %p34 = scmp.ge.s32.totalorder %s33, 2
    %s35 = scalar_select %p34, 0, %s33
    %s36 = ssub.s32 %s23, %s35
    %p37 = scmp.eq.s32.totalorder %s36, 0
    %s39 = sadd.s32 %s38, 1
    %s40 = scalar_select %p37, %s38, %s39
    %p43 = pneg %p37
    %p44 = scmp.eq.s32.totalorder %s16, 3
    %p45 = por %p43, %p44
    %p46 = scmp.ne.s32.totalorder %s38, %s41
    %p47 = scmp.eq.s32.totalorder %s16, 0
    %p48 = por %p46, %p47
    %p49 = scmp.ne.s32.totalorder %s38, %s41
    %p50 = scmp.eq.s32.totalorder %s21, 3
    %p51 = por %p49, %p50
    %p52 = scmp.ne.s32.totalorder %s41, %s42
    %p53 = scmp.eq.s32.totalorder %s21, 0
    %p54 = por %p52, %p53
    %p55 = scmp.ne.s32.totalorder %s41, %s42
    %p56 = scmp.eq.s32.totalorder %s22, 3
    %p57 = por %p55, %p56
    %p59 = scmp.ne.s32.totalorder %s42, %s58
    %p60 = scmp.eq.s32.totalorder %s22, 0
    %p61 = por %p59, %p60
    %s63 = sadd.s32 %s62, 1
    %p66 = scmp.eq.s32.totalorder %s16, 3
    %p67 = scmp.ne.s32.totalorder %s62, %s64
    %p68 = scmp.eq.s32.totalorder %s16, 0
    %p69 = por %p67, %p68
    %p70 = scmp.ne.s32.totalorder %s62, %s64
    %p71 = scmp.eq.s32.totalorder %s21, 3
    %p72 = por %p70, %p71
    %p73 = scmp.ne.s32.totalorder %s64, %s65
    %p74 = scmp.eq.s32.totalorder %s21, 0
    %p75 = por %p73, %p74
    %p76 = scmp.ne.s32.totalorder %s64, %s65
    %p77 = scmp.eq.s32.totalorder %s22, 3
    %p78 = por %p76, %p77
    %p80 = scmp.ne.s32.totalorder %s65, %s79
    %p81 = scmp.eq.s32.totalorder %s22, 0
    %p82 = por %p80, %p81
    %s84 = sadd.s32 %s83, 1
    %p87 = scmp.eq.s32.totalorder %s16, 3
    %p88 = scmp.ne.s32.totalorder %s83, %s85
    %p89 = scmp.eq.s32.totalorder %s16, 0
    %p90 = por %p88, %p89
    %p91 = scmp.ne.s32.totalorder %s83, %s85
    %p92 = scmp.eq.s32.totalorder %s21, 3
    %p93 = por %p91, %p92
    %p94 = scmp.ne.s32.totalorder %s85, %s86
    %p95 = scmp.eq.s32.totalorder %s21, 0
    %p96 = por %p94, %p95
    %p97 = scmp.ne.s32.totalorder %s85, %s86
    %p98 = scmp.eq.s32.totalorder %s22, 3
    %p99 = por %p97, %p98
    %p101 = scmp.ne.s32.totalorder %s86, %s100
    %p102 = scmp.eq.s32.totalorder %s22, 0
    %p103 = por %p101, %p102
    %s105 = sadd.s32 %s104, 1
    %p108 = scmp.eq.s32.totalorder %s16, 3
    %p109 = scmp.ne.s32.totalorder %s104, %s106
    %p110 = scmp.eq.s32.totalorder %s16, 0
    %p111 = por %p109, %p110
    %p112 = scmp.ne.s32.totalorder %s104, %s106
    %p113 = scmp.eq.s32.totalorder %s21, 3
    %p114 = por %p112, %p113
    %p115 = scmp.ne.s32.totalorder %s106, %s107
    %p116 = scmp.eq.s32.totalorder %s21, 0
    %p117 = por %p115, %p116
    %p118 = scmp.ne.s32.totalorder %s106, %s107
    %p119 = scmp.eq.s32.totalorder %s22, 3
    %p120 = por %p118, %p119
    %p122 = scmp.ne.s32.totalorder %s107, %s121
    %p123 = scmp.eq.s32.totalorder %s22, 0
    %p124 = por %p122, %p123
    %s125 = ssub.s32 %s24, %s31
    %p126 = scmp.eq.s32.totalorder %s125, 0
    %s128 = sadd.s32 %s127, 1
    %s129 = scalar_select %p126, %s127, %s128
    %p132 = pneg %p126
    %p133 = scmp.eq.s32.totalorder %s16, 3
    %p134 = por %p132, %p133
    %p135 = scmp.ne.s32.totalorder %s127, %s130
    %p136 = scmp.eq.s32.totalorder %s16, 0
    %p137 = por %p135, %p136
    %p138 = scmp.ne.s32.totalorder %s127, %s130
    %p139 = scmp.eq.s32.totalorder %s21, 3
    %p140 = por %p138, %p139
    %p141 = scmp.ne.s32.totalorder %s130, %s131
    %p142 = scmp.eq.s32.totalorder %s21, 0
    %p143 = por %p141, %p142
    %p144 = scmp.ne.s32.totalorder %s130, %s131
    %p145 = scmp.eq.s32.totalorder %s22, 3
    %p146 = por %p144, %p145
    %p148 = scmp.ne.s32.totalorder %s131, %s147
    %p149 = scmp.eq.s32.totalorder %s22, 0
    %p150 = por %p148, %p149
    %s151 = ssub.s32 %s24, %s31
    %p152 = scmp.eq.s32.totalorder %s151, 0
    %s154 = sadd.s32 %s153, 1
    %s155 = scalar_select %p152, %s153, %s154
    %p158 = pneg %p152
    %p159 = scmp.eq.s32.totalorder %s16, 3
    %p160 = por %p158, %p159
    %p161 = scmp.ne.s32.totalorder %s153, %s156
    %p162 = scmp.eq.s32.totalorder %s16, 0
    %p163 = por %p161, %p162
    %p164 = scmp.ne.s32.totalorder %s153, %s156
    %p165 = scmp.eq.s32.totalorder %s21, 3
    %p166 = por %p164, %p165
    %p167 = scmp.ne.s32.totalorder %s156, %s157
    %p168 = scmp.eq.s32.totalorder %s21, 0
    %p169 = por %p167, %p168
    %p170 = scmp.ne.s32.totalorder %s156, %s157
    %p171 = scmp.eq.s32.totalorder %s22, 3
    %p172 = por %p170, %p171
    %p174 = scmp.ne.s32.totalorder %s157, %s173
    %p175 = scmp.eq.s32.totalorder %s22, 0
    %p176 = por %p174, %p175
    %s178 = sadd.s32 %s177, 1
    %p181 = scmp.eq.s32.totalorder %s16, 3
    %p182 = scmp.ne.s32.totalorder %s177, %s179
    %p183 = scmp.eq.s32.totalorder %s16, 0
    %p184 = por %p182, %p183
    %p185 = scmp.ne.s32.totalorder %s177, %s179
    %p186 = scmp.eq.s32.totalorder %s21, 3
    %p187 = por %p185, %p186
    %p188 = scmp.ne.s32.totalorder %s179, %s180
    %p189 = scmp.eq.s32.totalorder %s21, 0
    %p190 = por %p188, %p189
    %p191 = scmp.ne.s32.totalorder %s179, %s180
    %p192 = scmp.eq.s32.totalorder %s22, 3
    %p193 = por %p191, %p192
    %p195 = scmp.ne.s32.totalorder %s180, %s194
    %p196 = scmp.eq.s32.totalorder %s22, 0
    %p197 = por %p195, %p196
    %s199 = sadd.s32 %s198, 1
    %p202 = scmp.eq.s32.totalorder %s16, 3
    %p203 = scmp.ne.s32.totalorder %s198, %s200
    %p204 = scmp.eq.s32.totalorder %s16, 0
    %p205 = por %p203, %p204
    %p206 = scmp.ne.s32.totalorder %s198, %s200
    %p207 = scmp.eq.s32.totalorder %s21, 3
    %p208 = por %p206, %p207
    %p209 = scmp.ne.s32.totalorder %s200, %s201
    %p210 = scmp.eq.s32.totalorder %s21, 0
    %p211 = por %p209, %p210
    %p212 = scmp.ne.s32.totalorder %s200, %s201
    %p213 = scmp.eq.s32.totalorder %s22, 3
    %p214 = por %p212, %p213
    %p216 = scmp.ne.s32.totalorder %s201, %s215
    %p217 = scmp.eq.s32.totalorder %s22, 0
    %p218 = por %p216, %p217
    %s219 = ssub.s32 %s23, %s35
    %p220 = scmp.eq.s32.totalorder %s219, 0
    %s222 = sadd.s32 %s221, 1
    %s223 = scalar_select %p220, %s221, %s222
    %p226 = pneg %p220
    %p227 = scmp.eq.s32.totalorder %s16, 3
    %p228 = por %p226, %p227
    %p229 = scmp.ne.s32.totalorder %s221, %s224
    %p230 = scmp.eq.s32.totalorder %s16, 0
    %p231 = por %p229, %p230
    %p232 = scmp.ne.s32.totalorder %s221, %s224
    %p233 = scmp.eq.s32.totalorder %s21, 3
    %p234 = por %p232, %p233
    %p235 = scmp.ne.s32.totalorder %s224, %s225
    %p236 = scmp.eq.s32.totalorder %s21, 0
    %p237 = por %p235, %p236
    %p238 = scmp.ne.s32.totalorder %s224, %s225
    %p239 = scmp.eq.s32.totalorder %s22, 3
    %p240 = por %p238, %p239
    %p242 = scmp.ne.s32.totalorder %s225, %s241
    %p243 = scmp.eq.s32.totalorder %s22, 0
    %p244 = por %p242, %p243
    %p245 = scmp.le.s32.totalorder 1, %s16
    %p246 = scmp.lt.s32.totalorder %s16, 5
    %p247 = pnand %p245, %p246
    %p248 = pneg %p247
    // Predicated region
    $region9: #{resnet_shape_forward.1} parent=5 // pred_check
      _
    $region10: #{resnet_shape_forward.1} parent=5 // pred_check_branch
      %250 = sbr.rel (%p247) target = $region12
    $region11: #{resnet_shape_forward.1} parent=5 // pred_region
      %s251 = ssub.s32 %s16, 1
      // Predicated region
      $region13: #{resnet_shape_forward.1} parent=11 // pred_check
        %p252 = pneg %p75
      $region14: #{resnet_shape_forward.1} parent=11 // pred_check_branch
        %254 = sbr.rel (%p252) target = $region16
      $region15: #{resnet_shape_forward.1} parent=11 // pred_region
        _
      $region16: #{resnet_shape_forward.1} parent=11 // pred_fallthru
        _
      // Predicated region
      $region17: #{resnet_shape_forward.1} parent=11 // pred_check
        %p255 = pneg %p96
      $region18: #{resnet_shape_forward.1} parent=11 // pred_check_branch
        %257 = sbr.rel (%p255) target = $region20
      $region19: #{resnet_shape_forward.1} parent=11 // pred_region
        _
      $region20: #{resnet_shape_forward.1} parent=11 // pred_fallthru
        _
      // Predicated region
      $region21: #{resnet_shape_forward.1} parent=11 // pred_check
        %p258 = pneg %p117
      $region22: #{resnet_shape_forward.1} parent=11 // pred_check_branch
        %260 = sbr.rel (%p258) target = $region24
      $region23: #{resnet_shape_forward.1} parent=11 // pred_region
        _
      $region24: #{resnet_shape_forward.1} parent=11 // pred_fallthru
        _
      // Predicated region
      $region25: #{resnet_shape_forward.1} parent=11 // pred_check
        %p261 = pneg %p190
      $region26: #{resnet_shape_forward.1} parent=11 // pred_check_branch
        %263 = sbr.rel (%p261) target = $region28
      $region27: #{resnet_shape_forward.1} parent=11 // pred_region
        _
      $region28: #{resnet_shape_forward.1} parent=11 // pred_fallthru
        _
      // Predicated region
      $region29: #{resnet_shape_forward.1} parent=11 // pred_check
        %p264 = pneg %p211
      $region30: #{resnet_shape_forward.1} parent=11 // pred_check_branch
        %266 = sbr.rel (%p264) target = $region32
      $region31: #{resnet_shape_forward.1} parent=11 // pred_region
        _
      $region32: #{resnet_shape_forward.1} parent=11 // pred_fallthru
        _
    $region12: #{resnet_shape_forward.1} parent=5 // pred_fallthru
      _
    %p267 = scmp.lt.s32.totalorder %s16, 4
    // Predicated region
    $region33: #{resnet_shape_forward.1} parent=5 // pred_check
      %p268 = pneg %p267
    $region34: #{resnet_shape_forward.1} parent=5 // pred_check_branch
      %270 = sbr.rel (%p268) target = $region36
    $region35: #{resnet_shape_forward.1} parent=5 // pred_region
      // Predicated region
      $region37: #{resnet_shape_forward.1} parent=35 // pred_check
        %p271 = pneg %p48
      $region38: #{resnet_shape_forward.1} parent=35 // pred_check_branch
        %273 = sbr.rel (%p271) target = $region40
      $region39: #{resnet_shape_forward.1} parent=35 // pred_region
        %p274 = scmp.lt.s32.totalorder %s23, 1
        %s275 = scalar_select %p274, %s23, 1
        %s276 = smul.addr %s275, 2
        %s277 = smul.addr %s276, 8
        %s278 = scalar_lea.vmem %s0, %s277
      $region40: #{resnet_shape_forward.1} parent=35 // pred_fallthru
        _
      // Predicated region
      $region41: #{resnet_shape_forward.1} parent=35 // pred_check
        %p279 = pneg %p137
      $region42: #{resnet_shape_forward.1} parent=35 // pred_check_branch
        %281 = sbr.rel (%p279) target = $region44
      $region43: #{resnet_shape_forward.1} parent=35 // pred_region
        %p282 = scmp.lt.s32.totalorder %s24, 1
        %s283 = scalar_select %p282, %s24, 1
        %s284 = smul.addr %s283, 72
        %s285 = smul.addr %s284, 4
        %s286 = scalar_lea.vmem %s4, %s285
      $region44: #{resnet_shape_forward.1} parent=35 // pred_fallthru
        _
      // Predicated region
      $region45: #{resnet_shape_forward.1} parent=35 // pred_check
        %p287 = pneg %p163
      $region46: #{resnet_shape_forward.1} parent=35 // pred_check_branch
        %289 = sbr.rel (%p287) target = $region48
      $region47: #{resnet_shape_forward.1} parent=35 // pred_region
        %p290 = scmp.lt.s32.totalorder %s24, 1
        %s291 = scalar_select %p290, %s24, 1
        %s292 = smul.addr %s291, 8
        %s293 = smul.addr %s292, 8
        %s294 = scalar_lea.vmem %s5, %s293
      $region48: #{resnet_shape_forward.1} parent=35 // pred_fallthru
        _
    $region36: #{resnet_shape_forward.1} parent=5 // pred_fallthru
      _
    %p295 = scmp.le.s32.totalorder 1, %s16
    %p296 = scmp.lt.s32.totalorder %s16, 5
    %p297 = pnand %p295, %p296
    %p298 = pneg %p297
    // Predicated region
    $region49: #{resnet_shape_forward.1} parent=5 // pred_check
      _
    $region50: #{resnet_shape_forward.1} parent=5 // pred_check_branch
      %300 = sbr.rel (%p297) target = $region52
    $region51: #{resnet_shape_forward.1} parent=5 // pred_region
      %s301 = ssub.s32 %s16, 1
      %p302 = scmp.lt.s32.totalorder %s25, 1
      %s303 = scalar_select %p302, %s25, 1
      %s304 = smul.addr %s303, 2
      %s305 = smul.addr %s304, 8
      %s306 = scalar_lea.vmem %s0, %s305
      %p307 = pneg %p54
      %p308 = pneg %p51
      %p309 = pneg %p75
      %p310 = pneg %p72
      %p311 = pneg %p96
      %p312 = pneg %p93
      %p313 = pneg %p117
      %p314 = pneg %p114
      %p315 = scmp.lt.s32.totalorder %s26, 1
      %s316 = scalar_select %p315, %s26, 1
      %s317 = smul.addr %s316, 72
      %s318 = smul.addr %s317, 4
      %s319 = scalar_lea.vmem %s4, %s318
      %p320 = pneg %p143
      %p321 = pneg %p140
      %p322 = scmp.lt.s32.totalorder %s26, 1
      %s323 = scalar_select %p322, %s26, 1
      %s324 = smul.addr %s323, 8
      %s325 = smul.addr %s324, 8
      %s326 = scalar_lea.vmem %s5, %s325
      %p327 = pneg %p169
      %p328 = pneg %p166
      %p329 = pneg %p190
      %p330 = pneg %p187
      %p331 = pneg %p211
      %p332 = pneg %p208
      %p333 = pneg %p237
      %p334 = pneg %p234
      %p335 = scmp.lt.s32.totalorder %s25, 1
      %s336 = scalar_select %p335, %s25, 1
      %s337 = smul.addr %s336, 2
      %s338 = scalar_lea.vmem %s8, %s337
      %p339 = scmp.lt.s32.totalorder %s25, 1
      %s340 = scalar_select %p339, %s25, 1
      %s341 = smul.addr %s340, 2
      %s342 = smul.addr %s341, 8
      %s343 = scalar_lea.vmem %s0, %s342
      %p344 = scmp.lt.s32.totalorder %s26, 1
      %s345 = scalar_select %p344, %s26, 1
      %s346 = smul.addr %s345, 72
      %s347 = smul.addr %s346, 4
      %s348 = scalar_lea.vmem %s4, %s347
      %p349 = scmp.lt.s32.totalorder %s26, 1
      %s350 = scalar_select %p349, %s26, 1
      %s351 = smul.addr %s350, 8
      %s352 = smul.addr %s351, 8
      %s353 = scalar_lea.vmem %s5, %s352
      %p354 = scmp.lt.s32.totalorder %s25, 1
      %s355 = scalar_select %p354, %s25, 1
      %s356 = smul.addr %s355, 2
      %s357 = scalar_lea.vmem %s8, %s356
      %p359 = scmp.eq.s32.totalorder %s26, 0
      // Predicated region
      $region53: #{resnet_shape_forward.1} parent=51 // pred_check
        %p360 = pneg %p359
      $region54: #{resnet_shape_forward.1} parent=51 // pred_check_branch
        %362 = sbr.rel (%p360) target = $region56
      $region55: #{resnet_shape_forward.1} parent=51 // pred_region
        %v363 = vld [vmem:[%s343] sm:$0xff]
        %v364 = vld [vmem:[%s343 + $0x8] sm:$0xff]
        %v365 = vld [vmem:[%s2] sm:$0xf]
        %v366 = vld [vmem:[%s2 + $0x4] sm:$0xf]
        %v367 = vld [vmem:[%s2 + $0x8] sm:$0xf]
        %v368 = vld [vmem:[%s2 + $0xc] sm:$0xf]
        %v369 = vld [vmem:[%s2 + $0x10] sm:$0xf]
        %v370 = vld [vmem:[%s2 + $0x14] sm:$0xf]
        %v371 = vld [vmem:[%s2 + $0x18] sm:$0xf]
        %v372 = vld [vmem:[%s2 + $0x1c] sm:$0xf]
        %v373 = vld [vmem:[%s2 + $0x20] sm:$0xf]
        %v374 = vld [vmem:[%s2 + $0x24] sm:$0xf]
        %v375 = vld [vmem:[%s2 + $0x28] sm:$0xf]
        %v376 = vld [vmem:[%s2 + $0x2c] sm:$0xf]
        %v377 = vld [vmem:[%s2 + $0x30] sm:$0xf]
        %v378 = vld [vmem:[%s2 + $0x34] sm:$0xf]
        %v379 = vld [vmem:[%s2 + $0x38] sm:$0xf]
        %v380 = vld [vmem:[%s2 + $0x3c] sm:$0xf]
        %v381 = vld [vmem:[%s2 + $0x40] sm:$0xf]
        %v382 = vld [vmem:[%s2 + $0x44] sm:$0xf]
        %v383 = vld [vmem:[%s2 + $0x48] sm:$0xf]
        %v384 = vld [vmem:[%s2 + $0x4c] sm:$0xf]
        %v385 = vld [vmem:[%s2 + $0x50] sm:$0xf]
        %v386 = vld [vmem:[%s2 + $0x54] sm:$0xf]
        %v387 = vld [vmem:[%s2 + $0x58] sm:$0xf]
        %v388 = vld [vmem:[%s2 + $0x5c] sm:$0xf]
        %v389 = vld [vmem:[%s2 + $0x60] sm:$0xf]
        %v390 = vld [vmem:[%s2 + $0x64] sm:$0xf]
        %v391 = vld [vmem:[%s2 + $0x68] sm:$0xf]
        %v392 = vld [vmem:[%s2 + $0x6c] sm:$0xf]
        %v393 = vld [vmem:[%s2 + $0x70] sm:$0xf]
        %v394 = vld [vmem:[%s2 + $0x74] sm:$0xf]
        %v395 = vld [vmem:[%s2 + $0x78] sm:$0xf]
        %v396 = vld [vmem:[%s2 + $0x7c] sm:$0xf]
        %v397 = vld [vmem:[%s2 + $0x80] sm:$0xf]
        %v398 = vld [vmem:[%s2 + $0x84] sm:$0xf]
        %v399 = vld [vmem:[%s2 + $0x88] sm:$0xf]
        %v400 = vld [vmem:[%s2 + $0x8c] sm:$0xf]
        %v401 = vld [vmem:[%s3] sm:$0xff]
        %v402 = vld [vmem:[%s3 + $0x8] sm:$0xff]
        %v403 = vld [vmem:[%s3 + $0x10] sm:$0xff]
        %v404 = vld [vmem:[%s3 + $0x18] sm:$0xff]
        %406 = vrot.lane.b32.xlu0 %v364, 17
        %v407 = vpop.permute.xlu0 %406
        %410 = vrot.lane.b32.xlu0 %v363, 17
        %v411 = vpop.permute.xlu0 %410
        %vm412 = vcmask 138240
        %v413 = vsel %vm412, %v411, %v407
        %v416 = vsel %vm412, %v407, %v411
        %v417 = vld [vmem:[%s1] ss:$8 sm:$0x3]
        %v419 = vperm.slane %v417, 0
        %v420 = vperm.slane %v417, 1
        %v423 = vmul.f32 %v416, %v419
        %v424 = vmul.f32 %v413, %v420
        %v425 = vpack.c.bf16 %v423, %v423
        %v426 = vpack.c.bf16 %v424, %v424
        %427 = vrot.lane.b32.xlu0 %v364, 16
        %v428 = vpop.permute.xlu0 %427
        %430 = vrot.lane.b32.xlu0 %v363, 16
        %v431 = vpop.permute.xlu0 %430
        %vm432 = vcmask 130048
        %v433 = vsel %vm432, %v431, %v428
        %v436 = vsel %vm432, %v428, %v431
        %s437 = scalar_lea.vmem %s1, 1
        %v438 = vld [vmem:[%s437] ss:$8 sm:$0x3]
        %v440 = vperm.slane %v438, 0
        %v441 = vperm.slane %v438, 1
        %v444 = vmul.f32 %v436, %v440
        %v445 = vmul.f32 %v433, %v441
        %v446 = vpack.c.bf16 %v444, %v444
        %v447 = vpack.c.bf16 %v445, %v445
        %v452 = vunpack.c.l.b16 %v369
        %v453 = vunpack.c.l.b16 %v370
        %v454 = vunpack.c.l.b16 %v371
        %v455 = vunpack.c.l.b16 %v372
        %v456 = vpack.c.b16 %v453, %v452
        %v457 = vpack.c.b16 %v455, %v454
        %vm458 = vcmask 64512
        %v460 = vsel %vm458, %v456, 0
        %v463 = vsel %vm458, %v457, 0
        %vm465 = vcmask 1043456
        %v467 = vsel %vm465, %v446, 0
        %v470 = vsel %vm465, %v447, 0
        %472 = vmatpush.bf16.msra.mxu0 0
        %473 = vmatpush.bf16.msra.mxu0 0
        %474 = vmatpush.bf16.msra.mxu0 0
        %475 = vmatpush.bf16.msra.mxu0 0
        %476 = vmatpush.bf16.msra.mxu0 0
        %477 = vmatpush.bf16.msra.mxu0 0
        %478 = vmatpush.bf16.msra.mxu0 0
        %479 = vmatpush.bf16.msra.mxu0 %v467
        %480 = vmatmul.bf16.gmra.mxu0 %v460
        %v481 = vpop.f32.mrf.mxu0
        %v482 = vadd.f32 0.0, %v481
        %v483 = vpop.f32.mrf.mxu0
        %v484 = vadd.f32 0.0, %v483
        %485 = vmatmul.bf16.gmra.mxu0 %v463
        %v486 = vpop.f32.mrf.mxu0
        %v487 = vadd.f32 0.0, %v486
        %v488 = vpop.f32.mrf.mxu0
        %v489 = vadd.f32 0.0, %v488
        %490 = vdwg.mxu0
        %491 = vmatpush.bf16.msra.mxu0 0
        %492 = vmatpush.bf16.msra.mxu0 0
        %493 = vmatpush.bf16.msra.mxu0 0
        %494 = vmatpush.bf16.msra.mxu0 0
        %495 = vmatpush.bf16.msra.mxu0 0
        %496 = vmatpush.bf16.msra.mxu0 0
        %497 = vmatpush.bf16.msra.mxu0 0
        %498 = vmatpush.bf16.msra.mxu0 %v470
        %499 = vmatmul.bf16.gmra.mxu0 %v460
        %v500 = vpop.f32.mrf.mxu0
        %v501 = vadd.f32 0.0, %v500
        %v502 = vpop.f32.mrf.mxu0
        %v503 = vadd.f32 0.0, %v502
        %504 = vmatmul.bf16.gmra.mxu0 %v463
        %v505 = vpop.f32.mrf.mxu0
        %v506 = vadd.f32 0.0, %v505
        %v507 = vpop.f32.mrf.mxu0
        %v508 = vadd.f32 0.0, %v507
        %509 = vdwg.mxu0
        %v514 = vunpack.c.l.b16 %v365
        %v515 = vunpack.c.l.b16 %v366
        %v516 = vunpack.c.l.b16 %v367
        %v517 = vunpack.c.l.b16 %v368
        %v518 = vpack.c.b16 %v515, %v514
        %v519 = vpack.c.b16 %v517, %v516
        %v521 = vsel %vm458, %v518, 0
        %v524 = vsel %vm458, %v519, 0
        %v527 = vsel %vm465, %v425, 0
        %v530 = vsel %vm465, %v426, 0
        %532 = vmatpush.bf16.msra.mxu0 0
        %533 = vmatpush.bf16.msra.mxu0 0
        %534 = vmatpush.bf16.msra.mxu0 0
        %535 = vmatpush.bf16.msra.mxu0 0
        %536 = vmatpush.bf16.msra.mxu0 0
        %537 = vmatpush.bf16.msra.mxu0 0
        %538 = vmatpush.bf16.msra.mxu0 0
        %539 = vmatpush.bf16.msra.mxu0 %v527
        %540 = vmatmul.bf16.gmra.mxu0 %v521
        %v541 = vpop.f32.mrf.mxu0
        %v542 = vadd.f32 %v482, %v541
        %v543 = vpop.f32.mrf.mxu0
        %v544 = vadd.f32 %v484, %v543
        %545 = vmatmul.bf16.gmra.mxu0 %v524
        %v546 = vpop.f32.mrf.mxu0
        %v547 = vadd.f32 %v487, %v546
        %v548 = vpop.f32.mrf.mxu0
        %v549 = vadd.f32 %v489, %v548
        %550 = vdwg.mxu0
        %551 = vmatpush.bf16.msra.mxu0 0
        %552 = vmatpush.bf16.msra.mxu0 0
        %553 = vmatpush.bf16.msra.mxu0 0
        %554 = vmatpush.bf16.msra.mxu0 0
        %555 = vmatpush.bf16.msra.mxu0 0
        %556 = vmatpush.bf16.msra.mxu0 0
        %557 = vmatpush.bf16.msra.mxu0 0
        %558 = vmatpush.bf16.msra.mxu0 %v530
        %559 = vmatmul.bf16.gmra.mxu0 %v521
        %v560 = vpop.f32.mrf.mxu0
        %v561 = vadd.f32 %v501, %v560
        %v562 = vpop.f32.mrf.mxu0
        %v563 = vadd.f32 %v503, %v562
        %564 = vmatmul.bf16.gmra.mxu0 %v524
        %v565 = vpop.f32.mrf.mxu0
        %v566 = vadd.f32 %v506, %v565
        %v567 = vpop.f32.mrf.mxu0
        %v568 = vadd.f32 %v508, %v567
        %569 = vdwg.mxu0
        %570 = vrot.lane.b32.xlu0 %v364, 15
        %v571 = vpop.permute.xlu0 %570
        %573 = vrot.lane.b32.xlu0 %v363, 15
        %v574 = vpop.permute.xlu0 %573
        %vm575 = vcmask 121856
        %v576 = vsel %vm575, %v574, %v571
        %v579 = vsel %vm575, %v571, %v574
        %s580 = scalar_lea.vmem %s1, 2
        %v581 = vld [vmem:[%s580] ss:$8 sm:$0x3]
        %v583 = vperm.slane %v581, 0
        %v584 = vperm.slane %v581, 1
        %v587 = vmul.f32 %v579, %v583
        %v588 = vmul.f32 %v576, %v584
        %v589 = vpack.c.bf16 %v587, %v587
        %v590 = vpack.c.bf16 %v588, %v588
        %v595 = vunpack.c.l.b16 %v373
        %v596 = vunpack.c.l.b16 %v374
        %v597 = vunpack.c.l.b16 %v375
        %v598 = vunpack.c.l.b16 %v376
        %v599 = vpack.c.b16 %v596, %v595
        %v600 = vpack.c.b16 %v598, %v597
        %v602 = vsel %vm458, %v599, 0
        %v605 = vsel %vm458, %v600, 0
        %v608 = vsel %vm465, %v589, 0
        %v611 = vsel %vm465, %v590, 0
        %613 = vmatpush.bf16.msra.mxu0 0
        %614 = vmatpush.bf16.msra.mxu0 0
        %615 = vmatpush.bf16.msra.mxu0 0
        %616 = vmatpush.bf16.msra.mxu0 0
        %617 = vmatpush.bf16.msra.mxu0 0
        %618 = vmatpush.bf16.msra.mxu0 0
        %619 = vmatpush.bf16.msra.mxu0 0
        %620 = vmatpush.bf16.msra.mxu0 %v608
        %621 = vmatmul.bf16.gmra.mxu0 %v602
        %v622 = vpop.f32.mrf.mxu0
        %v623 = vadd.f32 0.0, %v622
        %v624 = vpop.f32.mrf.mxu0
        %v625 = vadd.f32 0.0, %v624
        %626 = vmatmul.bf16.gmra.mxu0 %v605
        %v627 = vpop.f32.mrf.mxu0
        %v628 = vadd.f32 0.0, %v627
        %v629 = vpop.f32.mrf.mxu0
        %v630 = vadd.f32 0.0, %v629
        %631 = vdwg.mxu0
        %632 = vmatpush.bf16.msra.mxu0 0
        %633 = vmatpush.bf16.msra.mxu0 0
        %634 = vmatpush.bf16.msra.mxu0 0
        %635 = vmatpush.bf16.msra.mxu0 0
        %636 = vmatpush.bf16.msra.mxu0 0
        %637 = vmatpush.bf16.msra.mxu0 0
        %638 = vmatpush.bf16.msra.mxu0 0
        %639 = vmatpush.bf16.msra.mxu0 %v611
        %640 = vmatmul.bf16.gmra.mxu0 %v602
        %v641 = vpop.f32.mrf.mxu0
        %v642 = vadd.f32 0.0, %v641
        %v643 = vpop.f32.mrf.mxu0
        %v644 = vadd.f32 0.0, %v643
        %645 = vmatmul.bf16.gmra.mxu0 %v605
        %v646 = vpop.f32.mrf.mxu0
        %v647 = vadd.f32 0.0, %v646
        %v648 = vpop.f32.mrf.mxu0
        %v649 = vadd.f32 0.0, %v648
        %650 = vdwg.mxu0
        %v651 = vadd.f32 %v542, %v623
        %v652 = vadd.f32 %v561, %v642
        %v653 = vadd.f32 %v544, %v625
        %v654 = vadd.f32 %v563, %v644
        %v655 = vadd.f32 %v547, %v628
        %v656 = vadd.f32 %v566, %v647
        %v657 = vadd.f32 %v549, %v630
        %v658 = vadd.f32 %v568, %v649
        %659 = vrot.lane.b32.xlu0 %v364, 1
        %v660 = vpop.permute.xlu0 %659
        %662 = vrot.lane.b32.xlu0 %v363, 1
        %v663 = vpop.permute.xlu0 %662
        %vm664 = vcmask 7168
        %v665 = vsel %vm664, %v663, %v660
        %v668 = vsel %vm664, %v660, %v663
        %s669 = scalar_lea.vmem %s1, 3
        %v670 = vld [vmem:[%s669] ss:$8 sm:$0x3]
        %v672 = vperm.slane %v670, 0
        %v673 = vperm.slane %v670, 1
        %v676 = vmul.f32 %v668, %v672
        %v677 = vmul.f32 %v665, %v673
        %v678 = vpack.c.bf16 %v676, %v676
        %v679 = vpack.c.bf16 %v677, %v677
        %v684 = vunpack.c.l.b16 %v377
        %v685 = vunpack.c.l.b16 %v378
        %v686 = vunpack.c.l.b16 %v379
        %v687 = vunpack.c.l.b16 %v380
        %v688 = vpack.c.b16 %v685, %v684
        %v689 = vpack.c.b16 %v687, %v686
        %v691 = vsel %vm458, %v688, 0
        %v694 = vsel %vm458, %v689, 0
        %v697 = vsel %vm465, %v678, 0
        %v700 = vsel %vm465, %v679, 0
        %702 = vmatpush.bf16.msra.mxu0 0
        %703 = vmatpush.bf16.msra.mxu0 0
        %704 = vmatpush.bf16.msra.mxu0 0
        %705 = vmatpush.bf16.msra.mxu0 0
        %706 = vmatpush.bf16.msra.mxu0 0
        %707 = vmatpush.bf16.msra.mxu0 0
        %708 = vmatpush.bf16.msra.mxu0 0
        %709 = vmatpush.bf16.msra.mxu0 %v697
        %710 = vmatmul.bf16.gmra.mxu0 %v691
        %v711 = vpop.f32.mrf.mxu0
        %v712 = vadd.f32 0.0, %v711
        %v713 = vpop.f32.mrf.mxu0
        %v714 = vadd.f32 0.0, %v713
        %715 = vmatmul.bf16.gmra.mxu0 %v694
        %v716 = vpop.f32.mrf.mxu0
        %v717 = vadd.f32 0.0, %v716
        %v718 = vpop.f32.mrf.mxu0
        %v719 = vadd.f32 0.0, %v718
        %720 = vdwg.mxu0
        %721 = vmatpush.bf16.msra.mxu0 0
        %722 = vmatpush.bf16.msra.mxu0 0
        %723 = vmatpush.bf16.msra.mxu0 0
        %724 = vmatpush.bf16.msra.mxu0 0
        %725 = vmatpush.bf16.msra.mxu0 0
        %726 = vmatpush.bf16.msra.mxu0 0
        %727 = vmatpush.bf16.msra.mxu0 0
        %728 = vmatpush.bf16.msra.mxu0 %v700
        %729 = vmatmul.bf16.gmra.mxu0 %v691
        %v730 = vpop.f32.mrf.mxu0
        %v731 = vadd.f32 0.0, %v730
        %v732 = vpop.f32.mrf.mxu0
        %v733 = vadd.f32 0.0, %v732
        %734 = vmatmul.bf16.gmra.mxu0 %v694
        %v735 = vpop.f32.mrf.mxu0
        %v736 = vadd.f32 0.0, %v735
        %v737 = vpop.f32.mrf.mxu0
        %v738 = vadd.f32 0.0, %v737
        %739 = vdwg.mxu0
        %v740 = vadd.f32 %v651, %v712
        %v741 = vadd.f32 %v652, %v731
        %v742 = vadd.f32 %v653, %v714
        %v743 = vadd.f32 %v654, %v733
        %v744 = vadd.f32 %v655, %v717
        %v745 = vadd.f32 %v656, %v736
        %v746 = vadd.f32 %v657, %v719
        %v747 = vadd.f32 %v658, %v738
        %v748 = vpack.c.bf16 %v363, %v363
        %v749 = vpack.c.bf16 %v364, %v364
        %v754 = vunpack.c.l.b16 %v381
        %v755 = vunpack.c.l.b16 %v382
        %v756 = vunpack.c.l.b16 %v383
        %v757 = vunpack.c.l.b16 %v384
        %v758 = vpack.c.b16 %v755, %v754
        %v759 = vpack.c.b16 %v757, %v756
        %v761 = vsel %vm458, %v758, 0
        %v764 = vsel %vm458, %v759, 0
        %v767 = vsel %vm465, %v748, 0
        %v770 = vsel %vm465, %v749, 0
        %772 = vmatpush.bf16.msra.mxu0 0
        %773 = vmatpush.bf16.msra.mxu0 0
        %774 = vmatpush.bf16.msra.mxu0 0
        %775 = vmatpush.bf16.msra.mxu0 0
        %776 = vmatpush.bf16.msra.mxu0 0
        %777 = vmatpush.bf16.msra.mxu0 0
        %778 = vmatpush.bf16.msra.mxu0 0
        %779 = vmatpush.bf16.msra.mxu0 %v767
        %780 = vmatmul.bf16.gmra.mxu0 %v761
        %v781 = vpop.f32.mrf.mxu0
        %v782 = vadd.f32 0.0, %v781
        %v783 = vpop.f32.mrf.mxu0
        %v784 = vadd.f32 0.0, %v783
        %785 = vmatmul.bf16.gmra.mxu0 %v764
        %v786 = vpop.f32.mrf.mxu0
        %v787 = vadd.f32 0.0, %v786
        %v788 = vpop.f32.mrf.mxu0
        %v789 = vadd.f32 0.0, %v788
        %790 = vdwg.mxu0
        %791 = vmatpush.bf16.msra.mxu0 0
        %792 = vmatpush.bf16.msra.mxu0 0
        %793 = vmatpush.bf16.msra.mxu0 0
        %794 = vmatpush.bf16.msra.mxu0 0
        %795 = vmatpush.bf16.msra.mxu0 0
        %796 = vmatpush.bf16.msra.mxu0 0
        %797 = vmatpush.bf16.msra.mxu0 0
        %798 = vmatpush.bf16.msra.mxu0 %v770
        %799 = vmatmul.bf16.gmra.mxu0 %v761
        %v800 = vpop.f32.mrf.mxu0
        %v801 = vadd.f32 0.0, %v800
        %v802 = vpop.f32.mrf.mxu0
        %v803 = vadd.f32 0.0, %v802
        %804 = vmatmul.bf16.gmra.mxu0 %v764
        %v805 = vpop.f32.mrf.mxu0
        %v806 = vadd.f32 0.0, %v805
        %v807 = vpop.f32.mrf.mxu0
        %v808 = vadd.f32 0.0, %v807
        %809 = vdwg.mxu0
        %v810 = vadd.f32 %v740, %v782
        %v811 = vadd.f32 %v741, %v801
        %v812 = vadd.f32 %v742, %v784
        %v813 = vadd.f32 %v743, %v803
        %v814 = vadd.f32 %v744, %v787
        %v815 = vadd.f32 %v745, %v806
        %v816 = vadd.f32 %v746, %v789
        %v817 = vadd.f32 %v747, %v808
        %818 = vrot.lane.b32.xlu0 %v363, 127
        %v819 = vpop.permute.xlu0 %818
        %820 = vrot.lane.b32.xlu0 %v364, 127
        %v821 = vpop.permute.xlu0 %820
        %vm822 = vcmask 1039360
        %v823 = vsel %vm822, %v819, %v821
        %v827 = vsel %vm822, %v821, %v819
        %s828 = scalar_lea.vmem %s1, 5
        %v829 = vld [vmem:[%s828] ss:$8 sm:$0x3]
        %v831 = vperm.slane %v829, 0
        %v832 = vperm.slane %v829, 1
        %v835 = vmul.f32 %v823, %v831
        %v836 = vmul.f32 %v827, %v832
        %v837 = vpack.c.bf16 %v835, %v835
        %v838 = vpack.c.bf16 %v836, %v836
        %v843 = vunpack.c.l.b16 %v385
        %v844 = vunpack.c.l.b16 %v386
        %v845 = vunpack.c.l.b16 %v387
        %v846 = vunpack.c.l.b16 %v388
        %v847 = vpack.c.b16 %v844, %v843
        %v848 = vpack.c.b16 %v846, %v845
        %v850 = vsel %vm458, %v847, 0
        %v853 = vsel %vm458, %v848, 0
        %v856 = vsel %vm465, %v837, 0
        %v859 = vsel %vm465, %v838, 0
        %861 = vmatpush.bf16.msra.mxu0 0
        %862 = vmatpush.bf16.msra.mxu0 0
        %863 = vmatpush.bf16.msra.mxu0 0
        %864 = vmatpush.bf16.msra.mxu0 0
        %865 = vmatpush.bf16.msra.mxu0 0
        %866 = vmatpush.bf16.msra.mxu0 0
        %867 = vmatpush.bf16.msra.mxu0 0
        %868 = vmatpush.bf16.msra.mxu0 %v856
        %869 = vmatmul.bf16.gmra.mxu0 %v850
        %v870 = vpop.f32.mrf.mxu0
        %v871 = vadd.f32 0.0, %v870
        %v872 = vpop.f32.mrf.mxu0
        %v873 = vadd.f32 0.0, %v872
        %874 = vmatmul.bf16.gmra.mxu0 %v853
        %v875 = vpop.f32.mrf.mxu0
        %v876 = vadd.f32 0.0, %v875
        %v877 = vpop.f32.mrf.mxu0
        %v878 = vadd.f32 0.0, %v877
        %879 = vdwg.mxu0
        %880 = vmatpush.bf16.msra.mxu0 0
        %881 = vmatpush.bf16.msra.mxu0 0
        %882 = vmatpush.bf16.msra.mxu0 0
        %883 = vmatpush.bf16.msra.mxu0 0
        %884 = vmatpush.bf16.msra.mxu0 0
        %885 = vmatpush.bf16.msra.mxu0 0
        %886 = vmatpush.bf16.msra.mxu0 0
        %887 = vmatpush.bf16.msra.mxu0 %v859
        %888 = vmatmul.bf16.gmra.mxu0 %v850
        %v889 = vpop.f32.mrf.mxu0
        %v890 = vadd.f32 0.0, %v889
        %v891 = vpop.f32.mrf.mxu0
        %v892 = vadd.f32 0.0, %v891
        %893 = vmatmul.bf16.gmra.mxu0 %v853
        %v894 = vpop.f32.mrf.mxu0
        %v895 = vadd.f32 0.0, %v894
        %v896 = vpop.f32.mrf.mxu0
        %v897 = vadd.f32 0.0, %v896
        %898 = vdwg.mxu0
        %v899 = vadd.f32 %v810, %v871
        %v900 = vadd.f32 %v811, %v890
        %v901 = vadd.f32 %v812, %v873
        %v902 = vadd.f32 %v813, %v892
        %v903 = vadd.f32 %v814, %v876
        %v904 = vadd.f32 %v815, %v895
        %v905 = vadd.f32 %v816, %v878
        %v906 = vadd.f32 %v817, %v897
        %907 = vrot.lane.b32.xlu0 %v363, 113
        %v908 = vpop.permute.xlu0 %907
        %909 = vrot.lane.b32.xlu0 %v364, 113
        %v910 = vpop.permute.xlu0 %909
        %vm911 = vcmask 924672
        %v912 = vsel %vm911, %v908, %v910
        %v916 = vsel %vm911, %v910, %v908
        %s917 = scalar_lea.vmem %s1, 6
        %v918 = vld [vmem:[%s917] ss:$8 sm:$0x3]
        %v920 = vperm.slane %v918, 0
        %v921 = vperm.slane %v918, 1
        %v924 = vmul.f32 %v912, %v920
        %v925 = vmul.f32 %v916, %v921
        %v926 = vpack.c.bf16 %v924, %v924
        %v927 = vpack.c.bf16 %v925, %v925
        %v932 = vunpack.c.l.b16 %v389
        %v933 = vunpack.c.l.b16 %v390
        %v934 = vunpack.c.l.b16 %v391
        %v935 = vunpack.c.l.b16 %v392
        %v936 = vpack.c.b16 %v933, %v932
        %v937 = vpack.c.b16 %v935, %v934
        %v939 = vsel %vm458, %v936, 0
        %v942 = vsel %vm458, %v937, 0
        %v945 = vsel %vm465, %v926, 0
        %v948 = vsel %vm465, %v927, 0
        %950 = vmatpush.bf16.msra.mxu0 0
        %951 = vmatpush.bf16.msra.mxu0 0
        %952 = vmatpush.bf16.msra.mxu0 0
        %953 = vmatpush.bf16.msra.mxu0 0
        %954 = vmatpush.bf16.msra.mxu0 0
        %955 = vmatpush.bf16.msra.mxu0 0
        %956 = vmatpush.bf16.msra.mxu0 0
        %957 = vmatpush.bf16.msra.mxu0 %v945
        %958 = vmatmul.bf16.gmra.mxu0 %v939
        %v959 = vpop.f32.mrf.mxu0
        %v960 = vadd.f32 0.0, %v959
        %v961 = vpop.f32.mrf.mxu0
        %v962 = vadd.f32 0.0, %v961
        %963 = vmatmul.bf16.gmra.mxu0 %v942
        %v964 = vpop.f32.mrf.mxu0
        %v965 = vadd.f32 0.0, %v964
        %v966 = vpop.f32.mrf.mxu0
        %v967 = vadd.f32 0.0, %v966
        %968 = vdwg.mxu0
        %969 = vmatpush.bf16.msra.mxu0 0
        %970 = vmatpush.bf16.msra.mxu0 0
        %971 = vmatpush.bf16.msra.mxu0 0
        %972 = vmatpush.bf16.msra.mxu0 0
        %973 = vmatpush.bf16.msra.mxu0 0
        %974 = vmatpush.bf16.msra.mxu0 0
        %975 = vmatpush.bf16.msra.mxu0 0
        %976 = vmatpush.bf16.msra.mxu0 %v948
        %977 = vmatmul.bf16.gmra.mxu0 %v939
        %v978 = vpop.f32.mrf.mxu0
        %v979 = vadd.f32 0.0, %v978
        %v980 = vpop.f32.mrf.mxu0
        %v981 = vadd.f32 0.0, %v980
        %982 = vmatmul.bf16.gmra.mxu0 %v942
        %v983 = vpop.f32.mrf.mxu0
        %v984 = vadd.f32 0.0, %v983
        %v985 = vpop.f32.mrf.mxu0
        %v986 = vadd.f32 0.0, %v985
        %987 = vdwg.mxu0
        %v988 = vadd.f32 %v899, %v960
        %v989 = vadd.f32 %v900, %v979
        %v990 = vadd.f32 %v901, %v962
        %v991 = vadd.f32 %v902, %v981
        %v992 = vadd.f32 %v903, %v965
        %v993 = vadd.f32 %v904, %v984
        %v994 = vadd.f32 %v905, %v967
        %v995 = vadd.f32 %v906, %v986
        %996 = vrot.lane.b32.xlu0 %v363, 112
        %v997 = vpop.permute.xlu0 %996
        %998 = vrot.lane.b32.xlu0 %v364, 112
        %v999 = vpop.permute.xlu0 %998
        %vm1000 = vcmask 916480
        %v1001 = vsel %vm1000, %v997, %v999
        %v1005 = vsel %vm1000, %v999, %v997
        %s1006 = scalar_lea.vmem %s1, 7
        %v1007 = vld [vmem:[%s1006] ss:$8 sm:$0x3]
        %v1009 = vperm.slane %v1007, 0
        %v1010 = vperm.slane %v1007, 1
        %v1013 = vmul.f32 %v1001, %v1009
        %v1014 = vmul.f32 %v1005, %v1010
        %v1015 = vpack.c.bf16 %v1013, %v1013
        %v1016 = vpack.c.bf16 %v1014, %v1014
        %v1021 = vunpack.c.l.b16 %v393
        %v1022 = vunpack.c.l.b16 %v394
        %v1023 = vunpack.c.l.b16 %v395
        %v1024 = vunpack.c.l.b16 %v396
        %v1025 = vpack.c.b16 %v1022, %v1021
        %v1026 = vpack.c.b16 %v1024, %v1023
        %v1028 = vsel %vm458, %v1025, 0
        %v1031 = vsel %vm458, %v1026, 0
        %v1034 = vsel %vm465, %v1015, 0
        %v1037 = vsel %vm465, %v1016, 0
        %1039 = vmatpush.bf16.msra.mxu0 0
        %1040 = vmatpush.bf16.msra.mxu0 0
        %1041 = vmatpush.bf16.msra.mxu0 0
        %1042 = vmatpush.bf16.msra.mxu0 0
        %1043 = vmatpush.bf16.msra.mxu0 0
        %1044 = vmatpush.bf16.msra.mxu0 0
        %1045 = vmatpush.bf16.msra.mxu0 0
        %1046 = vmatpush.bf16.msra.mxu0 %v1034
        %1047 = vmatmul.bf16.gmra.mxu0 %v1028
        %v1048 = vpop.f32.mrf.mxu0
        %v1049 = vadd.f32 0.0, %v1048
        %v1050 = vpop.f32.mrf.mxu0
        %v1051 = vadd.f32 0.0, %v1050
        %1052 = vmatmul.bf16.gmra.mxu0 %v1031
        %v1053 = vpop.f32.mrf.mxu0
        %v1054 = vadd.f32 0.0, %v1053
        %v1055 = vpop.f32.mrf.mxu0
        %v1056 = vadd.f32 0.0, %v1055
        %1057 = vdwg.mxu0
        %1058 = vmatpush.bf16.msra.mxu0 0
        %1059 = vmatpush.bf16.msra.mxu0 0
        %1060 = vmatpush.bf16.msra.mxu0 0
        %1061 = vmatpush.bf16.msra.mxu0 0
        %1062 = vmatpush.bf16.msra.mxu0 0
        %1063 = vmatpush.bf16.msra.mxu0 0
        %1064 = vmatpush.bf16.msra.mxu0 0
        %1065 = vmatpush.bf16.msra.mxu0 %v1037
        %1066 = vmatmul.bf16.gmra.mxu0 %v1028
        %v1067 = vpop.f32.mrf.mxu0
        %v1068 = vadd.f32 0.0, %v1067
        %v1069 = vpop.f32.mrf.mxu0
        %v1070 = vadd.f32 0.0, %v1069
        %1071 = vmatmul.bf16.gmra.mxu0 %v1031
        %v1072 = vpop.f32.mrf.mxu0
        %v1073 = vadd.f32 0.0, %v1072
        %v1074 = vpop.f32.mrf.mxu0
        %v1075 = vadd.f32 0.0, %v1074
        %1076 = vdwg.mxu0
        %v1077 = vadd.f32 %v988, %v1049
        %v1078 = vadd.f32 %v989, %v1068
        %v1079 = vadd.f32 %v990, %v1051
        %v1080 = vadd.f32 %v991, %v1070
        %v1081 = vadd.f32 %v992, %v1054
        %v1082 = vadd.f32 %v993, %v1073
        %v1083 = vadd.f32 %v994, %v1056
        %v1084 = vadd.f32 %v995, %v1075
        %1085 = vrot.lane.b32.xlu0 %v363, 111
        %v1086 = vpop.permute.xlu0 %1085
        %1087 = vrot.lane.b32.xlu0 %v364, 111
        %v1088 = vpop.permute.xlu0 %1087
        %vm1089 = vcmask 908288
        %v1090 = vsel %vm1089, %v1086, %v1088
        %v1094 = vsel %vm1089, %v1088, %v1086
        %s1095 = scalar_lea.vmem %s1, 16
        %v1096 = vld [vmem:[%s1095] ss:$8 sm:$0x3]
        %v1098 = vperm.slane %v1096, 0
        %v1099 = vperm.slane %v1096, 1
        %v1102 = vmul.f32 %v1090, %v1098
        %v1103 = vmul.f32 %v1094, %v1099
        %v1104 = vpack.c.bf16 %v1102, %v1102
        %v1105 = vpack.c.bf16 %v1103, %v1103
        %v1110 = vunpack.c.l.b16 %v397
        %v1111 = vunpack.c.l.b16 %v398
        %v1112 = vunpack.c.l.b16 %v399
        %v1113 = vunpack.c.l.b16 %v400
        %v1114 = vpack.c.b16 %v1111, %v1110
        %v1115 = vpack.c.b16 %v1113, %v1112
        %v1117 = vsel %vm458, %v1114, 0
        %v1120 = vsel %vm458, %v1115, 0
        %v1123 = vsel %vm465, %v1104, 0
        %v1126 = vsel %vm465, %v1105, 0
        %1128 = vmatpush.bf16.msra.mxu0 0
        %1129 = vmatpush.bf16.msra.mxu0 0
        %1130 = vmatpush.bf16.msra.mxu0 0
        %1131 = vmatpush.bf16.msra.mxu0 0
        %1132 = vmatpush.bf16.msra.mxu0 0
        %1133 = vmatpush.bf16.msra.mxu0 0
        %1134 = vmatpush.bf16.msra.mxu0 0
        %1135 = vmatpush.bf16.msra.mxu0 %v1123
        %1136 = vmatmul.bf16.gmra.mxu0 %v1117
        %v1137 = vpop.f32.mrf.mxu0
        %v1138 = vadd.f32 0.0, %v1137
        %v1139 = vpop.f32.mrf.mxu0
        %v1140 = vadd.f32 0.0, %v1139
        %1141 = vmatmul.bf16.gmra.mxu0 %v1120
        %v1142 = vpop.f32.mrf.mxu0
        %v1143 = vadd.f32 0.0, %v1142
        %v1144 = vpop.f32.mrf.mxu0
        %v1145 = vadd.f32 0.0, %v1144
        %1146 = vdwg.mxu0
        %1147 = vmatpush.bf16.msra.mxu0 0
        %1148 = vmatpush.bf16.msra.mxu0 0
        %1149 = vmatpush.bf16.msra.mxu0 0
        %1150 = vmatpush.bf16.msra.mxu0 0
        %1151 = vmatpush.bf16.msra.mxu0 0
        %1152 = vmatpush.bf16.msra.mxu0 0
        %1153 = vmatpush.bf16.msra.mxu0 0
        %1154 = vmatpush.bf16.msra.mxu0 %v1126
        %1155 = vmatmul.bf16.gmra.mxu0 %v1117
        %v1156 = vpop.f32.mrf.mxu0
        %v1157 = vadd.f32 0.0, %v1156
        %v1158 = vpop.f32.mrf.mxu0
        %v1159 = vadd.f32 0.0, %v1158
        %1160 = vmatmul.bf16.gmra.mxu0 %v1120
        %v1161 = vpop.f32.mrf.mxu0
        %v1162 = vadd.f32 0.0, %v1161
        %v1163 = vpop.f32.mrf.mxu0
        %v1164 = vadd.f32 0.0, %v1163
        %1165 = vdwg.mxu0
        %v1166 = vadd.f32 %v1077, %v1138
        %v1167 = vadd.f32 %v1078, %v1157
        %v1168 = vadd.f32 %v1079, %v1140
        %v1169 = vadd.f32 %v1080, %v1159
        %v1170 = vadd.f32 %v1081, %v1143
        %v1171 = vadd.f32 %v1082, %v1162
        %v1172 = vadd.f32 %v1083, %v1145
        %v1173 = vadd.f32 %v1084, %v1164
        %1175 = vset.pattern.permute.xlu0 0
        %1176 = vperm.xlu0 %1175, %v401
        %v1177 = vpop.permute.xlu0 %1176
        %1180 = vset.pattern.permute.xlu0 0
        %1181 = vperm.xlu0 %1180, %v402
        %v1182 = vpop.permute.xlu0 %1181
        %1185 = vset.pattern.permute.xlu0 0
        %1186 = vperm.xlu0 %1185, %v403
        %v1187 = vpop.permute.xlu0 %1186
        %1190 = vset.pattern.permute.xlu0 0
        %1191 = vperm.xlu0 %1190, %v404
        %v1192 = vpop.permute.xlu0 %1191
        %v1194 = vadd.f32 %v1166, %v1177
        %v1195 = vadd.f32 %v1167, %v1177
        %v1196 = vadd.f32 %v1168, %v1182
        %v1197 = vadd.f32 %v1169, %v1182
        %v1198 = vadd.f32 %v1170, %v1187
        %v1199 = vadd.f32 %v1171, %v1187
        %v1200 = vadd.f32 %v1172, %v1192
        %v1201 = vadd.f32 %v1173, %v1192
        %vm1202 = vcmp.ge.f32.partialorder %v1194, 0.0
        %vm1203 = vcmp.ge.f32.partialorder %v1195, 0.0
        %vm1204 = vcmp.ge.f32.partialorder %v1196, 0.0
        %vm1205 = vcmp.ge.f32.partialorder %v1197, 0.0
        %vm1206 = vcmp.ge.f32.partialorder %v1198, 0.0
        %vm1207 = vcmp.ge.f32.partialorder %v1199, 0.0
        %vm1208 = vcmp.ge.f32.partialorder %v1200, 0.0
        %vm1209 = vcmp.ge.f32.partialorder %v1201, 0.0
        %v1210 = vmul.f32 %v1194, 0.1
        %v1211 = vmul.f32 %v1195, 0.1
        %v1212 = vmul.f32 %v1196, 0.1
        %v1213 = vmul.f32 %v1197, 0.1
        %v1214 = vmul.f32 %v1198, 0.1
        %v1215 = vmul.f32 %v1199, 0.1
        %v1216 = vmul.f32 %v1200, 0.1
        %v1217 = vmul.f32 %v1201, 0.1
        %v1218 = vsel %vm1202, %v1194, %v1210
        %v1219 = vsel %vm1203, %v1195, %v1211
        %v1220 = vsel %vm1204, %v1196, %v1212
        %v1221 = vsel %vm1205, %v1197, %v1213
        %v1222 = vsel %vm1206, %v1198, %v1214
        %v1223 = vsel %vm1207, %v1199, %v1215
        %v1224 = vsel %vm1208, %v1200, %v1216
        %v1225 = vsel %vm1209, %v1201, %v1217
        %1226 = vst [vmem:[#allocation2] sm:$0xff] %v1218
        %1227 = vst [vmem:[#allocation2 + $0x8] sm:$0xff] %v1219
        %1228 = vst [vmem:[#allocation2 + $0x10] sm:$0xff] %v1220
        %1229 = vst [vmem:[#allocation2 + $0x18] sm:$0xff] %v1221
        %1230 = vst [vmem:[#allocation2 + $0x20] sm:$0xff] %v1222
        %1231 = vst [vmem:[#allocation2 + $0x28] sm:$0xff] %v1223
        %1232 = vst [vmem:[#allocation2 + $0x30] sm:$0xff] %v1224
        %1233 = vst [vmem:[#allocation2 + $0x38] sm:$0xff] %v1225
      $region56: #{resnet_shape_forward.1} parent=51 // pred_fallthru
        _
      %v1234 = vld [vmem:[#allocation2] sm:$0xff]
      %v1235 = vld [vmem:[#allocation2 + $0x8] sm:$0xff]
      %v1236 = vld [vmem:[#allocation2 + $0x10] sm:$0xff]
      %v1237 = vld [vmem:[#allocation2 + $0x18] sm:$0xff]
      %v1238 = vld [vmem:[#allocation2 + $0x20] sm:$0xff]
      %v1239 = vld [vmem:[#allocation2 + $0x28] sm:$0xff]
      %v1240 = vld [vmem:[#allocation2 + $0x30] sm:$0xff]
      %v1241 = vld [vmem:[#allocation2 + $0x38] sm:$0xff]
      %v1242 = vld [vmem:[%s348] sm:$0xf]
      %v1243 = vld [vmem:[%s348 + $0x4] sm:$0xf]
      %v1244 = vld [vmem:[%s348 + $0x8] sm:$0xf]
      %v1245 = vld [vmem:[%s348 + $0xc] sm:$0xf]
      %v1246 = vld [vmem:[%s348 + $0x10] sm:$0xf]
      %v1247 = vld [vmem:[%s348 + $0x14] sm:$0xf]
      %v1248 = vld [vmem:[%s348 + $0x18] sm:$0xf]
      %v1249 = vld [vmem:[%s348 + $0x1c] sm:$0xf]
      %v1250 = vld [vmem:[%s348 + $0x20] sm:$0xf]
      %v1251 = vld [vmem:[%s348 + $0x24] sm:$0xf]
      %v1252 = vld [vmem:[%s348 + $0x28] sm:$0xf]
      %v1253 = vld [vmem:[%s348 + $0x2c] sm:$0xf]
      %v1254 = vld [vmem:[%s348 + $0x30] sm:$0xf]
      %v1255 = vld [vmem:[%s348 + $0x34] sm:$0xf]
      %v1256 = vld [vmem:[%s348 + $0x38] sm:$0xf]
      %v1257 = vld [vmem:[%s348 + $0x3c] sm:$0xf]
      %v1258 = vld [vmem:[%s348 + $0x40] sm:$0xf]
      %v1259 = vld [vmem:[%s348 + $0x44] sm:$0xf]
      %v1260 = vld [vmem:[%s348 + $0x48] sm:$0xf]
      %v1261 = vld [vmem:[%s348 + $0x4c] sm:$0xf]
      %v1262 = vld [vmem:[%s348 + $0x50] sm:$0xf]
      %v1263 = vld [vmem:[%s348 + $0x54] sm:$0xf]
      %v1264 = vld [vmem:[%s348 + $0x58] sm:$0xf]
      %v1265 = vld [vmem:[%s348 + $0x5c] sm:$0xf]
      %v1266 = vld [vmem:[%s348 + $0x60] sm:$0xf]
      %v1267 = vld [vmem:[%s348 + $0x64] sm:$0xf]
      %v1268 = vld [vmem:[%s348 + $0x68] sm:$0xf]
      %v1269 = vld [vmem:[%s348 + $0x6c] sm:$0xf]
      %v1270 = vld [vmem:[%s348 + $0x70] sm:$0xf]
      %v1271 = vld [vmem:[%s348 + $0x74] sm:$0xf]
      %v1272 = vld [vmem:[%s348 + $0x78] sm:$0xf]
      %v1273 = vld [vmem:[%s348 + $0x7c] sm:$0xf]
      %v1274 = vld [vmem:[%s348 + $0x80] sm:$0xf]
      %v1275 = vld [vmem:[%s348 + $0x84] sm:$0xf]
      %v1276 = vld [vmem:[%s348 + $0x88] sm:$0xf]
      %v1277 = vld [vmem:[%s348 + $0x8c] sm:$0xf]
      %v1278 = vld [vmem:[%s348 + $0x90] sm:$0xf]
      %v1279 = vld [vmem:[%s348 + $0x94] sm:$0xf]
      %v1280 = vld [vmem:[%s348 + $0x98] sm:$0xf]
      %v1281 = vld [vmem:[%s348 + $0x9c] sm:$0xf]
      %v1282 = vld [vmem:[%s348 + $0xa0] sm:$0xf]
      %v1283 = vld [vmem:[%s348 + $0xa4] sm:$0xf]
      %v1284 = vld [vmem:[%s348 + $0xa8] sm:$0xf]
      %v1285 = vld [vmem:[%s348 + $0xac] sm:$0xf]
      %v1286 = vld [vmem:[%s348 + $0xb0] sm:$0xf]
      %v1287 = vld [vmem:[%s348 + $0xb4] sm:$0xf]
      %v1288 = vld [vmem:[%s348 + $0xb8] sm:$0xf]
      %v1289 = vld [vmem:[%s348 + $0xbc] sm:$0xf]
      %v1290 = vld [vmem:[%s348 + $0xc0] sm:$0xf]
      %v1291 = vld [vmem:[%s348 + $0xc4] sm:$0xf]
      %v1292 = vld [vmem:[%s348 + $0xc8] sm:$0xf]
      %v1293 = vld [vmem:[%s348 + $0xcc] sm:$0xf]
      %v1294 = vld [vmem:[%s348 + $0xd0] sm:$0xf]
      %v1295 = vld [vmem:[%s348 + $0xd4] sm:$0xf]
      %v1296 = vld [vmem:[%s348 + $0xd8] sm:$0xf]
      %v1297 = vld [vmem:[%s348 + $0xdc] sm:$0xf]
      %v1298 = vld [vmem:[%s348 + $0xe0] sm:$0xf]
      %v1299 = vld [vmem:[%s348 + $0xe4] sm:$0xf]
      %v1300 = vld [vmem:[%s348 + $0xe8] sm:$0xf]
      %v1301 = vld [vmem:[%s348 + $0xec] sm:$0xf]
      %v1302 = vld [vmem:[%s348 + $0xf0] sm:$0xf]
      %v1303 = vld [vmem:[%s348 + $0xf4] sm:$0xf]
      %v1304 = vld [vmem:[%s348 + $0xf8] sm:$0xf]
      %v1305 = vld [vmem:[%s348 + $0xfc] sm:$0xf]
      %v1306 = vld [vmem:[%s348 + $0x100] sm:$0xf]
      %v1307 = vld [vmem:[%s348 + $0x104] sm:$0xf]
      %v1308 = vld [vmem:[%s348 + $0x108] sm:$0xf]
      %v1309 = vld [vmem:[%s348 + $0x10c] sm:$0xf]
      %v1310 = vld [vmem:[%s348 + $0x110] sm:$0xf]
      %v1311 = vld [vmem:[%s348 + $0x114] sm:$0xf]
      %v1312 = vld [vmem:[%s348 + $0x118] sm:$0xf]
      %v1313 = vld [vmem:[%s348 + $0x11c] sm:$0xf]
      %v1314 = vld [vmem:[%s353] sm:$0xff]
      %v1315 = vld [vmem:[%s353 + $0x8] sm:$0xff]
      %v1316 = vld [vmem:[%s353 + $0x10] sm:$0xff]
      %v1317 = vld [vmem:[%s353 + $0x18] sm:$0xff]
      %v1318 = vld [vmem:[%s353 + $0x20] sm:$0xff]
      %v1319 = vld [vmem:[%s353 + $0x28] sm:$0xff]
      %v1320 = vld [vmem:[%s353 + $0x30] sm:$0xff]
      %v1321 = vld [vmem:[%s353 + $0x38] sm:$0xff]
      %1326 = vrot.lane.b32.xlu0 %v1235, 17
      %v1327 = vpop.permute.xlu0 %1326
      %1328 = vrot.lane.b32.xlu0 %v1237, 17
      %v1329 = vpop.permute.xlu0 %1328
      %1330 = vrot.lane.b32.xlu0 %v1239, 17
      %v1331 = vpop.permute.xlu0 %1330
      %1332 = vrot.lane.b32.xlu0 %v1241, 17
      %v1333 = vpop.permute.xlu0 %1332
      %1342 = vrot.lane.b32.xlu0 %v1234, 17
      %v1343 = vpop.permute.xlu0 %1342
      %1344 = vrot.lane.b32.xlu0 %v1236, 17
      %v1345 = vpop.permute.xlu0 %1344
      %1346 = vrot.lane.b32.xlu0 %v1238, 17
      %v1347 = vpop.permute.xlu0 %1346
      %1348 = vrot.lane.b32.xlu0 %v1240, 17
      %v1349 = vpop.permute.xlu0 %1348
      %vm1350 = vcmask 138240
      %v1351 = vsel %vm1350, %v1343, %v1327
      %v1352 = vsel %vm1350, %v1345, %v1329
      %v1353 = vsel %vm1350, %v1347, %v1331
      %v1354 = vsel %vm1350, %v1349, %v1333
      %v1363 = vsel %vm1350, %v1327, %v1343
      %v1364 = vsel %vm1350, %v1329, %v1345
      %v1365 = vsel %vm1350, %v1331, %v1347
      %v1366 = vsel %vm1350, %v1333, %v1349
      %v1367 = vld [vmem:[%s1] ss:$8 sm:$0x3]
      %v1369 = vperm.slane %v1367, 0
      %v1370 = vperm.slane %v1367, 1
      %v1373 = vmul.f32 %v1363, %v1369
      %v1374 = vmul.f32 %v1351, %v1370
      %v1375 = vmul.f32 %v1364, %v1369
      %v1376 = vmul.f32 %v1352, %v1370
      %v1377 = vmul.f32 %v1365, %v1369
      %v1378 = vmul.f32 %v1353, %v1370
      %v1379 = vmul.f32 %v1366, %v1369
      %v1380 = vmul.f32 %v1354, %v1370
      %v1381 = vpack.c.bf16 %v1375, %v1373
      %v1382 = vpack.c.bf16 %v1376, %v1374
      %v1383 = vpack.c.bf16 %v1379, %v1377
      %v1384 = vpack.c.bf16 %v1380, %v1378
      %1385 = vrot.lane.b32.xlu0 %v1235, 16
      %v1386 = vpop.permute.xlu0 %1385
      %1387 = vrot.lane.b32.xlu0 %v1237, 16
      %v1388 = vpop.permute.xlu0 %1387
      %1389 = vrot.lane.b32.xlu0 %v1239, 16
      %v1390 = vpop.permute.xlu0 %1389
      %1391 = vrot.lane.b32.xlu0 %v1241, 16
      %v1392 = vpop.permute.xlu0 %1391
      %1397 = vrot.lane.b32.xlu0 %v1234, 16
      %v1398 = vpop.permute.xlu0 %1397
      %1399 = vrot.lane.b32.xlu0 %v1236, 16
      %v1400 = vpop.permute.xlu0 %1399
      %1401 = vrot.lane.b32.xlu0 %v1238, 16
      %v1402 = vpop.permute.xlu0 %1401
      %1403 = vrot.lane.b32.xlu0 %v1240, 16
      %v1404 = vpop.permute.xlu0 %1403
      %vm1405 = vcmask 130048
      %v1406 = vsel %vm1405, %v1398, %v1386
      %v1407 = vsel %vm1405, %v1400, %v1388
      %v1408 = vsel %vm1405, %v1402, %v1390
      %v1409 = vsel %vm1405, %v1404, %v1392
      %v1418 = vsel %vm1405, %v1386, %v1398
      %v1419 = vsel %vm1405, %v1388, %v1400
      %v1420 = vsel %vm1405, %v1390, %v1402
      %v1421 = vsel %vm1405, %v1392, %v1404
      %s1422 = scalar_lea.vmem %s1, 1
      %v1423 = vld [vmem:[%s1422] ss:$8 sm:$0x3]
      %v1425 = vperm.slane %v1423, 0
      %v1426 = vperm.slane %v1423, 1
      %v1429 = vmul.f32 %v1418, %v1425
      %v1430 = vmul.f32 %v1406, %v1426
      %v1431 = vmul.f32 %v1419, %v1425
      %v1432 = vmul.f32 %v1407, %v1426
      %v1433 = vmul.f32 %v1420, %v1425
      %v1434 = vmul.f32 %v1408, %v1426
      %v1435 = vmul.f32 %v1421, %v1425
      %v1436 = vmul.f32 %v1409, %v1426
      %v1437 = vpack.c.bf16 %v1431, %v1429
      %v1438 = vpack.c.bf16 %v1432, %v1430
      %v1439 = vpack.c.bf16 %v1435, %v1433
      %v1440 = vpack.c.bf16 %v1436, %v1434
      %v1445 = vunpack.c.l.b16 %v1246
      %v1446 = vunpack.c.l.b16 %v1247
      %v1447 = vunpack.c.l.b16 %v1248
      %v1448 = vunpack.c.l.b16 %v1249
      %v1449 = vpack.c.b16 %v1446, %v1445
      %v1450 = vpack.c.b16 %v1448, %v1447
      %vm1451 = vcmask 261120
      %v1453 = vsel %vm1451, %v1449, 0
      %v1456 = vsel %vm1451, %v1450, 0
      %1458 = vmatpush.bf16.msra.mxu0 0
      %1459 = vmatpush.bf16.msra.mxu0 0
      %1460 = vmatpush.bf16.msra.mxu0 0
      %1461 = vmatpush.bf16.msra.mxu0 0
      %1462 = vmatpush.bf16.msra.mxu0 0
      %1463 = vmatpush.bf16.msra.mxu0 0
      %1464 = vmatpush.bf16.msra.mxu0 %v1439
      %1465 = vmatpush.bf16.msra.mxu0 %v1437
      %1466 = vmatmul.bf16.gmra.mxu0 %v1453
      %v1467 = vpop.f32.mrf.mxu0
      %v1468 = vadd.f32 0.0, %v1467
      %v1469 = vpop.f32.mrf.mxu0
      %v1470 = vadd.f32 0.0, %v1469
      %1471 = vmatmul.bf16.gmra.mxu0 %v1456
      %v1472 = vpop.f32.mrf.mxu0
      %v1473 = vadd.f32 0.0, %v1472
      %v1474 = vpop.f32.mrf.mxu0
      %v1475 = vadd.f32 0.0, %v1474
      %1476 = vdwg.mxu0
      %1477 = vmatpush.bf16.msra.mxu0 0
      %1478 = vmatpush.bf16.msra.mxu0 0
      %1479 = vmatpush.bf16.msra.mxu0 0
      %1480 = vmatpush.bf16.msra.mxu0 0
      %1481 = vmatpush.bf16.msra.mxu0 0
      %1482 = vmatpush.bf16.msra.mxu0 0
      %1483 = vmatpush.bf16.msra.mxu0 %v1440
      %1484 = vmatpush.bf16.msra.mxu0 %v1438
      %1485 = vmatmul.bf16.gmra.mxu0 %v1453
      %v1486 = vpop.f32.mrf.mxu0
      %v1487 = vadd.f32 0.0, %v1486
      %v1488 = vpop.f32.mrf.mxu0
      %v1489 = vadd.f32 0.0, %v1488
      %1490 = vmatmul.bf16.gmra.mxu0 %v1456
      %v1491 = vpop.f32.mrf.mxu0
      %v1492 = vadd.f32 0.0, %v1491
      %v1493 = vpop.f32.mrf.mxu0
      %v1494 = vadd.f32 0.0, %v1493
      %1495 = vdwg.mxu0
      %v1500 = vunpack.c.l.b16 %v1242
      %v1501 = vunpack.c.l.b16 %v1243
      %v1502 = vunpack.c.l.b16 %v1244
      %v1503 = vunpack.c.l.b16 %v1245
      %v1504 = vpack.c.b16 %v1501, %v1500
      %v1505 = vpack.c.b16 %v1503, %v1502
      %v1507 = vsel %vm1451, %v1504, 0
      %v1510 = vsel %vm1451, %v1505, 0
      %1512 = vmatpush.bf16.msra.mxu0 0
      %1513 = vmatpush.bf16.msra.mxu0 0
      %1514 = vmatpush.bf16.msra.mxu0 0
      %1515 = vmatpush.bf16.msra.mxu0 0
      %1516 = vmatpush.bf16.msra.mxu0 0
      %1517 = vmatpush.bf16.msra.mxu0 0
      %1518 = vmatpush.bf16.msra.mxu0 %v1383
      %1519 = vmatpush.bf16.msra.mxu0 %v1381
      %1520 = vmatmul.bf16.gmra.mxu0 %v1507
      %v1521 = vpop.f32.mrf.mxu0
      %v1522 = vadd.f32 %v1468, %v1521
      %v1523 = vpop.f32.mrf.mxu0
      %v1524 = vadd.f32 %v1470, %v1523
      %1525 = vmatmul.bf16.gmra.mxu0 %v1510
      %v1526 = vpop.f32.mrf.mxu0
      %v1527 = vadd.f32 %v1473, %v1526
      %v1528 = vpop.f32.mrf.mxu0
      %v1529 = vadd.f32 %v1475, %v1528
      %1530 = vdwg.mxu0
      %1531 = vmatpush.bf16.msra.mxu0 0
      %1532 = vmatpush.bf16.msra.mxu0 0
      %1533 = vmatpush.bf16.msra.mxu0 0
      %1534 = vmatpush.bf16.msra.mxu0 0
      %1535 = vmatpush.bf16.msra.mxu0 0
      %1536 = vmatpush.bf16.msra.mxu0 0
      %1537 = vmatpush.bf16.msra.mxu0 %v1384
      %1538 = vmatpush.bf16.msra.mxu0 %v1382
      %1539 = vmatmul.bf16.gmra.mxu0 %v1507
      %v1540 = vpop.f32.mrf.mxu0
      %v1541 = vadd.f32 %v1487, %v1540
      %v1542 = vpop.f32.mrf.mxu0
      %v1543 = vadd.f32 %v1489, %v1542
      %1544 = vmatmul.bf16.gmra.mxu0 %v1510
      %v1545 = vpop.f32.mrf.mxu0
      %v1546 = vadd.f32 %v1492, %v1545
      %v1547 = vpop.f32.mrf.mxu0
      %v1548 = vadd.f32 %v1494, %v1547
      %1549 = vdwg.mxu0
      %1550 = vrot.lane.b32.xlu0 %v1235, 15
      %v1551 = vpop.permute.xlu0 %1550
      %1552 = vrot.lane.b32.xlu0 %v1237, 15
      %v1553 = vpop.permute.xlu0 %1552
      %1554 = vrot.lane.b32.xlu0 %v1239, 15
      %v1555 = vpop.permute.xlu0 %1554
      %1556 = vrot.lane.b32.xlu0 %v1241, 15
      %v1557 = vpop.permute.xlu0 %1556
      %1562 = vrot.lane.b32.xlu0 %v1234, 15
      %v1563 = vpop.permute.xlu0 %1562
      %1564 = vrot.lane.b32.xlu0 %v1236, 15
      %v1565 = vpop.permute.xlu0 %1564
      %1566 = vrot.lane.b32.xlu0 %v1238, 15
      %v1567 = vpop.permute.xlu0 %1566
      %1568 = vrot.lane.b32.xlu0 %v1240, 15
      %v1569 = vpop.permute.xlu0 %1568
      %vm1570 = vcmask 121856
      %v1571 = vsel %vm1570, %v1563, %v1551
      %v1572 = vsel %vm1570, %v1565, %v1553
      %v1573 = vsel %vm1570, %v1567, %v1555
      %v1574 = vsel %vm1570, %v1569, %v1557
      %v1583 = vsel %vm1570, %v1551, %v1563
      %v1584 = vsel %vm1570, %v1553, %v1565
      %v1585 = vsel %vm1570, %v1555, %v1567
      %v1586 = vsel %vm1570, %v1557, %v1569
      %s1587 = scalar_lea.vmem %s1, 2
      %v1588 = vld [vmem:[%s1587] ss:$8 sm:$0x3]
      %v1590 = vperm.slane %v1588, 0
      %v1591 = vperm.slane %v1588, 1
      %v1594 = vmul.f32 %v1583, %v1590
      %v1595 = vmul.f32 %v1571, %v1591
      %v1596 = vmul.f32 %v1584, %v1590
      %v1597 = vmul.f32 %v1572, %v1591
      %v1598 = vmul.f32 %v1585, %v1590
      %v1599 = vmul.f32 %v1573, %v1591
      %v1600 = vmul.f32 %v1586, %v1590
      %v1601 = vmul.f32 %v1574, %v1591
      %v1602 = vpack.c.bf16 %v1596, %v1594
      %v1603 = vpack.c.bf16 %v1597, %v1595
      %v1604 = vpack.c.bf16 %v1600, %v1598
      %v1605 = vpack.c.bf16 %v1601, %v1599
      %v1610 = vunpack.c.l.b16 %v1250
      %v1611 = vunpack.c.l.b16 %v1251
      %v1612 = vunpack.c.l.b16 %v1252
      %v1613 = vunpack.c.l.b16 %v1253
      %v1614 = vpack.c.b16 %v1611, %v1610
      %v1615 = vpack.c.b16 %v1613, %v1612
      %v1617 = vsel %vm1451, %v1614, 0
      %v1620 = vsel %vm1451, %v1615, 0
      %1622 = vmatpush.bf16.msra.mxu0 0
      %1623 = vmatpush.bf16.msra.mxu0 0
      %1624 = vmatpush.bf16.msra.mxu0 0
      %1625 = vmatpush.bf16.msra.mxu0 0
      %1626 = vmatpush.bf16.msra.mxu0 0
      %1627 = vmatpush.bf16.msra.mxu0 0
      %1628 = vmatpush.bf16.msra.mxu0 %v1604
      %1629 = vmatpush.bf16.msra.mxu0 %v1602
      %1630 = vmatmul.bf16.gmra.mxu0 %v1617
      %v1631 = vpop.f32.mrf.mxu0
      %v1632 = vadd.f32 0.0, %v1631
      %v1633 = vpop.f32.mrf.mxu0
      %v1634 = vadd.f32 0.0, %v1633
      %1635 = vmatmul.bf16.gmra.mxu0 %v1620
      %v1636 = vpop.f32.mrf.mxu0
      %v1637 = vadd.f32 0.0, %v1636
      %v1638 = vpop.f32.mrf.mxu0
      %v1639 = vadd.f32 0.0, %v1638
      %1640 = vdwg.mxu0
      %1641 = vmatpush.bf16.msra.mxu0 0
      %1642 = vmatpush.bf16.msra.mxu0 0
      %1643 = vmatpush.bf16.msra.mxu0 0
      %1644 = vmatpush.bf16.msra.mxu0 0
      %1645 = vmatpush.bf16.msra.mxu0 0
      %1646 = vmatpush.bf16.msra.mxu0 0
      %1647 = vmatpush.bf16.msra.mxu0 %v1605
      %1648 = vmatpush.bf16.msra.mxu0 %v1603
      %1649 = vmatmul.bf16.gmra.mxu0 %v1617
      %v1650 = vpop.f32.mrf.mxu0
      %v1651 = vadd.f32 0.0, %v1650
      %v1652 = vpop.f32.mrf.mxu0
      %v1653 = vadd.f32 0.0, %v1652
      %1654 = vmatmul.bf16.gmra.mxu0 %v1620
      %v1655 = vpop.f32.mrf.mxu0
      %v1656 = vadd.f32 0.0, %v1655
      %v1657 = vpop.f32.mrf.mxu0
      %v1658 = vadd.f32 0.0, %v1657
      %1659 = vdwg.mxu0
      %v1660 = vadd.f32 %v1522, %v1632
      %v1661 = vadd.f32 %v1541, %v1651
      %v1662 = vadd.f32 %v1524, %v1634
      %v1663 = vadd.f32 %v1543, %v1653
      %v1664 = vadd.f32 %v1527, %v1637
      %v1665 = vadd.f32 %v1546, %v1656
      %v1666 = vadd.f32 %v1529, %v1639
      %v1667 = vadd.f32 %v1548, %v1658
      %1668 = vrot.lane.b32.xlu0 %v1235, 1
      %v1669 = vpop.permute.xlu0 %1668
      %1670 = vrot.lane.b32.xlu0 %v1237, 1
      %v1671 = vpop.permute.xlu0 %1670
      %1672 = vrot.lane.b32.xlu0 %v1239, 1
      %v1673 = vpop.permute.xlu0 %1672
      %1674 = vrot.lane.b32.xlu0 %v1241, 1
      %v1675 = vpop.permute.xlu0 %1674
      %1680 = vrot.lane.b32.xlu0 %v1234, 1
      %v1681 = vpop.permute.xlu0 %1680
      %1682 = vrot.lane.b32.xlu0 %v1236, 1
      %v1683 = vpop.permute.xlu0 %1682
      %1684 = vrot.lane.b32.xlu0 %v1238, 1
      %v1685 = vpop.permute.xlu0 %1684
      %1686 = vrot.lane.b32.xlu0 %v1240, 1
      %v1687 = vpop.permute.xlu0 %1686
      %vm1688 = vcmask 7168
      %v1689 = vsel %vm1688, %v1681, %v1669
      %v1690 = vsel %vm1688, %v1683, %v1671
      %v1691 = vsel %vm1688, %v1685, %v1673
      %v1692 = vsel %vm1688, %v1687, %v1675
      %v1701 = vsel %vm1688, %v1669, %v1681
      %v1702 = vsel %vm1688, %v1671, %v1683
      %v1703 = vsel %vm1688, %v1673, %v1685
      %v1704 = vsel %vm1688, %v1675, %v1687
      %s1705 = scalar_lea.vmem %s1, 3
      %v1706 = vld [vmem:[%s1705] ss:$8 sm:$0x3]
      %v1708 = vperm.slane %v1706, 0
      %v1709 = vperm.slane %v1706, 1
      %v1712 = vmul.f32 %v1701, %v1708
      %v1713 = vmul.f32 %v1689, %v1709
      %v1714 = vmul.f32 %v1702, %v1708
      %v1715 = vmul.f32 %v1690, %v1709
      %v1716 = vmul.f32 %v1703, %v1708
      %v1717 = vmul.f32 %v1691, %v1709
      %v1718 = vmul.f32 %v1704, %v1708
      %v1719 = vmul.f32 %v1692, %v1709
      %v1720 = vpack.c.bf16 %v1714, %v1712
      %v1721 = vpack.c.bf16 %v1715, %v1713
      %v1722 = vpack.c.bf16 %v1718, %v1716
      %v1723 = vpack.c.bf16 %v1719, %v1717
      %v1728 = vunpack.c.l.b16 %v1254
      %v1729 = vunpack.c.l.b16 %v1255
      %v1730 = vunpack.c.l.b16 %v1256
      %v1731 = vunpack.c.l.b16 %v1257
      %v1732 = vpack.c.b16 %v1729, %v1728
      %v1733 = vpack.c.b16 %v1731, %v1730
      %v1735 = vsel %vm1451, %v1732, 0
      %v1738 = vsel %vm1451, %v1733, 0
      %1740 = vmatpush.bf16.msra.mxu0 0
      %1741 = vmatpush.bf16.msra.mxu0 0
      %1742 = vmatpush.bf16.msra.mxu0 0
      %1743 = vmatpush.bf16.msra.mxu0 0
      %1744 = vmatpush.bf16.msra.mxu0 0
      %1745 = vmatpush.bf16.msra.mxu0 0
      %1746 = vmatpush.bf16.msra.mxu0 %v1722
      %1747 = vmatpush.bf16.msra.mxu0 %v1720
      %1748 = vmatmul.bf16.gmra.mxu0 %v1735
      %v1749 = vpop.f32.mrf.mxu0
      %v1750 = vadd.f32 0.0, %v1749
      %v1751 = vpop.f32.mrf.mxu0
      %v1752 = vadd.f32 0.0, %v1751
      %1753 = vmatmul.bf16.gmra.mxu0 %v1738
      %v1754 = vpop.f32.mrf.mxu0
      %v1755 = vadd.f32 0.0, %v1754
      %v1756 = vpop.f32.mrf.mxu0
      %v1757 = vadd.f32 0.0, %v1756
      %1758 = vdwg.mxu0
      %1759 = vmatpush.bf16.msra.mxu0 0
      %1760 = vmatpush.bf16.msra.mxu0 0
      %1761 = vmatpush.bf16.msra.mxu0 0
      %1762 = vmatpush.bf16.msra.mxu0 0
      %1763 = vmatpush.bf16.msra.mxu0 0
      %1764 = vmatpush.bf16.msra.mxu0 0
      %1765 = vmatpush.bf16.msra.mxu0 %v1723
      %1766 = vmatpush.bf16.msra.mxu0 %v1721
      %1767 = vmatmul.bf16.gmra.mxu0 %v1735
      %v1768 = vpop.f32.mrf.mxu0
      %v1769 = vadd.f32 0.0, %v1768
      %v1770 = vpop.f32.mrf.mxu0
      %v1771 = vadd.f32 0.0, %v1770
      %1772 = vmatmul.bf16.gmra.mxu0 %v1738
      %v1773 = vpop.f32.mrf.mxu0
      %v1774 = vadd.f32 0.0, %v1773
      %v1775 = vpop.f32.mrf.mxu0
      %v1776 = vadd.f32 0.0, %v1775
      %1777 = vdwg.mxu0
      %v1778 = vadd.f32 %v1660, %v1750
      %v1779 = vadd.f32 %v1661, %v1769
      %v1780 = vadd.f32 %v1662, %v1752
      %v1781 = vadd.f32 %v1663, %v1771
      %v1782 = vadd.f32 %v1664, %v1755
      %v1783 = vadd.f32 %v1665, %v1774
      %v1784 = vadd.f32 %v1666, %v1757
      %v1785 = vadd.f32 %v1667, %v1776
      %v1786 = vpack.c.bf16 %v1236, %v1234
      %v1787 = vpack.c.bf16 %v1237, %v1235
      %v1788 = vpack.c.bf16 %v1240, %v1238
      %v1789 = vpack.c.bf16 %v1241, %v1239
      %v1794 = vunpack.c.l.b16 %v1258
      %v1795 = vunpack.c.l.b16 %v1259
      %v1796 = vunpack.c.l.b16 %v1260
      %v1797 = vunpack.c.l.b16 %v1261
      %v1798 = vpack.c.b16 %v1795, %v1794
      %v1799 = vpack.c.b16 %v1797, %v1796
      %v1801 = vsel %vm1451, %v1798, 0
      %v1804 = vsel %vm1451, %v1799, 0
      %1806 = vmatpush.bf16.msra.mxu0 0
      %1807 = vmatpush.bf16.msra.mxu0 0
      %1808 = vmatpush.bf16.msra.mxu0 0
      %1809 = vmatpush.bf16.msra.mxu0 0
      %1810 = vmatpush.bf16.msra.mxu0 0
      %1811 = vmatpush.bf16.msra.mxu0 0
      %1812 = vmatpush.bf16.msra.mxu0 %v1788
      %1813 = vmatpush.bf16.msra.mxu0 %v1786
      %1814 = vmatmul.bf16.gmra.mxu0 %v1801
      %v1815 = vpop.f32.mrf.mxu0
      %v1816 = vadd.f32 0.0, %v1815
      %v1817 = vpop.f32.mrf.mxu0
      %v1818 = vadd.f32 0.0, %v1817
      %1819 = vmatmul.bf16.gmra.mxu0 %v1804
      %v1820 = vpop.f32.mrf.mxu0
      %v1821 = vadd.f32 0.0, %v1820
      %v1822 = vpop.f32.mrf.mxu0
      %v1823 = vadd.f32 0.0, %v1822
      %1824 = vdwg.mxu0
      %1825 = vmatpush.bf16.msra.mxu0 0
      %1826 = vmatpush.bf16.msra.mxu0 0
      %1827 = vmatpush.bf16.msra.mxu0 0
      %1828 = vmatpush.bf16.msra.mxu0 0
      %1829 = vmatpush.bf16.msra.mxu0 0
      %1830 = vmatpush.bf16.msra.mxu0 0
      %1831 = vmatpush.bf16.msra.mxu0 %v1789
      %1832 = vmatpush.bf16.msra.mxu0 %v1787
      %1833 = vmatmul.bf16.gmra.mxu0 %v1801
      %v1834 = vpop.f32.mrf.mxu0
      %v1835 = vadd.f32 0.0, %v1834
      %v1836 = vpop.f32.mrf.mxu0
      %v1837 = vadd.f32 0.0, %v1836
      %1838 = vmatmul.bf16.gmra.mxu0 %v1804
      %v1839 = vpop.f32.mrf.mxu0
      %v1840 = vadd.f32 0.0, %v1839
      %v1841 = vpop.f32.mrf.mxu0
      %v1842 = vadd.f32 0.0, %v1841
      %1843 = vdwg.mxu0
      %v1844 = vadd.f32 %v1778, %v1816
      %v1845 = vadd.f32 %v1779, %v1835
      %v1846 = vadd.f32 %v1780, %v1818
      %v1847 = vadd.f32 %v1781, %v1837
      %v1848 = vadd.f32 %v1782, %v1821
      %v1849 = vadd.f32 %v1783, %v1840
      %v1850 = vadd.f32 %v1784, %v1823
      %v1851 = vadd.f32 %v1785, %v1842
      %1852 = vrot.lane.b32.xlu0 %v1234, 127
      %v1853 = vpop.permute.xlu0 %1852
      %1854 = vrot.lane.b32.xlu0 %v1235, 127
      %v1855 = vpop.permute.xlu0 %1854
      %1856 = vrot.lane.b32.xlu0 %v1236, 127
      %v1857 = vpop.permute.xlu0 %1856
      %1858 = vrot.lane.b32.xlu0 %v1237, 127
      %v1859 = vpop.permute.xlu0 %1858
      %1860 = vrot.lane.b32.xlu0 %v1238, 127
      %v1861 = vpop.permute.xlu0 %1860
      %1862 = vrot.lane.b32.xlu0 %v1239, 127
      %v1863 = vpop.permute.xlu0 %1862
      %1864 = vrot.lane.b32.xlu0 %v1240, 127
      %v1865 = vpop.permute.xlu0 %1864
      %1866 = vrot.lane.b32.xlu0 %v1241, 127
      %v1867 = vpop.permute.xlu0 %1866
      %vm1868 = vcmask 1039360
      %v1869 = vsel %vm1868, %v1853, %v1855
      %v1870 = vsel %vm1868, %v1857, %v1859
      %v1871 = vsel %vm1868, %v1861, %v1863
      %v1872 = vsel %vm1868, %v1865, %v1867
      %v1885 = vsel %vm1868, %v1855, %v1853
      %v1886 = vsel %vm1868, %v1859, %v1857
      %v1887 = vsel %vm1868, %v1863, %v1861
      %v1888 = vsel %vm1868, %v1867, %v1865
      %s1889 = scalar_lea.vmem %s1, 5
      %v1890 = vld [vmem:[%s1889] ss:$8 sm:$0x3]
      %v1892 = vperm.slane %v1890, 0
      %v1893 = vperm.slane %v1890, 1
      %v1896 = vmul.f32 %v1869, %v1892
      %v1897 = vmul.f32 %v1885, %v1893
      %v1898 = vmul.f32 %v1870, %v1892
      %v1899 = vmul.f32 %v1886, %v1893
      %v1900 = vmul.f32 %v1871, %v1892
      %v1901 = vmul.f32 %v1887, %v1893
      %v1902 = vmul.f32 %v1872, %v1892
      %v1903 = vmul.f32 %v1888, %v1893
      %v1904 = vpack.c.bf16 %v1898, %v1896
      %v1905 = vpack.c.bf16 %v1899, %v1897
      %v1906 = vpack.c.bf16 %v1902, %v1900
      %v1907 = vpack.c.bf16 %v1903, %v1901
      %v1912 = vunpack.c.l.b16 %v1262
      %v1913 = vunpack.c.l.b16 %v1263
      %v1914 = vunpack.c.l.b16 %v1264
      %v1915 = vunpack.c.l.b16 %v1265
      %v1916 = vpack.c.b16 %v1913, %v1912
      %v1917 = vpack.c.b16 %v1915, %v1914
      %v1919 = vsel %vm1451, %v1916, 0
      %v1922 = vsel %vm1451, %v1917, 0
      %1924 = vmatpush.bf16.msra.mxu0 0
      %1925 = vmatpush.bf16.msra.mxu0 0
      %1926 = vmatpush.bf16.msra.mxu0 0
      %1927 = vmatpush.bf16.msra.mxu0 0
      %1928 = vmatpush.bf16.msra.mxu0 0
      %1929 = vmatpush.bf16.msra.mxu0 0
      %1930 = vmatpush.bf16.msra.mxu0 %v1906
      %1931 = vmatpush.bf16.msra.mxu0 %v1904
      %1932 = vmatmul.bf16.gmra.mxu0 %v1919
      %v1933 = vpop.f32.mrf.mxu0
      %v1934 = vadd.f32 0.0, %v1933
      %v1935 = vpop.f32.mrf.mxu0
      %v1936 = vadd.f32 0.0, %v1935
      %1937 = vmatmul.bf16.gmra.mxu0 %v1922
      %v1938 = vpop.f32.mrf.mxu0
      %v1939 = vadd.f32 0.0, %v1938
      %v1940 = vpop.f32.mrf.mxu0
      %v1941 = vadd.f32 0.0, %v1940
      %1942 = vdwg.mxu0
      %1943 = vmatpush.bf16.msra.mxu0 0
      %1944 = vmatpush.bf16.msra.mxu0 0
      %1945 = vmatpush.bf16.msra.mxu0 0
      %1946 = vmatpush.bf16.msra.mxu0 0
      %1947 = vmatpush.bf16.msra.mxu0 0
      %1948 = vmatpush.bf16.msra.mxu0 0
      %1949 = vmatpush.bf16.msra.mxu0 %v1907
      %1950 = vmatpush.bf16.msra.mxu0 %v1905
      %1951 = vmatmul.bf16.gmra.mxu0 %v1919
      %v1952 = vpop.f32.mrf.mxu0
      %v1953 = vadd.f32 0.0, %v1952
      %v1954 = vpop.f32.mrf.mxu0
      %v1955 = vadd.f32 0.0, %v1954
      %1956 = vmatmul.bf16.gmra.mxu0 %v1922
      %v1957 = vpop.f32.mrf.mxu0
      %v1958 = vadd.f32 0.0, %v1957
      %v1959 = vpop.f32.mrf.mxu0
      %v1960 = vadd.f32 0.0, %v1959
      %1961 = vdwg.mxu0
      %v1962 = vadd.f32 %v1844, %v1934
      %v1963 = vadd.f32 %v1845, %v1953
      %v1964 = vadd.f32 %v1846, %v1936
      %v1965 = vadd.f32 %v1847, %v1955
      %v1966 = vadd.f32 %v1848, %v1939
      %v1967 = vadd.f32 %v1849, %v1958
      %v1968 = vadd.f32 %v1850, %v1941
      %v1969 = vadd.f32 %v1851, %v1960
      %1970 = vrot.lane.b32.xlu0 %v1234, 113
      %v1971 = vpop.permute.xlu0 %1970
      %1972 = vrot.lane.b32.xlu0 %v1235, 113
      %v1973 = vpop.permute.xlu0 %1972
      %1974 = vrot.lane.b32.xlu0 %v1236, 113
      %v1975 = vpop.permute.xlu0 %1974
      %1976 = vrot.lane.b32.xlu0 %v1237, 113
      %v1977 = vpop.permute.xlu0 %1976
      %1978 = vrot.lane.b32.xlu0 %v1238, 113
      %v1979 = vpop.permute.xlu0 %1978
      %1980 = vrot.lane.b32.xlu0 %v1239, 113
      %v1981 = vpop.permute.xlu0 %1980
      %1982 = vrot.lane.b32.xlu0 %v1240, 113
      %v1983 = vpop.permute.xlu0 %1982
      %1984 = vrot.lane.b32.xlu0 %v1241, 113
      %v1985 = vpop.permute.xlu0 %1984
      %vm1986 = vcmask 924672
      %v1987 = vsel %vm1986, %v1971, %v1973
      %v1988 = vsel %vm1986, %v1975, %v1977
      %v1989 = vsel %vm1986, %v1979, %v1981
      %v1990 = vsel %vm1986, %v1983, %v1985
      %v2003 = vsel %vm1986, %v1973, %v1971
      %v2004 = vsel %vm1986, %v1977, %v1975
      %v2005 = vsel %vm1986, %v1981, %v1979
      %v2006 = vsel %vm1986, %v1985, %v1983
      %s2007 = scalar_lea.vmem %s1, 6
      %v2008 = vld [vmem:[%s2007] ss:$8 sm:$0x3]
      %v2010 = vperm.slane %v2008, 0
      %v2011 = vperm.slane %v2008, 1
      %v2014 = vmul.f32 %v1987, %v2010
      %v2015 = vmul.f32 %v2003, %v2011
      %v2016 = vmul.f32 %v1988, %v2010
      %v2017 = vmul.f32 %v2004, %v2011
      %v2018 = vmul.f32 %v1989, %v2010
      %v2019 = vmul.f32 %v2005, %v2011
      %v2020 = vmul.f32 %v1990, %v2010
      %v2021 = vmul.f32 %v2006, %v2011
      %v2022 = vpack.c.bf16 %v2016, %v2014
      %v2023 = vpack.c.bf16 %v2017, %v2015
      %v2024 = vpack.c.bf16 %v2020, %v2018
      %v2025 = vpack.c.bf16 %v2021, %v2019
      %v2030 = vunpack.c.l.b16 %v1266
      %v2031 = vunpack.c.l.b16 %v1267
      %v2032 = vunpack.c.l.b16 %v1268
      %v2033 = vunpack.c.l.b16 %v1269
      %v2034 = vpack.c.b16 %v2031, %v2030
      %v2035 = vpack.c.b16 %v2033, %v2032
      %v2037 = vsel %vm1451, %v2034, 0
      %v2040 = vsel %vm1451, %v2035, 0
      %2042 = vmatpush.bf16.msra.mxu0 0
      %2043 = vmatpush.bf16.msra.mxu0 0
      %2044 = vmatpush.bf16.msra.mxu0 0
      %2045 = vmatpush.bf16.msra.mxu0 0
      %2046 = vmatpush.bf16.msra.mxu0 0
      %2047 = vmatpush.bf16.msra.mxu0 0
      %2048 = vmatpush.bf16.msra.mxu0 %v2024
      %2049 = vmatpush.bf16.msra.mxu0 %v2022
      %2050 = vmatmul.bf16.gmra.mxu0 %v2037
      %v2051 = vpop.f32.mrf.mxu0
      %v2052 = vadd.f32 0.0, %v2051
      %v2053 = vpop.f32.mrf.mxu0
      %v2054 = vadd.f32 0.0, %v2053
      %2055 = vmatmul.bf16.gmra.mxu0 %v2040
      %v2056 = vpop.f32.mrf.mxu0
      %v2057 = vadd.f32 0.0, %v2056
      %v2058 = vpop.f32.mrf.mxu0
      %v2059 = vadd.f32 0.0, %v2058
      %2060 = vdwg.mxu0
      %2061 = vmatpush.bf16.msra.mxu0 0
      %2062 = vmatpush.bf16.msra.mxu0 0
      %2063 = vmatpush.bf16.msra.mxu0 0
      %2064 = vmatpush.bf16.msra.mxu0 0
      %2065 = vmatpush.bf16.msra.mxu0 0
      %2066 = vmatpush.bf16.msra.mxu0 0
      %2067 = vmatpush.bf16.msra.mxu0 %v2025
      %2068 = vmatpush.bf16.msra.mxu0 %v2023
      %2069 = vmatmul.bf16.gmra.mxu0 %v2037
      %v2070 = vpop.f32.mrf.mxu0
      %v2071 = vadd.f32 0.0, %v2070
      %v2072 = vpop.f32.mrf.mxu0
      %v2073 = vadd.f32 0.0, %v2072
      %2074 = vmatmul.bf16.gmra.mxu0 %v2040
      %v2075 = vpop.f32.mrf.mxu0
      %v2076 = vadd.f32 0.0, %v2075
      %v2077 = vpop.f32.mrf.mxu0
      %v2078 = vadd.f32 0.0, %v2077
      %2079 = vdwg.mxu0
      %v2080 = vadd.f32 %v1962, %v2052
      %v2081 = vadd.f32 %v1963, %v2071
      %v2082 = vadd.f32 %v1964, %v2054
      %v2083 = vadd.f32 %v1965, %v2073
      %v2084 = vadd.f32 %v1966, %v2057
      %v2085 = vadd.f32 %v1967, %v2076
      %v2086 = vadd.f32 %v1968, %v2059
      %v2087 = vadd.f32 %v1969, %v2078
      %2088 = vrot.lane.b32.xlu0 %v1234, 112
      %v2089 = vpop.permute.xlu0 %2088
      %2090 = vrot.lane.b32.xlu0 %v1235, 112
      %v2091 = vpop.permute.xlu0 %2090
      %2092 = vrot.lane.b32.xlu0 %v1236, 112
      %v2093 = vpop.permute.xlu0 %2092
      %2094 = vrot.lane.b32.xlu0 %v1237, 112
      %v2095 = vpop.permute.xlu0 %2094
      %2096 = vrot.lane.b32.xlu0 %v1238, 112
      %v2097 = vpop.permute.xlu0 %2096
      %2098 = vrot.lane.b32.xlu0 %v1239, 112
      %v2099 = vpop.permute.xlu0 %2098
      %2100 = vrot.lane.b32.xlu0 %v1240, 112
      %v2101 = vpop.permute.xlu0 %2100
      %2102 = vrot.lane.b32.xlu0 %v1241, 112
      %v2103 = vpop.permute.xlu0 %2102
      %vm2104 = vcmask 916480
      %v2105 = vsel %vm2104, %v2089, %v2091
      %v2106 = vsel %vm2104, %v2093, %v2095
      %v2107 = vsel %vm2104, %v2097, %v2099
      %v2108 = vsel %vm2104, %v2101, %v2103
      %v2121 = vsel %vm2104, %v2091, %v2089
      %v2122 = vsel %vm2104, %v2095, %v2093
      %v2123 = vsel %vm2104, %v2099, %v2097
      %v2124 = vsel %vm2104, %v2103, %v2101
      %s2125 = scalar_lea.vmem %s1, 7
      %v2126 = vld [vmem:[%s2125] ss:$8 sm:$0x3]
      %v2128 = vperm.slane %v2126, 0
      %v2129 = vperm.slane %v2126, 1
      %v2132 = vmul.f32 %v2105, %v2128
      %v2133 = vmul.f32 %v2121, %v2129
      %v2134 = vmul.f32 %v2106, %v2128
      %v2135 = vmul.f32 %v2122, %v2129
      %v2136 = vmul.f32 %v2107, %v2128
      %v2137 = vmul.f32 %v2123, %v2129
      %v2138 = vmul.f32 %v2108, %v2128
      %v2139 = vmul.f32 %v2124, %v2129
      %v2140 = vpack.c.bf16 %v2134, %v2132
      %v2141 = vpack.c.bf16 %v2135, %v2133
      %v2142 = vpack.c.bf16 %v2138, %v2136
      %v2143 = vpack.c.bf16 %v2139, %v2137
      %v2148 = vunpack.c.l.b16 %v1270
      %v2149 = vunpack.c.l.b16 %v1271
      %v2150 = vunpack.c.l.b16 %v1272
      %v2151 = vunpack.c.l.b16 %v1273
      %v2152 = vpack.c.b16 %v2149, %v2148
      %v2153 = vpack.c.b16 %v2151, %v2150
      %v2155 = vsel %vm1451, %v2152, 0
      %v2158 = vsel %vm1451, %v2153, 0
      %2160 = vmatpush.bf16.msra.mxu0 0
      %2161 = vmatpush.bf16.msra.mxu0 0
      %2162 = vmatpush.bf16.msra.mxu0 0
      %2163 = vmatpush.bf16.msra.mxu0 0
      %2164 = vmatpush.bf16.msra.mxu0 0
      %2165 = vmatpush.bf16.msra.mxu0 0
      %2166 = vmatpush.bf16.msra.mxu0 %v2142
      %2167 = vmatpush.bf16.msra.mxu0 %v2140
      %2168 = vmatmul.bf16.gmra.mxu0 %v2155
      %v2169 = vpop.f32.mrf.mxu0
      %v2170 = vadd.f32 0.0, %v2169
      %v2171 = vpop.f32.mrf.mxu0
      %v2172 = vadd.f32 0.0, %v2171
      %2173 = vmatmul.bf16.gmra.mxu0 %v2158
      %v2174 = vpop.f32.mrf.mxu0
      %v2175 = vadd.f32 0.0, %v2174
      %v2176 = vpop.f32.mrf.mxu0
      %v2177 = vadd.f32 0.0, %v2176
      %2178 = vdwg.mxu0
      %2179 = vmatpush.bf16.msra.mxu0 0
      %2180 = vmatpush.bf16.msra.mxu0 0
      %2181 = vmatpush.bf16.msra.mxu0 0
      %2182 = vmatpush.bf16.msra.mxu0 0
      %2183 = vmatpush.bf16.msra.mxu0 0
      %2184 = vmatpush.bf16.msra.mxu0 0
      %2185 = vmatpush.bf16.msra.mxu0 %v2143
      %2186 = vmatpush.bf16.msra.mxu0 %v2141
      %2187 = vmatmul.bf16.gmra.mxu0 %v2155
      %v2188 = vpop.f32.mrf.mxu0
      %v2189 = vadd.f32 0.0, %v2188
      %v2190 = vpop.f32.mrf.mxu0
      %v2191 = vadd.f32 0.0, %v2190
      %2192 = vmatmul.bf16.gmra.mxu0 %v2158
      %v2193 = vpop.f32.mrf.mxu0
      %v2194 = vadd.f32 0.0, %v2193
      %v2195 = vpop.f32.mrf.mxu0
      %v2196 = vadd.f32 0.0, %v2195
      %2197 = vdwg.mxu0
      %v2198 = vadd.f32 %v2080, %v2170
      %v2199 = vadd.f32 %v2081, %v2189
      %v2200 = vadd.f32 %v2082, %v2172
      %v2201 = vadd.f32 %v2083, %v2191
      %v2202 = vadd.f32 %v2084, %v2175
      %v2203 = vadd.f32 %v2085, %v2194
      %v2204 = vadd.f32 %v2086, %v2177
      %v2205 = vadd.f32 %v2087, %v2196
      %2206 = vrot.lane.b32.xlu0 %v1234, 111
      %v2207 = vpop.permute.xlu0 %2206
      %2208 = vrot.lane.b32.xlu0 %v1235, 111
      %v2209 = vpop.permute.xlu0 %2208
      %2210 = vrot.lane.b32.xlu0 %v1236, 111
      %v2211 = vpop.permute.xlu0 %2210
      %2212 = vrot.lane.b32.xlu0 %v1237, 111
      %v2213 = vpop.permute.xlu0 %2212
      %2214 = vrot.lane.b32.xlu0 %v1238, 111
      %v2215 = vpop.permute.xlu0 %2214
      %2216 = vrot.lane.b32.xlu0 %v1239, 111
      %v2217 = vpop.permute.xlu0 %2216
      %2218 = vrot.lane.b32.xlu0 %v1240, 111
      %v2219 = vpop.permute.xlu0 %2218
      %2220 = vrot.lane.b32.xlu0 %v1241, 111
      %v2221 = vpop.permute.xlu0 %2220
      %vm2222 = vcmask 908288
      %v2223 = vsel %vm2222, %v2207, %v2209
      %v2224 = vsel %vm2222, %v2211, %v2213
      %v2225 = vsel %vm2222, %v2215, %v2217
      %v2226 = vsel %vm2222, %v2219, %v2221
      %v2239 = vsel %vm2222, %v2209, %v2207
      %v2240 = vsel %vm2222, %v2213, %v2211
      %v2241 = vsel %vm2222, %v2217, %v2215
      %v2242 = vsel %vm2222, %v2221, %v2219
      %s2243 = scalar_lea.vmem %s1, 16
      %v2244 = vld [vmem:[%s2243] ss:$8 sm:$0x3]
      %v2246 = vperm.slane %v2244, 0
      %v2247 = vperm.slane %v2244, 1
      %v2250 = vmul.f32 %v2223, %v2246
      %v2251 = vmul.f32 %v2239, %v2247
      %v2252 = vmul.f32 %v2224, %v2246
      %v2253 = vmul.f32 %v2240, %v2247
      %v2254 = vmul.f32 %v2225, %v2246
      %v2255 = vmul.f32 %v2241, %v2247
      %v2256 = vmul.f32 %v2226, %v2246
      %v2257 = vmul.f32 %v2242, %v2247
      %v2258 = vpack.c.bf16 %v2252, %v2250
      %v2259 = vpack.c.bf16 %v2253, %v2251
      %v2260 = vpack.c.bf16 %v2256, %v2254
      %v2261 = vpack.c.bf16 %v2257, %v2255
      %v2266 = vunpack.c.l.b16 %v1274
      %v2267 = vunpack.c.l.b16 %v1275
      %v2268 = vunpack.c.l.b16 %v1276
      %v2269 = vunpack.c.l.b16 %v1277
      %v2270 = vpack.c.b16 %v2267, %v2266
      %v2271 = vpack.c.b16 %v2269, %v2268
      %v2273 = vsel %vm1451, %v2270, 0
      %v2276 = vsel %vm1451, %v2271, 0
      %2278 = vmatpush.bf16.msra.mxu0 0
      %2279 = vmatpush.bf16.msra.mxu0 0
      %2280 = vmatpush.bf16.msra.mxu0 0
      %2281 = vmatpush.bf16.msra.mxu0 0
      %2282 = vmatpush.bf16.msra.mxu0 0
      %2283 = vmatpush.bf16.msra.mxu0 0
      %2284 = vmatpush.bf16.msra.mxu0 %v2260
      %2285 = vmatpush.bf16.msra.mxu0 %v2258
      %2286 = vmatmul.bf16.gmra.mxu0 %v2273
      %v2287 = vpop.f32.mrf.mxu0
      %v2288 = vadd.f32 0.0, %v2287
      %v2289 = vpop.f32.mrf.mxu0
      %v2290 = vadd.f32 0.0, %v2289
      %2291 = vmatmul.bf16.gmra.mxu0 %v2276
      %v2292 = vpop.f32.mrf.mxu0
      %v2293 = vadd.f32 0.0, %v2292
      %v2294 = vpop.f32.mrf.mxu0
      %v2295 = vadd.f32 0.0, %v2294
      %2296 = vdwg.mxu0
      %2297 = vmatpush.bf16.msra.mxu0 0
      %2298 = vmatpush.bf16.msra.mxu0 0
      %2299 = vmatpush.bf16.msra.mxu0 0
      %2300 = vmatpush.bf16.msra.mxu0 0
      %2301 = vmatpush.bf16.msra.mxu0 0
      %2302 = vmatpush.bf16.msra.mxu0 0
      %2303 = vmatpush.bf16.msra.mxu0 %v2261
      %2304 = vmatpush.bf16.msra.mxu0 %v2259
      %2305 = vmatmul.bf16.gmra.mxu0 %v2273
      %v2306 = vpop.f32.mrf.mxu0
      %v2307 = vadd.f32 0.0, %v2306
      %v2308 = vpop.f32.mrf.mxu0
      %v2309 = vadd.f32 0.0, %v2308
      %2310 = vmatmul.bf16.gmra.mxu0 %v2276
      %v2311 = vpop.f32.mrf.mxu0
      %v2312 = vadd.f32 0.0, %v2311
      %v2313 = vpop.f32.mrf.mxu0
      %v2314 = vadd.f32 0.0, %v2313
      %2315 = vdwg.mxu0
      %v2316 = vadd.f32 %v2198, %v2288
      %v2317 = vadd.f32 %v2199, %v2307
      %v2318 = vadd.f32 %v2200, %v2290
      %v2319 = vadd.f32 %v2201, %v2309
      %v2320 = vadd.f32 %v2202, %v2293
      %v2321 = vadd.f32 %v2203, %v2312
      %v2322 = vadd.f32 %v2204, %v2295
      %v2323 = vadd.f32 %v2205, %v2314
      %2325 = vset.pattern.permute.xlu0 0
      %2326 = vperm.xlu0 %2325, %v1314
      %v2327 = vpop.permute.xlu0 %2326
      %2330 = vset.pattern.permute.xlu0 0
      %2331 = vperm.xlu0 %2330, %v1315
      %v2332 = vpop.permute.xlu0 %2331
      %2335 = vset.pattern.permute.xlu0 0
      %2336 = vperm.xlu0 %2335, %v1316
      %v2337 = vpop.permute.xlu0 %2336
      %2340 = vset.pattern.permute.xlu0 0
      %2341 = vperm.xlu0 %2340, %v1317
      %v2342 = vpop.permute.xlu0 %2341
      %v2344 = vadd.f32 %v2316, %v2327
      %v2345 = vadd.f32 %v2317, %v2327
      %v2346 = vadd.f32 %v2318, %v2332
      %v2347 = vadd.f32 %v2319, %v2332
      %v2348 = vadd.f32 %v2320, %v2337
      %v2349 = vadd.f32 %v2321, %v2337
      %v2350 = vadd.f32 %v2322, %v2342
      %v2351 = vadd.f32 %v2323, %v2342
      %v2352 = vmax.f32 %v2344, 0.0
      %v2353 = vmax.f32 %v2345, 0.0
      %v2354 = vmax.f32 %v2346, 0.0
      %v2355 = vmax.f32 %v2347, 0.0
      %v2356 = vmax.f32 %v2348, 0.0
      %v2357 = vmax.f32 %v2349, 0.0
      %v2358 = vmax.f32 %v2350, 0.0
      %v2359 = vmax.f32 %v2351, 0.0
      %2364 = vrot.lane.b32.xlu0 %v2353, 17
      %v2365 = vpop.permute.xlu0 %2364
      %2366 = vrot.lane.b32.xlu0 %v2355, 17
      %v2367 = vpop.permute.xlu0 %2366
      %2368 = vrot.lane.b32.xlu0 %v2357, 17
      %v2369 = vpop.permute.xlu0 %2368
      %2370 = vrot.lane.b32.xlu0 %v2359, 17
      %v2371 = vpop.permute.xlu0 %2370
      %2380 = vrot.lane.b32.xlu0 %v2352, 17
      %v2381 = vpop.permute.xlu0 %2380
      %2382 = vrot.lane.b32.xlu0 %v2354, 17
      %v2383 = vpop.permute.xlu0 %2382
      %2384 = vrot.lane.b32.xlu0 %v2356, 17
      %v2385 = vpop.permute.xlu0 %2384
      %2386 = vrot.lane.b32.xlu0 %v2358, 17
      %v2387 = vpop.permute.xlu0 %2386
      %v2388 = vsel %vm1350, %v2381, %v2365
      %v2389 = vsel %vm1350, %v2383, %v2367
      %v2390 = vsel %vm1350, %v2385, %v2369
      %v2391 = vsel %vm1350, %v2387, %v2371
      %v2400 = vsel %vm1350, %v2365, %v2381
      %v2401 = vsel %vm1350, %v2367, %v2383
      %v2402 = vsel %vm1350, %v2369, %v2385
      %v2403 = vsel %vm1350, %v2371, %v2387
      %v2404 = vmul.f32 %v2400, %v1369
      %v2405 = vmul.f32 %v2388, %v1370
      %v2406 = vmul.f32 %v2401, %v1369
      %v2407 = vmul.f32 %v2389, %v1370
      %v2408 = vmul.f32 %v2402, %v1369
      %v2409 = vmul.f32 %v2390, %v1370
      %v2410 = vmul.f32 %v2403, %v1369
      %v2411 = vmul.f32 %v2391, %v1370
      %v2412 = vpack.c.bf16 %v2406, %v2404
      %v2413 = vpack.c.bf16 %v2407, %v2405
      %v2414 = vpack.c.bf16 %v2410, %v2408
      %v2415 = vpack.c.bf16 %v2411, %v2409
      %2416 = vrot.lane.b32.xlu0 %v2353, 16
      %v2417 = vpop.permute.xlu0 %2416
      %2418 = vrot.lane.b32.xlu0 %v2355, 16
      %v2419 = vpop.permute.xlu0 %2418
      %2420 = vrot.lane.b32.xlu0 %v2357, 16
      %v2421 = vpop.permute.xlu0 %2420
      %2422 = vrot.lane.b32.xlu0 %v2359, 16
      %v2423 = vpop.permute.xlu0 %2422
      %2428 = vrot.lane.b32.xlu0 %v2352, 16
      %v2429 = vpop.permute.xlu0 %2428
      %2430 = vrot.lane.b32.xlu0 %v2354, 16
      %v2431 = vpop.permute.xlu0 %2430
      %2432 = vrot.lane.b32.xlu0 %v2356, 16
      %v2433 = vpop.permute.xlu0 %2432
      %2434 = vrot.lane.b32.xlu0 %v2358, 16
      %v2435 = vpop.permute.xlu0 %2434
      %v2436 = vsel %vm1405, %v2429, %v2417
      %v2437 = vsel %vm1405, %v2431, %v2419
      %v2438 = vsel %vm1405, %v2433, %v2421
      %v2439 = vsel %vm1405, %v2435, %v2423
      %v2448 = vsel %vm1405, %v2417, %v2429
      %v2449 = vsel %vm1405, %v2419, %v2431
      %v2450 = vsel %vm1405, %v2421, %v2433
      %v2451 = vsel %vm1405, %v2423, %v2435
      %v2452 = vmul.f32 %v2448, %v1425
      %v2453 = vmul.f32 %v2436, %v1426
      %v2454 = vmul.f32 %v2449, %v1425
      %v2455 = vmul.f32 %v2437, %v1426
      %v2456 = vmul.f32 %v2450, %v1425
      %v2457 = vmul.f32 %v2438, %v1426
      %v2458 = vmul.f32 %v2451, %v1425
      %v2459 = vmul.f32 %v2439, %v1426
      %v2460 = vpack.c.bf16 %v2454, %v2452
      %v2461 = vpack.c.bf16 %v2455, %v2453
      %v2462 = vpack.c.bf16 %v2458, %v2456
      %v2463 = vpack.c.bf16 %v2459, %v2457
      %v2468 = vunpack.c.l.b16 %v1282
      %v2469 = vunpack.c.l.b16 %v1283
      %v2470 = vunpack.c.l.b16 %v1284
      %v2471 = vunpack.c.l.b16 %v1285
      %v2472 = vpack.c.b16 %v2469, %v2468
      %v2473 = vpack.c.b16 %v2471, %v2470
      %v2475 = vsel %vm1451, %v2472, 0
      %v2478 = vsel %vm1451, %v2473, 0
      %2480 = vmatpush.bf16.msra.mxu0 0
      %2481 = vmatpush.bf16.msra.mxu0 0
      %2482 = vmatpush.bf16.msra.mxu0 0
      %2483 = vmatpush.bf16.msra.mxu0 0
      %2484 = vmatpush.bf16.msra.mxu0 0
      %2485 = vmatpush.bf16.msra.mxu0 0
      %2486 = vmatpush.bf16.msra.mxu0 %v2462
      %2487 = vmatpush.bf16.msra.mxu0 %v2460
      %2488 = vmatmul.bf16.gmra.mxu0 %v2475
      %v2489 = vpop.f32.mrf.mxu0
      %v2490 = vadd.f32 0.0, %v2489
      %v2491 = vpop.f32.mrf.mxu0
      %v2492 = vadd.f32 0.0, %v2491
      %2493 = vmatmul.bf16.gmra.mxu0 %v2478
      %v2494 = vpop.f32.mrf.mxu0
      %v2495 = vadd.f32 0.0, %v2494
      %v2496 = vpop.f32.mrf.mxu0
      %v2497 = vadd.f32 0.0, %v2496
      %2498 = vdwg.mxu0
      %2499 = vmatpush.bf16.msra.mxu0 0
      %2500 = vmatpush.bf16.msra.mxu0 0
      %2501 = vmatpush.bf16.msra.mxu0 0
      %2502 = vmatpush.bf16.msra.mxu0 0
      %2503 = vmatpush.bf16.msra.mxu0 0
      %2504 = vmatpush.bf16.msra.mxu0 0
      %2505 = vmatpush.bf16.msra.mxu0 %v2463
      %2506 = vmatpush.bf16.msra.mxu0 %v2461
      %2507 = vmatmul.bf16.gmra.mxu0 %v2475
      %v2508 = vpop.f32.mrf.mxu0
      %v2509 = vadd.f32 0.0, %v2508
      %v2510 = vpop.f32.mrf.mxu0
      %v2511 = vadd.f32 0.0, %v2510
      %2512 = vmatmul.bf16.gmra.mxu0 %v2478
      %v2513 = vpop.f32.mrf.mxu0
      %v2514 = vadd.f32 0.0, %v2513
      %v2515 = vpop.f32.mrf.mxu0
      %v2516 = vadd.f32 0.0, %v2515
      %2517 = vdwg.mxu0
      %v2522 = vunpack.c.l.b16 %v1278
      %v2523 = vunpack.c.l.b16 %v1279
      %v2524 = vunpack.c.l.b16 %v1280
      %v2525 = vunpack.c.l.b16 %v1281
      %v2526 = vpack.c.b16 %v2523, %v2522
      %v2527 = vpack.c.b16 %v2525, %v2524
      %v2529 = vsel %vm1451, %v2526, 0
      %v2532 = vsel %vm1451, %v2527, 0
      %2534 = vmatpush.bf16.msra.mxu0 0
      %2535 = vmatpush.bf16.msra.mxu0 0
      %2536 = vmatpush.bf16.msra.mxu0 0
      %2537 = vmatpush.bf16.msra.mxu0 0
      %2538 = vmatpush.bf16.msra.mxu0 0
      %2539 = vmatpush.bf16.msra.mxu0 0
      %2540 = vmatpush.bf16.msra.mxu0 %v2414
      %2541 = vmatpush.bf16.msra.mxu0 %v2412
      %2542 = vmatmul.bf16.gmra.mxu0 %v2529
      %v2543 = vpop.f32.mrf.mxu0
      %v2544 = vadd.f32 %v2490, %v2543
      %v2545 = vpop.f32.mrf.mxu0
      %v2546 = vadd.f32 %v2492, %v2545
      %2547 = vmatmul.bf16.gmra.mxu0 %v2532
      %v2548 = vpop.f32.mrf.mxu0
      %v2549 = vadd.f32 %v2495, %v2548
      %v2550 = vpop.f32.mrf.mxu0
      %v2551 = vadd.f32 %v2497, %v2550
      %2552 = vdwg.mxu0
      %2553 = vmatpush.bf16.msra.mxu0 0
      %2554 = vmatpush.bf16.msra.mxu0 0
      %2555 = vmatpush.bf16.msra.mxu0 0
      %2556 = vmatpush.bf16.msra.mxu0 0
      %2557 = vmatpush.bf16.msra.mxu0 0
      %2558 = vmatpush.bf16.msra.mxu0 0
      %2559 = vmatpush.bf16.msra.mxu0 %v2415
      %2560 = vmatpush.bf16.msra.mxu0 %v2413
      %2561 = vmatmul.bf16.gmra.mxu0 %v2529
      %v2562 = vpop.f32.mrf.mxu0
      %v2563 = vadd.f32 %v2509, %v2562
      %v2564 = vpop.f32.mrf.mxu0
      %v2565 = vadd.f32 %v2511, %v2564
      %2566 = vmatmul.bf16.gmra.mxu0 %v2532
      %v2567 = vpop.f32.mrf.mxu0
      %v2568 = vadd.f32 %v2514, %v2567
      %v2569 = vpop.f32.mrf.mxu0
      %v2570 = vadd.f32 %v2516, %v2569
      %2571 = vdwg.mxu0
      %2572 = vrot.lane.b32.xlu0 %v2353, 15
      %v2573 = vpop.permute.xlu0 %2572
      %2574 = vrot.lane.b32.xlu0 %v2355, 15
      %v2575 = vpop.permute.xlu0 %2574
      %2576 = vrot.lane.b32.xlu0 %v2357, 15
      %v2577 = vpop.permute.xlu0 %2576
      %2578 = vrot.lane.b32.xlu0 %v2359, 15
      %v2579 = vpop.permute.xlu0 %2578
      %2584 = vrot.lane.b32.xlu0 %v2352, 15
      %v2585 = vpop.permute.xlu0 %2584
      %2586 = vrot.lane.b32.xlu0 %v2354, 15
      %v2587 = vpop.permute.xlu0 %2586
      %2588 = vrot.lane.b32.xlu0 %v2356, 15
      %v2589 = vpop.permute.xlu0 %2588
      %2590 = vrot.lane.b32.xlu0 %v2358, 15
      %v2591 = vpop.permute.xlu0 %2590
      %v2592 = vsel %vm1570, %v2585, %v2573
      %v2593 = vsel %vm1570, %v2587, %v2575
      %v2594 = vsel %vm1570, %v2589, %v2577
      %v2595 = vsel %vm1570, %v2591, %v2579
      %v2604 = vsel %vm1570, %v2573, %v2585
      %v2605 = vsel %vm1570, %v2575, %v2587
      %v2606 = vsel %vm1570, %v2577, %v2589
      %v2607 = vsel %vm1570, %v2579, %v2591
      %v2608 = vmul.f32 %v2604, %v1590
      %v2609 = vmul.f32 %v2592, %v1591
      %v2610 = vmul.f32 %v2605, %v1590
      %v2611 = vmul.f32 %v2593, %v1591
      %v2612 = vmul.f32 %v2606, %v1590
      %v2613 = vmul.f32 %v2594, %v1591
      %v2614 = vmul.f32 %v2607, %v1590
      %v2615 = vmul.f32 %v2595, %v1591
      %v2616 = vpack.c.bf16 %v2610, %v2608
      %v2617 = vpack.c.bf16 %v2611, %v2609
      %v2618 = vpack.c.bf16 %v2614, %v2612
      %v2619 = vpack.c.bf16 %v2615, %v2613
      %v2624 = vunpack.c.l.b16 %v1286
      %v2625 = vunpack.c.l.b16 %v1287
      %v2626 = vunpack.c.l.b16 %v1288
      %v2627 = vunpack.c.l.b16 %v1289
      %v2628 = vpack.c.b16 %v2625, %v2624
      %v2629 = vpack.c.b16 %v2627, %v2626
      %v2631 = vsel %vm1451, %v2628, 0
      %v2634 = vsel %vm1451, %v2629, 0
      %2636 = vmatpush.bf16.msra.mxu0 0
      %2637 = vmatpush.bf16.msra.mxu0 0
      %2638 = vmatpush.bf16.msra.mxu0 0
      %2639 = vmatpush.bf16.msra.mxu0 0
      %2640 = vmatpush.bf16.msra.mxu0 0
      %2641 = vmatpush.bf16.msra.mxu0 0
      %2642 = vmatpush.bf16.msra.mxu0 %v2618
      %2643 = vmatpush.bf16.msra.mxu0 %v2616
      %2644 = vmatmul.bf16.gmra.mxu0 %v2631
      %v2645 = vpop.f32.mrf.mxu0
      %v2646 = vadd.f32 0.0, %v2645
      %v2647 = vpop.f32.mrf.mxu0
      %v2648 = vadd.f32 0.0, %v2647
      %2649 = vmatmul.bf16.gmra.mxu0 %v2634
      %v2650 = vpop.f32.mrf.mxu0
      %v2651 = vadd.f32 0.0, %v2650
      %v2652 = vpop.f32.mrf.mxu0
      %v2653 = vadd.f32 0.0, %v2652
      %2654 = vdwg.mxu0
      %2655 = vmatpush.bf16.msra.mxu0 0
      %2656 = vmatpush.bf16.msra.mxu0 0
      %2657 = vmatpush.bf16.msra.mxu0 0
      %2658 = vmatpush.bf16.msra.mxu0 0
      %2659 = vmatpush.bf16.msra.mxu0 0
      %2660 = vmatpush.bf16.msra.mxu0 0
      %2661 = vmatpush.bf16.msra.mxu0 %v2619
      %2662 = vmatpush.bf16.msra.mxu0 %v2617
      %2663 = vmatmul.bf16.gmra.mxu0 %v2631
      %v2664 = vpop.f32.mrf.mxu0
      %v2665 = vadd.f32 0.0, %v2664
      %v2666 = vpop.f32.mrf.mxu0
      %v2667 = vadd.f32 0.0, %v2666
      %2668 = vmatmul.bf16.gmra.mxu0 %v2634
      %v2669 = vpop.f32.mrf.mxu0
      %v2670 = vadd.f32 0.0, %v2669
      %v2671 = vpop.f32.mrf.mxu0
      %v2672 = vadd.f32 0.0, %v2671
      %2673 = vdwg.mxu0
      %v2674 = vadd.f32 %v2544, %v2646
      %v2675 = vadd.f32 %v2563, %v2665
      %v2676 = vadd.f32 %v2546, %v2648
      %v2677 = vadd.f32 %v2565, %v2667
      %v2678 = vadd.f32 %v2549, %v2651
      %v2679 = vadd.f32 %v2568, %v2670
      %v2680 = vadd.f32 %v2551, %v2653
      %v2681 = vadd.f32 %v2570, %v2672
      %2682 = vrot.lane.b32.xlu0 %v2353, 1
      %v2683 = vpop.permute.xlu0 %2682
      %2684 = vrot.lane.b32.xlu0 %v2355, 1
      %v2685 = vpop.permute.xlu0 %2684
      %2686 = vrot.lane.b32.xlu0 %v2357, 1
      %v2687 = vpop.permute.xlu0 %2686
      %2688 = vrot.lane.b32.xlu0 %v2359, 1
      %v2689 = vpop.permute.xlu0 %2688
      %2694 = vrot.lane.b32.xlu0 %v2352, 1
      %v2695 = vpop.permute.xlu0 %2694
      %2696 = vrot.lane.b32.xlu0 %v2354, 1
      %v2697 = vpop.permute.xlu0 %2696
      %2698 = vrot.lane.b32.xlu0 %v2356, 1
      %v2699 = vpop.permute.xlu0 %2698
      %2700 = vrot.lane.b32.xlu0 %v2358, 1
      %v2701 = vpop.permute.xlu0 %2700
      %v2702 = vsel %vm1688, %v2695, %v2683
      %v2703 = vsel %vm1688, %v2697, %v2685
      %v2704 = vsel %vm1688, %v2699, %v2687
      %v2705 = vsel %vm1688, %v2701, %v2689
      %v2714 = vsel %vm1688, %v2683, %v2695
      %v2715 = vsel %vm1688, %v2685, %v2697
      %v2716 = vsel %vm1688, %v2687, %v2699
      %v2717 = vsel %vm1688, %v2689, %v2701
      %v2718 = vmul.f32 %v2714, %v1708
      %v2719 = vmul.f32 %v2702, %v1709
      %v2720 = vmul.f32 %v2715, %v1708
      %v2721 = vmul.f32 %v2703, %v1709
      %v2722 = vmul.f32 %v2716, %v1708
      %v2723 = vmul.f32 %v2704, %v1709
      %v2724 = vmul.f32 %v2717, %v1708
      %v2725 = vmul.f32 %v2705, %v1709
      %v2726 = vpack.c.bf16 %v2720, %v2718
      %v2727 = vpack.c.bf16 %v2721, %v2719
      %v2728 = vpack.c.bf16 %v2724, %v2722
      %v2729 = vpack.c.bf16 %v2725, %v2723
      %v2734 = vunpack.c.l.b16 %v1290
      %v2735 = vunpack.c.l.b16 %v1291
      %v2736 = vunpack.c.l.b16 %v1292
      %v2737 = vunpack.c.l.b16 %v1293
      %v2738 = vpack.c.b16 %v2735, %v2734
      %v2739 = vpack.c.b16 %v2737, %v2736
      %v2741 = vsel %vm1451, %v2738, 0
      %v2744 = vsel %vm1451, %v2739, 0
      %2746 = vmatpush.bf16.msra.mxu0 0
      %2747 = vmatpush.bf16.msra.mxu0 0
      %2748 = vmatpush.bf16.msra.mxu0 0
      %2749 = vmatpush.bf16.msra.mxu0 0
      %2750 = vmatpush.bf16.msra.mxu0 0
      %2751 = vmatpush.bf16.msra.mxu0 0
      %2752 = vmatpush.bf16.msra.mxu0 %v2728
      %2753 = vmatpush.bf16.msra.mxu0 %v2726
      %2754 = vmatmul.bf16.gmra.mxu0 %v2741
      %v2755 = vpop.f32.mrf.mxu0
      %v2756 = vadd.f32 0.0, %v2755
      %v2757 = vpop.f32.mrf.mxu0
      %v2758 = vadd.f32 0.0, %v2757
      %2759 = vmatmul.bf16.gmra.mxu0 %v2744
      %v2760 = vpop.f32.mrf.mxu0
      %v2761 = vadd.f32 0.0, %v2760
      %v2762 = vpop.f32.mrf.mxu0
      %v2763 = vadd.f32 0.0, %v2762
      %2764 = vdwg.mxu0
      %2765 = vmatpush.bf16.msra.mxu0 0
      %2766 = vmatpush.bf16.msra.mxu0 0
      %2767 = vmatpush.bf16.msra.mxu0 0
      %2768 = vmatpush.bf16.msra.mxu0 0
      %2769 = vmatpush.bf16.msra.mxu0 0
      %2770 = vmatpush.bf16.msra.mxu0 0
      %2771 = vmatpush.bf16.msra.mxu0 %v2729
      %2772 = vmatpush.bf16.msra.mxu0 %v2727
      %2773 = vmatmul.bf16.gmra.mxu0 %v2741
      %v2774 = vpop.f32.mrf.mxu0
      %v2775 = vadd.f32 0.0, %v2774
      %v2776 = vpop.f32.mrf.mxu0
      %v2777 = vadd.f32 0.0, %v2776
      %2778 = vmatmul.bf16.gmra.mxu0 %v2744
      %v2779 = vpop.f32.mrf.mxu0
      %v2780 = vadd.f32 0.0, %v2779
      %v2781 = vpop.f32.mrf.mxu0
      %v2782 = vadd.f32 0.0, %v2781
      %2783 = vdwg.mxu0
      %v2784 = vadd.f32 %v2674, %v2756
      %v2785 = vadd.f32 %v2675, %v2775
      %v2786 = vadd.f32 %v2676, %v2758
      %v2787 = vadd.f32 %v2677, %v2777
      %v2788 = vadd.f32 %v2678, %v2761
      %v2789 = vadd.f32 %v2679, %v2780
      %v2790 = vadd.f32 %v2680, %v2763
      %v2791 = vadd.f32 %v2681, %v2782
      %v2792 = vpack.c.bf16 %v2354, %v2352
      %v2793 = vpack.c.bf16 %v2355, %v2353
      %v2794 = vpack.c.bf16 %v2358, %v2356
      %v2795 = vpack.c.bf16 %v2359, %v2357
      %v2800 = vunpack.c.l.b16 %v1294
      %v2801 = vunpack.c.l.b16 %v1295
      %v2802 = vunpack.c.l.b16 %v1296
      %v2803 = vunpack.c.l.b16 %v1297
      %v2804 = vpack.c.b16 %v2801, %v2800
      %v2805 = vpack.c.b16 %v2803, %v2802
      %v2807 = vsel %vm1451, %v2804, 0
      %v2810 = vsel %vm1451, %v2805, 0
      %2812 = vmatpush.bf16.msra.mxu0 0
      %2813 = vmatpush.bf16.msra.mxu0 0
      %2814 = vmatpush.bf16.msra.mxu0 0
      %2815 = vmatpush.bf16.msra.mxu0 0
      %2816 = vmatpush.bf16.msra.mxu0 0
      %2817 = vmatpush.bf16.msra.mxu0 0
      %2818 = vmatpush.bf16.msra.mxu0 %v2794
      %2819 = vmatpush.bf16.msra.mxu0 %v2792
      %2820 = vmatmul.bf16.gmra.mxu0 %v2807
      %v2821 = vpop.f32.mrf.mxu0
      %v2822 = vadd.f32 0.0, %v2821
      %v2823 = vpop.f32.mrf.mxu0
      %v2824 = vadd.f32 0.0, %v2823
      %2825 = vmatmul.bf16.gmra.mxu0 %v2810
      %v2826 = vpop.f32.mrf.mxu0
      %v2827 = vadd.f32 0.0, %v2826
      %v2828 = vpop.f32.mrf.mxu0
      %v2829 = vadd.f32 0.0, %v2828
      %2830 = vdwg.mxu0
      %2831 = vmatpush.bf16.msra.mxu0 0
      %2832 = vmatpush.bf16.msra.mxu0 0
      %2833 = vmatpush.bf16.msra.mxu0 0
      %2834 = vmatpush.bf16.msra.mxu0 0
      %2835 = vmatpush.bf16.msra.mxu0 0
      %2836 = vmatpush.bf16.msra.mxu0 0
      %2837 = vmatpush.bf16.msra.mxu0 %v2795
      %2838 = vmatpush.bf16.msra.mxu0 %v2793
      %2839 = vmatmul.bf16.gmra.mxu0 %v2807
      %v2840 = vpop.f32.mrf.mxu0
      %v2841 = vadd.f32 0.0, %v2840
      %v2842 = vpop.f32.mrf.mxu0
      %v2843 = vadd.f32 0.0, %v2842
      %2844 = vmatmul.bf16.gmra.mxu0 %v2810
      %v2845 = vpop.f32.mrf.mxu0
      %v2846 = vadd.f32 0.0, %v2845
      %v2847 = vpop.f32.mrf.mxu0
      %v2848 = vadd.f32 0.0, %v2847
      %2849 = vdwg.mxu0
      %v2850 = vadd.f32 %v2784, %v2822
      %v2851 = vadd.f32 %v2785, %v2841
      %v2852 = vadd.f32 %v2786, %v2824
      %v2853 = vadd.f32 %v2787, %v2843
      %v2854 = vadd.f32 %v2788, %v2827
      %v2855 = vadd.f32 %v2789, %v2846
      %v2856 = vadd.f32 %v2790, %v2829
      %v2857 = vadd.f32 %v2791, %v2848
      %2858 = vrot.lane.b32.xlu0 %v2352, 127
      %v2859 = vpop.permute.xlu0 %2858
      %2860 = vrot.lane.b32.xlu0 %v2353, 127
      %v2861 = vpop.permute.xlu0 %2860
      %2862 = vrot.lane.b32.xlu0 %v2354, 127
      %v2863 = vpop.permute.xlu0 %2862
      %2864 = vrot.lane.b32.xlu0 %v2355, 127
      %v2865 = vpop.permute.xlu0 %2864
      %2866 = vrot.lane.b32.xlu0 %v2356, 127
      %v2867 = vpop.permute.xlu0 %2866
      %2868 = vrot.lane.b32.xlu0 %v2357, 127
      %v2869 = vpop.permute.xlu0 %2868
      %2870 = vrot.lane.b32.xlu0 %v2358, 127
      %v2871 = vpop.permute.xlu0 %2870
      %2872 = vrot.lane.b32.xlu0 %v2359, 127
      %v2873 = vpop.permute.xlu0 %2872
      %v2874 = vsel %vm1868, %v2859, %v2861
      %v2875 = vsel %vm1868, %v2863, %v2865
      %v2876 = vsel %vm1868, %v2867, %v2869
      %v2877 = vsel %vm1868, %v2871, %v2873
      %v2890 = vsel %vm1868, %v2861, %v2859
      %v2891 = vsel %vm1868, %v2865, %v2863
      %v2892 = vsel %vm1868, %v2869, %v2867
      %v2893 = vsel %vm1868, %v2873, %v2871
      %v2894 = vmul.f32 %v2874, %v1892
      %v2895 = vmul.f32 %v2890, %v1893
      %v2896 = vmul.f32 %v2875, %v1892
      %v2897 = vmul.f32 %v2891, %v1893
      %v2898 = vmul.f32 %v2876, %v1892
      %v2899 = vmul.f32 %v2892, %v1893
      %v2900 = vmul.f32 %v2877, %v1892
      %v2901 = vmul.f32 %v2893, %v1893
      %v2902 = vpack.c.bf16 %v2896, %v2894
      %v2903 = vpack.c.bf16 %v2897, %v2895
      %v2904 = vpack.c.bf16 %v2900, %v2898
      %v2905 = vpack.c.bf16 %v2901, %v2899
      %v2910 = vunpack.c.l.b16 %v1298
      %v2911 = vunpack.c.l.b16 %v1299
      %v2912 = vunpack.c.l.b16 %v1300
      %v2913 = vunpack.c.l.b16 %v1301
      %v2914 = vpack.c.b16 %v2911, %v2910
      %v2915 = vpack.c.b16 %v2913, %v2912
      %v2917 = vsel %vm1451, %v2914, 0
      %v2920 = vsel %vm1451, %v2915, 0
      %2922 = vmatpush.bf16.msra.mxu0 0
      %2923 = vmatpush.bf16.msra.mxu0 0
      %2924 = vmatpush.bf16.msra.mxu0 0
      %2925 = vmatpush.bf16.msra.mxu0 0
      %2926 = vmatpush.bf16.msra.mxu0 0
      %2927 = vmatpush.bf16.msra.mxu0 0
      %2928 = vmatpush.bf16.msra.mxu0 %v2904
      %2929 = vmatpush.bf16.msra.mxu0 %v2902
      %2930 = vmatmul.bf16.gmra.mxu0 %v2917
      %v2931 = vpop.f32.mrf.mxu0
      %v2932 = vadd.f32 0.0, %v2931
      %v2933 = vpop.f32.mrf.mxu0
      %v2934 = vadd.f32 0.0, %v2933
      %2935 = vmatmul.bf16.gmra.mxu0 %v2920
      %v2936 = vpop.f32.mrf.mxu0
      %v2937 = vadd.f32 0.0, %v2936
      %v2938 = vpop.f32.mrf.mxu0
      %v2939 = vadd.f32 0.0, %v2938
      %2940 = vdwg.mxu0
      %2941 = vmatpush.bf16.msra.mxu0 0
      %2942 = vmatpush.bf16.msra.mxu0 0
      %2943 = vmatpush.bf16.msra.mxu0 0
      %2944 = vmatpush.bf16.msra.mxu0 0
      %2945 = vmatpush.bf16.msra.mxu0 0
      %2946 = vmatpush.bf16.msra.mxu0 0
      %2947 = vmatpush.bf16.msra.mxu0 %v2905
      %2948 = vmatpush.bf16.msra.mxu0 %v2903
      %2949 = vmatmul.bf16.gmra.mxu0 %v2917
      %v2950 = vpop.f32.mrf.mxu0
      %v2951 = vadd.f32 0.0, %v2950
      %v2952 = vpop.f32.mrf.mxu0
      %v2953 = vadd.f32 0.0, %v2952
      %2954 = vmatmul.bf16.gmra.mxu0 %v2920
      %v2955 = vpop.f32.mrf.mxu0
      %v2956 = vadd.f32 0.0, %v2955
      %v2957 = vpop.f32.mrf.mxu0
      %v2958 = vadd.f32 0.0, %v2957
      %2959 = vdwg.mxu0
      %v2960 = vadd.f32 %v2850, %v2932
      %v2961 = vadd.f32 %v2851, %v2951
      %v2962 = vadd.f32 %v2852, %v2934
      %v2963 = vadd.f32 %v2853, %v2953
      %v2964 = vadd.f32 %v2854, %v2937
      %v2965 = vadd.f32 %v2855, %v2956
      %v2966 = vadd.f32 %v2856, %v2939
      %v2967 = vadd.f32 %v2857, %v2958
      %2968 = vrot.lane.b32.xlu0 %v2352, 113
      %v2969 = vpop.permute.xlu0 %2968
      %2970 = vrot.lane.b32.xlu0 %v2353, 113
      %v2971 = vpop.permute.xlu0 %2970
      %2972 = vrot.lane.b32.xlu0 %v2354, 113
      %v2973 = vpop.permute.xlu0 %2972
      %2974 = vrot.lane.b32.xlu0 %v2355, 113
      %v2975 = vpop.permute.xlu0 %2974
      %2976 = vrot.lane.b32.xlu0 %v2356, 113
      %v2977 = vpop.permute.xlu0 %2976
      %2978 = vrot.lane.b32.xlu0 %v2357, 113
      %v2979 = vpop.permute.xlu0 %2978
      %2980 = vrot.lane.b32.xlu0 %v2358, 113
      %v2981 = vpop.permute.xlu0 %2980
      %2982 = vrot.lane.b32.xlu0 %v2359, 113
      %v2983 = vpop.permute.xlu0 %2982
      %v2984 = vsel %vm1986, %v2969, %v2971
      %v2985 = vsel %vm1986, %v2973, %v2975
      %v2986 = vsel %vm1986, %v2977, %v2979
      %v2987 = vsel %vm1986, %v2981, %v2983
      %v3000 = vsel %vm1986, %v2971, %v2969
      %v3001 = vsel %vm1986, %v2975, %v2973
      %v3002 = vsel %vm1986, %v2979, %v2977
      %v3003 = vsel %vm1986, %v2983, %v2981
      %v3004 = vmul.f32 %v2984, %v2010
      %v3005 = vmul.f32 %v3000, %v2011
      %v3006 = vmul.f32 %v2985, %v2010
      %v3007 = vmul.f32 %v3001, %v2011
      %v3008 = vmul.f32 %v2986, %v2010
      %v3009 = vmul.f32 %v3002, %v2011
      %v3010 = vmul.f32 %v2987, %v2010
      %v3011 = vmul.f32 %v3003, %v2011
      %v3012 = vpack.c.bf16 %v3006, %v3004
      %v3013 = vpack.c.bf16 %v3007, %v3005
      %v3014 = vpack.c.bf16 %v3010, %v3008
      %v3015 = vpack.c.bf16 %v3011, %v3009
      %v3020 = vunpack.c.l.b16 %v1302
      %v3021 = vunpack.c.l.b16 %v1303
      %v3022 = vunpack.c.l.b16 %v1304
      %v3023 = vunpack.c.l.b16 %v1305
      %v3024 = vpack.c.b16 %v3021, %v3020
      %v3025 = vpack.c.b16 %v3023, %v3022
      %v3027 = vsel %vm1451, %v3024, 0
      %v3030 = vsel %vm1451, %v3025, 0
      %3032 = vmatpush.bf16.msra.mxu0 0
      %3033 = vmatpush.bf16.msra.mxu0 0
      %3034 = vmatpush.bf16.msra.mxu0 0
      %3035 = vmatpush.bf16.msra.mxu0 0
      %3036 = vmatpush.bf16.msra.mxu0 0
      %3037 = vmatpush.bf16.msra.mxu0 0
      %3038 = vmatpush.bf16.msra.mxu0 %v3014
      %3039 = vmatpush.bf16.msra.mxu0 %v3012
      %3040 = vmatmul.bf16.gmra.mxu0 %v3027
      %v3041 = vpop.f32.mrf.mxu0
      %v3042 = vadd.f32 0.0, %v3041
      %v3043 = vpop.f32.mrf.mxu0
      %v3044 = vadd.f32 0.0, %v3043
      %3045 = vmatmul.bf16.gmra.mxu0 %v3030
      %v3046 = vpop.f32.mrf.mxu0
      %v3047 = vadd.f32 0.0, %v3046
      %v3048 = vpop.f32.mrf.mxu0
      %v3049 = vadd.f32 0.0, %v3048
      %3050 = vdwg.mxu0
      %3051 = vmatpush.bf16.msra.mxu0 0
      %3052 = vmatpush.bf16.msra.mxu0 0
      %3053 = vmatpush.bf16.msra.mxu0 0
      %3054 = vmatpush.bf16.msra.mxu0 0
      %3055 = vmatpush.bf16.msra.mxu0 0
      %3056 = vmatpush.bf16.msra.mxu0 0
      %3057 = vmatpush.bf16.msra.mxu0 %v3015
      %3058 = vmatpush.bf16.msra.mxu0 %v3013
      %3059 = vmatmul.bf16.gmra.mxu0 %v3027
      %v3060 = vpop.f32.mrf.mxu0
      %v3061 = vadd.f32 0.0, %v3060
      %v3062 = vpop.f32.mrf.mxu0
      %v3063 = vadd.f32 0.0, %v3062
      %3064 = vmatmul.bf16.gmra.mxu0 %v3030
      %v3065 = vpop.f32.mrf.mxu0
      %v3066 = vadd.f32 0.0, %v3065
      %v3067 = vpop.f32.mrf.mxu0
      %v3068 = vadd.f32 0.0, %v3067
      %3069 = vdwg.mxu0
      %v3070 = vadd.f32 %v2960, %v3042
      %v3071 = vadd.f32 %v2961, %v3061
      %v3072 = vadd.f32 %v2962, %v3044
      %v3073 = vadd.f32 %v2963, %v3063
      %v3074 = vadd.f32 %v2964, %v3047
      %v3075 = vadd.f32 %v2965, %v3066
      %v3076 = vadd.f32 %v2966, %v3049
      %v3077 = vadd.f32 %v2967, %v3068
      %3078 = vrot.lane.b32.xlu0 %v2352, 112
      %v3079 = vpop.permute.xlu0 %3078
      %3080 = vrot.lane.b32.xlu0 %v2353, 112
      %v3081 = vpop.permute.xlu0 %3080
      %3082 = vrot.lane.b32.xlu0 %v2354, 112
      %v3083 = vpop.permute.xlu0 %3082
      %3084 = vrot.lane.b32.xlu0 %v2355, 112
      %v3085 = vpop.permute.xlu0 %3084
      %3086 = vrot.lane.b32.xlu0 %v2356, 112
      %v3087 = vpop.permute.xlu0 %3086
      %3088 = vrot.lane.b32.xlu0 %v2357, 112
      %v3089 = vpop.permute.xlu0 %3088
      %3090 = vrot.lane.b32.xlu0 %v2358, 112
      %v3091 = vpop.permute.xlu0 %3090
      %3092 = vrot.lane.b32.xlu0 %v2359, 112
      %v3093 = vpop.permute.xlu0 %3092
      %v3094 = vsel %vm2104, %v3079, %v3081
      %v3095 = vsel %vm2104, %v3083, %v3085
      %v3096 = vsel %vm2104, %v3087, %v3089
      %v3097 = vsel %vm2104, %v3091, %v3093
      %v3110 = vsel %vm2104, %v3081, %v3079
      %v3111 = vsel %vm2104, %v3085, %v3083
      %v3112 = vsel %vm2104, %v3089, %v3087
      %v3113 = vsel %vm2104, %v3093, %v3091
      %v3114 = vmul.f32 %v3094, %v2128
      %v3115 = vmul.f32 %v3110, %v2129
      %v3116 = vmul.f32 %v3095, %v2128
      %v3117 = vmul.f32 %v3111, %v2129
      %v3118 = vmul.f32 %v3096, %v2128
      %v3119 = vmul.f32 %v3112, %v2129
      %v3120 = vmul.f32 %v3097, %v2128
      %v3121 = vmul.f32 %v3113, %v2129
      %v3122 = vpack.c.bf16 %v3116, %v3114
      %v3123 = vpack.c.bf16 %v3117, %v3115
      %v3124 = vpack.c.bf16 %v3120, %v3118
      %v3125 = vpack.c.bf16 %v3121, %v3119
      %v3130 = vunpack.c.l.b16 %v1306
      %v3131 = vunpack.c.l.b16 %v1307
      %v3132 = vunpack.c.l.b16 %v1308
      %v3133 = vunpack.c.l.b16 %v1309
      %v3134 = vpack.c.b16 %v3131, %v3130
      %v3135 = vpack.c.b16 %v3133, %v3132
      %v3137 = vsel %vm1451, %v3134, 0
      %v3140 = vsel %vm1451, %v3135, 0
      %3142 = vmatpush.bf16.msra.mxu0 0
      %3143 = vmatpush.bf16.msra.mxu0 0
      %3144 = vmatpush.bf16.msra.mxu0 0
      %3145 = vmatpush.bf16.msra.mxu0 0
      %3146 = vmatpush.bf16.msra.mxu0 0
      %3147 = vmatpush.bf16.msra.mxu0 0
      %3148 = vmatpush.bf16.msra.mxu0 %v3124
      %3149 = vmatpush.bf16.msra.mxu0 %v3122
      %3150 = vmatmul.bf16.gmra.mxu0 %v3137
      %v3151 = vpop.f32.mrf.mxu0
      %v3152 = vadd.f32 0.0, %v3151
      %v3153 = vpop.f32.mrf.mxu0
      %v3154 = vadd.f32 0.0, %v3153
      %3155 = vmatmul.bf16.gmra.mxu0 %v3140
      %v3156 = vpop.f32.mrf.mxu0
      %v3157 = vadd.f32 0.0, %v3156
      %v3158 = vpop.f32.mrf.mxu0
      %v3159 = vadd.f32 0.0, %v3158
      %3160 = vdwg.mxu0
      %3161 = vmatpush.bf16.msra.mxu0 0
      %3162 = vmatpush.bf16.msra.mxu0 0
      %3163 = vmatpush.bf16.msra.mxu0 0
      %3164 = vmatpush.bf16.msra.mxu0 0
      %3165 = vmatpush.bf16.msra.mxu0 0
      %3166 = vmatpush.bf16.msra.mxu0 0
      %3167 = vmatpush.bf16.msra.mxu0 %v3125
      %3168 = vmatpush.bf16.msra.mxu0 %v3123
      %3169 = vmatmul.bf16.gmra.mxu0 %v3137
      %v3170 = vpop.f32.mrf.mxu0
      %v3171 = vadd.f32 0.0, %v3170
      %v3172 = vpop.f32.mrf.mxu0
      %v3173 = vadd.f32 0.0, %v3172
      %3174 = vmatmul.bf16.gmra.mxu0 %v3140
      %v3175 = vpop.f32.mrf.mxu0
      %v3176 = vadd.f32 0.0, %v3175
      %v3177 = vpop.f32.mrf.mxu0
      %v3178 = vadd.f32 0.0, %v3177
      %3179 = vdwg.mxu0
      %v3180 = vadd.f32 %v3070, %v3152
      %v3181 = vadd.f32 %v3071, %v3171
      %v3182 = vadd.f32 %v3072, %v3154
      %v3183 = vadd.f32 %v3073, %v3173
      %v3184 = vadd.f32 %v3074, %v3157
      %v3185 = vadd.f32 %v3075, %v3176
      %v3186 = vadd.f32 %v3076, %v3159
      %v3187 = vadd.f32 %v3077, %v3178
      %3188 = vrot.lane.b32.xlu0 %v2352, 111
      %v3189 = vpop.permute.xlu0 %3188
      %3190 = vrot.lane.b32.xlu0 %v2353, 111
      %v3191 = vpop.permute.xlu0 %3190
      %3192 = vrot.lane.b32.xlu0 %v2354, 111
      %v3193 = vpop.permute.xlu0 %3192
      %3194 = vrot.lane.b32.xlu0 %v2355, 111
      %v3195 = vpop.permute.xlu0 %3194
      %3196 = vrot.lane.b32.xlu0 %v2356, 111
      %v3197 = vpop.permute.xlu0 %3196
      %3198 = vrot.lane.b32.xlu0 %v2357, 111
      %v3199 = vpop.permute.xlu0 %3198
      %3200 = vrot.lane.b32.xlu0 %v2358, 111
      %v3201 = vpop.permute.xlu0 %3200
      %3202 = vrot.lane.b32.xlu0 %v2359, 111
      %v3203 = vpop.permute.xlu0 %3202
      %v3204 = vsel %vm2222, %v3189, %v3191
      %v3205 = vsel %vm2222, %v3193, %v3195
      %v3206 = vsel %vm2222, %v3197, %v3199
      %v3207 = vsel %vm2222, %v3201, %v3203
      %v3220 = vsel %vm2222, %v3191, %v3189
      %v3221 = vsel %vm2222, %v3195, %v3193
      %v3222 = vsel %vm2222, %v3199, %v3197
      %v3223 = vsel %vm2222, %v3203, %v3201
      %v3224 = vmul.f32 %v3204, %v2246
      %v3225 = vmul.f32 %v3220, %v2247
      %v3226 = vmul.f32 %v3205, %v2246
      %v3227 = vmul.f32 %v3221, %v2247
      %v3228 = vmul.f32 %v3206, %v2246
      %v3229 = vmul.f32 %v3222, %v2247
      %v3230 = vmul.f32 %v3207, %v2246
      %v3231 = vmul.f32 %v3223, %v2247
      %v3232 = vpack.c.bf16 %v3226, %v3224
      %v3233 = vpack.c.bf16 %v3227, %v3225
      %v3234 = vpack.c.bf16 %v3230, %v3228
      %v3235 = vpack.c.bf16 %v3231, %v3229
      %v3240 = vunpack.c.l.b16 %v1310
      %v3241 = vunpack.c.l.b16 %v1311
      %v3242 = vunpack.c.l.b16 %v1312
      %v3243 = vunpack.c.l.b16 %v1313
      %v3244 = vpack.c.b16 %v3241, %v3240
      %v3245 = vpack.c.b16 %v3243, %v3242
      %v3247 = vsel %vm1451, %v3244, 0
      %v3250 = vsel %vm1451, %v3245, 0
      %3252 = vmatpush.bf16.msra.mxu0 0
      %3253 = vmatpush.bf16.msra.mxu0 0
      %3254 = vmatpush.bf16.msra.mxu0 0
      %3255 = vmatpush.bf16.msra.mxu0 0
      %3256 = vmatpush.bf16.msra.mxu0 0
      %3257 = vmatpush.bf16.msra.mxu0 0
      %3258 = vmatpush.bf16.msra.mxu0 %v3234
      %3259 = vmatpush.bf16.msra.mxu0 %v3232
      %3260 = vmatmul.bf16.gmra.mxu0 %v3247
      %v3261 = vpop.f32.mrf.mxu0
      %v3262 = vadd.f32 0.0, %v3261
      %v3263 = vpop.f32.mrf.mxu0
      %v3264 = vadd.f32 0.0, %v3263
      %3265 = vmatmul.bf16.gmra.mxu0 %v3250
      %v3266 = vpop.f32.mrf.mxu0
      %v3267 = vadd.f32 0.0, %v3266
      %v3268 = vpop.f32.mrf.mxu0
      %v3269 = vadd.f32 0.0, %v3268
      %3270 = vdwg.mxu0
      %3271 = vmatpush.bf16.msra.mxu0 0
      %3272 = vmatpush.bf16.msra.mxu0 0
      %3273 = vmatpush.bf16.msra.mxu0 0
      %3274 = vmatpush.bf16.msra.mxu0 0
      %3275 = vmatpush.bf16.msra.mxu0 0
      %3276 = vmatpush.bf16.msra.mxu0 0
      %3277 = vmatpush.bf16.msra.mxu0 %v3235
      %3278 = vmatpush.bf16.msra.mxu0 %v3233
      %3279 = vmatmul.bf16.gmra.mxu0 %v3247
      %v3280 = vpop.f32.mrf.mxu0
      %v3281 = vadd.f32 0.0, %v3280
      %v3282 = vpop.f32.mrf.mxu0
      %v3283 = vadd.f32 0.0, %v3282
      %3284 = vmatmul.bf16.gmra.mxu0 %v3250
      %v3285 = vpop.f32.mrf.mxu0
      %v3286 = vadd.f32 0.0, %v3285
      %v3287 = vpop.f32.mrf.mxu0
      %v3288 = vadd.f32 0.0, %v3287
      %3289 = vdwg.mxu0
      %v3290 = vadd.f32 %v3180, %v3262
      %v3291 = vadd.f32 %v3181, %v3281
      %v3292 = vadd.f32 %v3182, %v3264
      %v3293 = vadd.f32 %v3183, %v3283
      %v3294 = vadd.f32 %v3184, %v3267
      %v3295 = vadd.f32 %v3185, %v3286
      %v3296 = vadd.f32 %v3186, %v3269
      %v3297 = vadd.f32 %v3187, %v3288
      %3299 = vset.pattern.permute.xlu0 0
      %3300 = vperm.xlu0 %3299, %v1318
      %v3301 = vpop.permute.xlu0 %3300
      %3304 = vset.pattern.permute.xlu0 0
      %3305 = vperm.xlu0 %3304, %v1319
      %v3306 = vpop.permute.xlu0 %3305
      %3309 = vset.pattern.permute.xlu0 0
      %3310 = vperm.xlu0 %3309, %v1320
      %v3311 = vpop.permute.xlu0 %3310
      %3314 = vset.pattern.permute.xlu0 0
      %3315 = vperm.xlu0 %3314, %v1321
      %v3316 = vpop.permute.xlu0 %3315
      %v3318 = vadd.f32 %v3290, %v3301
      %v3319 = vadd.f32 %v3291, %v3301
      %v3320 = vadd.f32 %v3292, %v3306
      %v3321 = vadd.f32 %v3293, %v3306
      %v3322 = vadd.f32 %v3294, %v3311
      %v3323 = vadd.f32 %v3295, %v3311
      %v3324 = vadd.f32 %v3296, %v3316
      %v3325 = vadd.f32 %v3297, %v3316
      %v3326 = vadd.f32 %v1234, %v3318
      %v3327 = vadd.f32 %v1235, %v3319
      %v3328 = vadd.f32 %v1236, %v3320
      %v3329 = vadd.f32 %v1237, %v3321
      %v3330 = vadd.f32 %v1238, %v3322
      %v3331 = vadd.f32 %v1239, %v3323
      %v3332 = vadd.f32 %v1240, %v3324
      %v3333 = vadd.f32 %v1241, %v3325
      %3334 = vst [vmem:[#allocation2] sm:$0xff] %v3326
      %3335 = vst [vmem:[#allocation2 + $0x8] sm:$0xff] %v3327
      %3336 = vst [vmem:[#allocation2 + $0x10] sm:$0xff] %v3328
      %3337 = vst [vmem:[#allocation2 + $0x18] sm:$0xff] %v3329
      %3338 = vst [vmem:[#allocation2 + $0x20] sm:$0xff] %v3330
      %3339 = vst [vmem:[#allocation2 + $0x28] sm:$0xff] %v3331
      %3340 = vst [vmem:[#allocation2 + $0x30] sm:$0xff] %v3332
      %3341 = vst [vmem:[#allocation2 + $0x38] sm:$0xff] %v3333
      %p3342 = scmp.eq.s32.totalorder %s26, 1
      // Predicated region
      $region57: #{resnet_shape_forward.1} parent=51 // pred_check
        %p3343 = pneg %p3342
      $region58: #{resnet_shape_forward.1} parent=51 // pred_check_branch
        %3345 = sbr.rel (%p3343) target = $region60
      $region59: #{resnet_shape_forward.1} parent=51 // pred_region
        %vm3346 = vcmp.ge.f32.partialorder %v3326, 0.0
        %vm3347 = vcmp.ge.f32.partialorder %v3327, 0.0
        %vm3348 = vcmp.ge.f32.partialorder %v3328, 0.0
        %vm3349 = vcmp.ge.f32.partialorder %v3329, 0.0
        %vm3350 = vcmp.ge.f32.partialorder %v3330, 0.0
        %vm3351 = vcmp.ge.f32.partialorder %v3331, 0.0
        %vm3352 = vcmp.ge.f32.partialorder %v3332, 0.0
        %vm3353 = vcmp.ge.f32.partialorder %v3333, 0.0
        %v3354 = vmul.f32 %v3326, 0.1
        %v3355 = vmul.f32 %v3327, 0.1
        %v3356 = vmul.f32 %v3328, 0.1
        %v3357 = vmul.f32 %v3329, 0.1
        %v3358 = vmul.f32 %v3330, 0.1
        %v3359 = vmul.f32 %v3331, 0.1
        %v3360 = vmul.f32 %v3332, 0.1
        %v3361 = vmul.f32 %v3333, 0.1
        %v3362 = vsel %vm3346, %v3326, %v3354
        %v3363 = vsel %vm3347, %v3327, %v3355
        %v3364 = vsel %vm3348, %v3328, %v3356
        %v3365 = vsel %vm3349, %v3329, %v3357
        %v3366 = vsel %vm3350, %v3330, %v3358
        %v3367 = vsel %vm3351, %v3331, %v3359
        %v3368 = vsel %vm3352, %v3332, %v3360
        %v3369 = vsel %vm3353, %v3333, %v3361
        %v3370 = vld [vmem:[%s6] sm:$0x1]
        %v3371 = vld [vmem:[%s6 + $0x1] sm:$0x1]
        %v3372 = vld [vmem:[%s6 + $0x2] sm:$0x1]
        %v3373 = vld [vmem:[%s6 + $0x3] sm:$0x1]
        %v3374 = vld [vmem:[%s6 + $0x4] sm:$0x1]
        %v3375 = vld [vmem:[%s6 + $0x5] sm:$0x1]
        %v3376 = vld [vmem:[%s6 + $0x6] sm:$0x1]
        %v3377 = vld [vmem:[%s6 + $0x7] sm:$0x1]
        %v3378 = vld [vmem:[%s6 + $0x8] sm:$0x1]
        %v3379 = vld [vmem:[#allocation3] sm:$0x1]
        %3384 = vrot.lane.b32.xlu0 %v3363, 17
        %v3385 = vpop.permute.xlu0 %3384
        %3386 = vrot.lane.b32.xlu0 %v3365, 17
        %v3387 = vpop.permute.xlu0 %3386
        %3388 = vrot.lane.b32.xlu0 %v3367, 17
        %v3389 = vpop.permute.xlu0 %3388
        %3390 = vrot.lane.b32.xlu0 %v3369, 17
        %v3391 = vpop.permute.xlu0 %3390
        %3400 = vrot.lane.b32.xlu0 %v3362, 17
        %v3401 = vpop.permute.xlu0 %3400
        %3402 = vrot.lane.b32.xlu0 %v3364, 17
        %v3403 = vpop.permute.xlu0 %3402
        %3404 = vrot.lane.b32.xlu0 %v3366, 17
        %v3405 = vpop.permute.xlu0 %3404
        %3406 = vrot.lane.b32.xlu0 %v3368, 17
        %v3407 = vpop.permute.xlu0 %3406
        %v3408 = vsel %vm1350, %v3401, %v3385
        %v3409 = vsel %vm1350, %v3403, %v3387
        %v3410 = vsel %vm1350, %v3405, %v3389
        %v3411 = vsel %vm1350, %v3407, %v3391
        %v3420 = vsel %vm1350, %v3385, %v3401
        %v3421 = vsel %vm1350, %v3387, %v3403
        %v3422 = vsel %vm1350, %v3389, %v3405
        %v3423 = vsel %vm1350, %v3391, %v3407
        %v3424 = vld [vmem:[%s1] ss:$8 sm:$0x3]
        %v3426 = vperm.slane %v3424, 0
        %v3427 = vperm.slane %v3424, 1
        %v3430 = vmul.f32 %v3420, %v3426
        %v3431 = vmul.f32 %v3408, %v3427
        %v3432 = vmul.f32 %v3421, %v3426
        %v3433 = vmul.f32 %v3409, %v3427
        %v3434 = vmul.f32 %v3422, %v3426
        %v3435 = vmul.f32 %v3410, %v3427
        %v3436 = vmul.f32 %v3423, %v3426
        %v3437 = vmul.f32 %v3411, %v3427
        %v3438 = vpack.c.bf16 %v3432, %v3430
        %v3439 = vpack.c.bf16 %v3433, %v3431
        %v3440 = vpack.c.bf16 %v3436, %v3434
        %v3441 = vpack.c.bf16 %v3437, %v3435
        %3442 = vrot.lane.b32.xlu0 %v3363, 16
        %v3443 = vpop.permute.xlu0 %3442
        %3444 = vrot.lane.b32.xlu0 %v3365, 16
        %v3445 = vpop.permute.xlu0 %3444
        %3446 = vrot.lane.b32.xlu0 %v3367, 16
        %v3447 = vpop.permute.xlu0 %3446
        %3448 = vrot.lane.b32.xlu0 %v3369, 16
        %v3449 = vpop.permute.xlu0 %3448
        %3454 = vrot.lane.b32.xlu0 %v3362, 16
        %v3455 = vpop.permute.xlu0 %3454
        %3456 = vrot.lane.b32.xlu0 %v3364, 16
        %v3457 = vpop.permute.xlu0 %3456
        %3458 = vrot.lane.b32.xlu0 %v3366, 16
        %v3459 = vpop.permute.xlu0 %3458
        %3460 = vrot.lane.b32.xlu0 %v3368, 16
        %v3461 = vpop.permute.xlu0 %3460
        %v3462 = vsel %vm1405, %v3455, %v3443
        %v3463 = vsel %vm1405, %v3457, %v3445
        %v3464 = vsel %vm1405, %v3459, %v3447
        %v3465 = vsel %vm1405, %v3461, %v3449
        %v3474 = vsel %vm1405, %v3443, %v3455
        %v3475 = vsel %vm1405, %v3445, %v3457
        %v3476 = vsel %vm1405, %v3447, %v3459
        %v3477 = vsel %vm1405, %v3449, %v3461
        %v3478 = vld [vmem:[%s1422] ss:$8 sm:$0x3]
        %v3480 = vperm.slane %v3478, 0
        %v3481 = vperm.slane %v3478, 1
        %v3484 = vmul.f32 %v3474, %v3480
        %v3485 = vmul.f32 %v3462, %v3481
        %v3486 = vmul.f32 %v3475, %v3480
        %v3487 = vmul.f32 %v3463, %v3481
        %v3488 = vmul.f32 %v3476, %v3480
        %v3489 = vmul.f32 %v3464, %v3481
        %v3490 = vmul.f32 %v3477, %v3480
        %v3491 = vmul.f32 %v3465, %v3481
        %v3492 = vpack.c.bf16 %v3486, %v3484
        %v3493 = vpack.c.bf16 %v3487, %v3485
        %v3494 = vpack.c.bf16 %v3490, %v3488
        %v3495 = vpack.c.bf16 %v3491, %v3489
        %v3497 = vsel %vm1451, %v3371, 0
        %3499 = vmatpush.bf16.msra.mxu0 0
        %3500 = vmatpush.bf16.msra.mxu0 0
        %3501 = vmatpush.bf16.msra.mxu0 0
        %3502 = vmatpush.bf16.msra.mxu0 0
        %3503 = vmatpush.bf16.msra.mxu0 0
        %3504 = vmatpush.bf16.msra.mxu0 0
        %3505 = vmatpush.bf16.msra.mxu0 %v3494
        %3506 = vmatpush.bf16.msra.mxu0 %v3492
        %3507 = vmatmul.bf16.gmra.mxu0 %v3497
        %v3508 = vpop.f32.mrf.mxu0
        %v3509 = vadd.f32 0.0, %v3508
        %v3510 = vpop.f32.mrf.mxu0
        %3511 = vdwg.mxu0
        %3512 = vmatpush.bf16.msra.mxu0 0
        %3513 = vmatpush.bf16.msra.mxu0 0
        %3514 = vmatpush.bf16.msra.mxu0 0
        %3515 = vmatpush.bf16.msra.mxu0 0
        %3516 = vmatpush.bf16.msra.mxu0 0
        %3517 = vmatpush.bf16.msra.mxu0 0
        %3518 = vmatpush.bf16.msra.mxu0 %v3495
        %3519 = vmatpush.bf16.msra.mxu0 %v3493
        %3520 = vmatmul.bf16.gmra.mxu0 %v3497
        %v3521 = vpop.f32.mrf.mxu0
        %v3522 = vadd.f32 0.0, %v3521
        %v3523 = vpop.f32.mrf.mxu0
        %3524 = vdwg.mxu0
        %v3526 = vsel %vm1451, %v3370, 0
        %3528 = vmatpush.bf16.msra.mxu0 0
        %3529 = vmatpush.bf16.msra.mxu0 0
        %3530 = vmatpush.bf16.msra.mxu0 0
        %3531 = vmatpush.bf16.msra.mxu0 0
        %3532 = vmatpush.bf16.msra.mxu0 0
        %3533 = vmatpush.bf16.msra.mxu0 0
        %3534 = vmatpush.bf16.msra.mxu0 %v3440
        %3535 = vmatpush.bf16.msra.mxu0 %v3438
        %3536 = vmatmul.bf16.gmra.mxu0 %v3526
        %v3537 = vpop.f32.mrf.mxu0
        %v3538 = vadd.f32 %v3509, %v3537
        %v3539 = vpop.f32.mrf.mxu0
        %3540 = vdwg.mxu0
        %3541 = vmatpush.bf16.msra.mxu0 0
        %3542 = vmatpush.bf16.msra.mxu0 0
        %3543 = vmatpush.bf16.msra.mxu0 0
        %3544 = vmatpush.bf16.msra.mxu0 0
        %3545 = vmatpush.bf16.msra.mxu0 0
        %3546 = vmatpush.bf16.msra.mxu0 0
        %3547 = vmatpush.bf16.msra.mxu0 %v3441
        %3548 = vmatpush.bf16.msra.mxu0 %v3439
        %3549 = vmatmul.bf16.gmra.mxu0 %v3526
        %v3550 = vpop.f32.mrf.mxu0
        %v3551 = vadd.f32 %v3522, %v3550
        %v3552 = vpop.f32.mrf.mxu0
        %3553 = vdwg.mxu0
        %3554 = vrot.lane.b32.xlu0 %v3363, 15
        %v3555 = vpop.permute.xlu0 %3554
        %3556 = vrot.lane.b32.xlu0 %v3365, 15
        %v3557 = vpop.permute.xlu0 %3556
        %3558 = vrot.lane.b32.xlu0 %v3367, 15
        %v3559 = vpop.permute.xlu0 %3558
        %3560 = vrot.lane.b32.xlu0 %v3369, 15
        %v3561 = vpop.permute.xlu0 %3560
        %3566 = vrot.lane.b32.xlu0 %v3362, 15
        %v3567 = vpop.permute.xlu0 %3566
        %3568 = vrot.lane.b32.xlu0 %v3364, 15
        %v3569 = vpop.permute.xlu0 %3568
        %3570 = vrot.lane.b32.xlu0 %v3366, 15
        %v3571 = vpop.permute.xlu0 %3570
        %3572 = vrot.lane.b32.xlu0 %v3368, 15
        %v3573 = vpop.permute.xlu0 %3572
        %v3574 = vsel %vm1570, %v3567, %v3555
        %v3575 = vsel %vm1570, %v3569, %v3557
        %v3576 = vsel %vm1570, %v3571, %v3559
        %v3577 = vsel %vm1570, %v3573, %v3561
        %v3586 = vsel %vm1570, %v3555, %v3567
        %v3587 = vsel %vm1570, %v3557, %v3569
        %v3588 = vsel %vm1570, %v3559, %v3571
        %v3589 = vsel %vm1570, %v3561, %v3573
        %v3590 = vld [vmem:[%s1587] ss:$8 sm:$0x3]
        %v3592 = vperm.slane %v3590, 0
        %v3593 = vperm.slane %v3590, 1
        %v3596 = vmul.f32 %v3586, %v3592
        %v3597 = vmul.f32 %v3574, %v3593
        %v3598 = vmul.f32 %v3587, %v3592
        %v3599 = vmul.f32 %v3575, %v3593
        %v3600 = vmul.f32 %v3588, %v3592
        %v3601 = vmul.f32 %v3576, %v3593
        %v3602 = vmul.f32 %v3589, %v3592
        %v3603 = vmul.f32 %v3577, %v3593
        %v3604 = vpack.c.bf16 %v3598, %v3596
        %v3605 = vpack.c.bf16 %v3599, %v3597
        %v3606 = vpack.c.bf16 %v3602, %v3600
        %v3607 = vpack.c.bf16 %v3603, %v3601
        %v3609 = vsel %vm1451, %v3372, 0
        %3611 = vmatpush.bf16.msra.mxu0 0
        %3612 = vmatpush.bf16.msra.mxu0 0
        %3613 = vmatpush.bf16.msra.mxu0 0
        %3614 = vmatpush.bf16.msra.mxu0 0
        %3615 = vmatpush.bf16.msra.mxu0 0
        %3616 = vmatpush.bf16.msra.mxu0 0
        %3617 = vmatpush.bf16.msra.mxu0 %v3606
        %3618 = vmatpush.bf16.msra.mxu0 %v3604
        %3619 = vmatmul.bf16.gmra.mxu0 %v3609
        %v3620 = vpop.f32.mrf.mxu0
        %v3621 = vadd.f32 0.0, %v3620
        %v3622 = vpop.f32.mrf.mxu0
        %3623 = vdwg.mxu0
        %3624 = vmatpush.bf16.msra.mxu0 0
        %3625 = vmatpush.bf16.msra.mxu0 0
        %3626 = vmatpush.bf16.msra.mxu0 0
        %3627 = vmatpush.bf16.msra.mxu0 0
        %3628 = vmatpush.bf16.msra.mxu0 0
        %3629 = vmatpush.bf16.msra.mxu0 0
        %3630 = vmatpush.bf16.msra.mxu0 %v3607
        %3631 = vmatpush.bf16.msra.mxu0 %v3605
        %3632 = vmatmul.bf16.gmra.mxu0 %v3609
        %v3633 = vpop.f32.mrf.mxu0
        %v3634 = vadd.f32 0.0, %v3633
        %v3635 = vpop.f32.mrf.mxu0
        %3636 = vdwg.mxu0
        %v3637 = vadd.f32 %v3538, %v3621
        %v3638 = vadd.f32 %v3551, %v3634
        %3639 = vrot.lane.b32.xlu0 %v3363, 1
        %v3640 = vpop.permute.xlu0 %3639
        %3641 = vrot.lane.b32.xlu0 %v3365, 1
        %v3642 = vpop.permute.xlu0 %3641
        %3643 = vrot.lane.b32.xlu0 %v3367, 1
        %v3644 = vpop.permute.xlu0 %3643
        %3645 = vrot.lane.b32.xlu0 %v3369, 1
        %v3646 = vpop.permute.xlu0 %3645
        %3651 = vrot.lane.b32.xlu0 %v3362, 1
        %v3652 = vpop.permute.xlu0 %3651
        %3653 = vrot.lane.b32.xlu0 %v3364, 1
        %v3654 = vpop.permute.xlu0 %3653
        %3655 = vrot.lane.b32.xlu0 %v3366, 1
        %v3656 = vpop.permute.xlu0 %3655
        %3657 = vrot.lane.b32.xlu0 %v3368, 1
        %v3658 = vpop.permute.xlu0 %3657
        %v3659 = vsel %vm1688, %v3652, %v3640
        %v3660 = vsel %vm1688, %v3654, %v3642
        %v3661 = vsel %vm1688, %v3656, %v3644
        %v3662 = vsel %vm1688, %v3658, %v3646
        %v3671 = vsel %vm1688, %v3640, %v3652
        %v3672 = vsel %vm1688, %v3642, %v3654
        %v3673 = vsel %vm1688, %v3644, %v3656
        %v3674 = vsel %vm1688, %v3646, %v3658
        %v3675 = vld [vmem:[%s1705] ss:$8 sm:$0x3]
        %v3677 = vperm.slane %v3675, 0
        %v3678 = vperm.slane %v3675, 1
        %v3681 = vmul.f32 %v3671, %v3677
        %v3682 = vmul.f32 %v3659, %v3678
        %v3683 = vmul.f32 %v3672, %v3677
        %v3684 = vmul.f32 %v3660, %v3678
        %v3685 = vmul.f32 %v3673, %v3677
        %v3686 = vmul.f32 %v3661, %v3678
        %v3687 = vmul.f32 %v3674, %v3677
        %v3688 = vmul.f32 %v3662, %v3678
        %v3689 = vpack.c.bf16 %v3683, %v3681
        %v3690 = vpack.c.bf16 %v3684, %v3682
        %v3691 = vpack.c.bf16 %v3687, %v3685
        %v3692 = vpack.c.bf16 %v3688, %v3686
        %v3694 = vsel %vm1451, %v3373, 0
        %3696 = vmatpush.bf16.msra.mxu0 0
        %3697 = vmatpush.bf16.msra.mxu0 0
        %3698 = vmatpush.bf16.msra.mxu0 0
        %3699 = vmatpush.bf16.msra.mxu0 0
        %3700 = vmatpush.bf16.msra.mxu0 0
        %3701 = vmatpush.bf16.msra.mxu0 0
        %3702 = vmatpush.bf16.msra.mxu0 %v3691
        %3703 = vmatpush.bf16.msra.mxu0 %v3689
        %3704 = vmatmul.bf16.gmra.mxu0 %v3694
        %v3705 = vpop.f32.mrf.mxu0
        %v3706 = vadd.f32 0.0, %v3705
        %v3707 = vpop.f32.mrf.mxu0
        %3708 = vdwg.mxu0
        %3709 = vmatpush.bf16.msra.mxu0 0
        %3710 = vmatpush.bf16.msra.mxu0 0
        %3711 = vmatpush.bf16.msra.mxu0 0
        %3712 = vmatpush.bf16.msra.mxu0 0
        %3713 = vmatpush.bf16.msra.mxu0 0
        %3714 = vmatpush.bf16.msra.mxu0 0
        %3715 = vmatpush.bf16.msra.mxu0 %v3692
        %3716 = vmatpush.bf16.msra.mxu0 %v3690
        %3717 = vmatmul.bf16.gmra.mxu0 %v3694
        %v3718 = vpop.f32.mrf.mxu0
        %v3719 = vadd.f32 0.0, %v3718
        %v3720 = vpop.f32.mrf.mxu0
        %3721 = vdwg.mxu0
        %v3722 = vadd.f32 %v3637, %v3706
        %v3723 = vadd.f32 %v3638, %v3719
        %v3724 = vpack.c.bf16 %v3364, %v3362
        %v3725 = vpack.c.bf16 %v3365, %v3363
        %v3726 = vpack.c.bf16 %v3368, %v3366
        %v3727 = vpack.c.bf16 %v3369, %v3367
        %v3729 = vsel %vm1451, %v3374, 0
        %3731 = vmatpush.bf16.msra.mxu0 0
        %3732 = vmatpush.bf16.msra.mxu0 0
        %3733 = vmatpush.bf16.msra.mxu0 0
        %3734 = vmatpush.bf16.msra.mxu0 0
        %3735 = vmatpush.bf16.msra.mxu0 0
        %3736 = vmatpush.bf16.msra.mxu0 0
        %3737 = vmatpush.bf16.msra.mxu0 %v3726
        %3738 = vmatpush.bf16.msra.mxu0 %v3724
        %3739 = vmatmul.bf16.gmra.mxu0 %v3729
        %v3740 = vpop.f32.mrf.mxu0
        %v3741 = vadd.f32 0.0, %v3740
        %v3742 = vpop.f32.mrf.mxu0
        %3743 = vdwg.mxu0
        %3744 = vmatpush.bf16.msra.mxu0 0
        %3745 = vmatpush.bf16.msra.mxu0 0
        %3746 = vmatpush.bf16.msra.mxu0 0
        %3747 = vmatpush.bf16.msra.mxu0 0
        %3748 = vmatpush.bf16.msra.mxu0 0
        %3749 = vmatpush.bf16.msra.mxu0 0
        %3750 = vmatpush.bf16.msra.mxu0 %v3727
        %3751 = vmatpush.bf16.msra.mxu0 %v3725
        %3752 = vmatmul.bf16.gmra.mxu0 %v3729
        %v3753 = vpop.f32.mrf.mxu0
        %v3754 = vadd.f32 0.0, %v3753
        %v3755 = vpop.f32.mrf.mxu0
        %3756 = vdwg.mxu0
        %v3757 = vadd.f32 %v3722, %v3741
        %v3758 = vadd.f32 %v3723, %v3754
        %3759 = vrot.lane.b32.xlu0 %v3362, 127
        %v3760 = vpop.permute.xlu0 %3759
        %3761 = vrot.lane.b32.xlu0 %v3363, 127
        %v3762 = vpop.permute.xlu0 %3761
        %3763 = vrot.lane.b32.xlu0 %v3364, 127
        %v3764 = vpop.permute.xlu0 %3763
        %3765 = vrot.lane.b32.xlu0 %v3365, 127
        %v3766 = vpop.permute.xlu0 %3765
        %3767 = vrot.lane.b32.xlu0 %v3366, 127
        %v3768 = vpop.permute.xlu0 %3767
        %3769 = vrot.lane.b32.xlu0 %v3367, 127
        %v3770 = vpop.permute.xlu0 %3769
        %3771 = vrot.lane.b32.xlu0 %v3368, 127
        %v3772 = vpop.permute.xlu0 %3771
        %3773 = vrot.lane.b32.xlu0 %v3369, 127
        %v3774 = vpop.permute.xlu0 %3773
        %v3775 = vsel %vm1868, %v3760, %v3762
        %v3776 = vsel %vm1868, %v3764, %v3766
        %v3777 = vsel %vm1868, %v3768, %v3770
        %v3778 = vsel %vm1868, %v3772, %v3774
        %v3791 = vsel %vm1868, %v3762, %v3760
        %v3792 = vsel %vm1868, %v3766, %v3764
        %v3793 = vsel %vm1868, %v3770, %v3768
        %v3794 = vsel %vm1868, %v3774, %v3772
        %v3795 = vld [vmem:[%s1889] ss:$8 sm:$0x3]
        %v3797 = vperm.slane %v3795, 0
        %v3798 = vperm.slane %v3795, 1
        %v3801 = vmul.f32 %v3775, %v3797
        %v3802 = vmul.f32 %v3791, %v3798
        %v3803 = vmul.f32 %v3776, %v3797
        %v3804 = vmul.f32 %v3792, %v3798
        %v3805 = vmul.f32 %v3777, %v3797
        %v3806 = vmul.f32 %v3793, %v3798
        %v3807 = vmul.f32 %v3778, %v3797
        %v3808 = vmul.f32 %v3794, %v3798
        %v3809 = vpack.c.bf16 %v3803, %v3801
        %v3810 = vpack.c.bf16 %v3804, %v3802
        %v3811 = vpack.c.bf16 %v3807, %v3805
        %v3812 = vpack.c.bf16 %v3808, %v3806
        %v3814 = vsel %vm1451, %v3375, 0
        %3816 = vmatpush.bf16.msra.mxu0 0
        %3817 = vmatpush.bf16.msra.mxu0 0
        %3818 = vmatpush.bf16.msra.mxu0 0
        %3819 = vmatpush.bf16.msra.mxu0 0
        %3820 = vmatpush.bf16.msra.mxu0 0
        %3821 = vmatpush.bf16.msra.mxu0 0
        %3822 = vmatpush.bf16.msra.mxu0 %v3811
        %3823 = vmatpush.bf16.msra.mxu0 %v3809
        %3824 = vmatmul.bf16.gmra.mxu0 %v3814
        %v3825 = vpop.f32.mrf.mxu0
        %v3826 = vadd.f32 0.0, %v3825
        %v3827 = vpop.f32.mrf.mxu0
        %3828 = vdwg.mxu0
        %3829 = vmatpush.bf16.msra.mxu0 0
        %3830 = vmatpush.bf16.msra.mxu0 0
        %3831 = vmatpush.bf16.msra.mxu0 0
        %3832 = vmatpush.bf16.msra.mxu0 0
        %3833 = vmatpush.bf16.msra.mxu0 0
        %3834 = vmatpush.bf16.msra.mxu0 0
        %3835 = vmatpush.bf16.msra.mxu0 %v3812
        %3836 = vmatpush.bf16.msra.mxu0 %v3810
        %3837 = vmatmul.bf16.gmra.mxu0 %v3814
        %v3838 = vpop.f32.mrf.mxu0
        %v3839 = vadd.f32 0.0, %v3838
        %v3840 = vpop.f32.mrf.mxu0
        %3841 = vdwg.mxu0
        %v3842 = vadd.f32 %v3757, %v3826
        %v3843 = vadd.f32 %v3758, %v3839
        %3844 = vrot.lane.b32.xlu0 %v3362, 113
        %v3845 = vpop.permute.xlu0 %3844
        %3846 = vrot.lane.b32.xlu0 %v3363, 113
        %v3847 = vpop.permute.xlu0 %3846
        %3848 = vrot.lane.b32.xlu0 %v3364, 113
        %v3849 = vpop.permute.xlu0 %3848
        %3850 = vrot.lane.b32.xlu0 %v3365, 113
        %v3851 = vpop.permute.xlu0 %3850
        %3852 = vrot.lane.b32.xlu0 %v3366, 113
        %v3853 = vpop.permute.xlu0 %3852
        %3854 = vrot.lane.b32.xlu0 %v3367, 113
        %v3855 = vpop.permute.xlu0 %3854
        %3856 = vrot.lane.b32.xlu0 %v3368, 113
        %v3857 = vpop.permute.xlu0 %3856
        %3858 = vrot.lane.b32.xlu0 %v3369, 113
        %v3859 = vpop.permute.xlu0 %3858
        %v3860 = vsel %vm1986, %v3845, %v3847
        %v3861 = vsel %vm1986, %v3849, %v3851
        %v3862 = vsel %vm1986, %v3853, %v3855
        %v3863 = vsel %vm1986, %v3857, %v3859
        %v3876 = vsel %vm1986, %v3847, %v3845
        %v3877 = vsel %vm1986, %v3851, %v3849
        %v3878 = vsel %vm1986, %v3855, %v3853
        %v3879 = vsel %vm1986, %v3859, %v3857
        %v3880 = vld [vmem:[%s2007] ss:$8 sm:$0x3]
        %v3882 = vperm.slane %v3880, 0
        %v3883 = vperm.slane %v3880, 1
        %v3886 = vmul.f32 %v3860, %v3882
        %v3887 = vmul.f32 %v3876, %v3883
        %v3888 = vmul.f32 %v3861, %v3882
        %v3889 = vmul.f32 %v3877, %v3883
        %v3890 = vmul.f32 %v3862, %v3882
        %v3891 = vmul.f32 %v3878, %v3883
        %v3892 = vmul.f32 %v3863, %v3882
        %v3893 = vmul.f32 %v3879, %v3883
        %v3894 = vpack.c.bf16 %v3888, %v3886
        %v3895 = vpack.c.bf16 %v3889, %v3887
        %v3896 = vpack.c.bf16 %v3892, %v3890
        %v3897 = vpack.c.bf16 %v3893, %v3891
        %v3899 = vsel %vm1451, %v3376, 0
        %3901 = vmatpush.bf16.msra.mxu0 0
        %3902 = vmatpush.bf16.msra.mxu0 0
        %3903 = vmatpush.bf16.msra.mxu0 0
        %3904 = vmatpush.bf16.msra.mxu0 0
        %3905 = vmatpush.bf16.msra.mxu0 0
        %3906 = vmatpush.bf16.msra.mxu0 0
        %3907 = vmatpush.bf16.msra.mxu0 %v3896
        %3908 = vmatpush.bf16.msra.mxu0 %v3894
        %3909 = vmatmul.bf16.gmra.mxu0 %v3899
        %v3910 = vpop.f32.mrf.mxu0
        %v3911 = vadd.f32 0.0, %v3910
        %v3912 = vpop.f32.mrf.mxu0
        %3913 = vdwg.mxu0
        %3914 = vmatpush.bf16.msra.mxu0 0
        %3915 = vmatpush.bf16.msra.mxu0 0
        %3916 = vmatpush.bf16.msra.mxu0 0
        %3917 = vmatpush.bf16.msra.mxu0 0
        %3918 = vmatpush.bf16.msra.mxu0 0
        %3919 = vmatpush.bf16.msra.mxu0 0
        %3920 = vmatpush.bf16.msra.mxu0 %v3897
        %3921 = vmatpush.bf16.msra.mxu0 %v3895
        %3922 = vmatmul.bf16.gmra.mxu0 %v3899
        %v3923 = vpop.f32.mrf.mxu0
        %v3924 = vadd.f32 0.0, %v3923
        %v3925 = vpop.f32.mrf.mxu0
        %3926 = vdwg.mxu0
        %v3927 = vadd.f32 %v3842, %v3911
        %v3928 = vadd.f32 %v3843, %v3924
        %3929 = vrot.lane.b32.xlu0 %v3362, 112
        %v3930 = vpop.permute.xlu0 %3929
        %3931 = vrot.lane.b32.xlu0 %v3363, 112
        %v3932 = vpop.permute.xlu0 %3931
        %3933 = vrot.lane.b32.xlu0 %v3364, 112
        %v3934 = vpop.permute.xlu0 %3933
        %3935 = vrot.lane.b32.xlu0 %v3365, 112
        %v3936 = vpop.permute.xlu0 %3935
        %3937 = vrot.lane.b32.xlu0 %v3366, 112
        %v3938 = vpop.permute.xlu0 %3937
        %3939 = vrot.lane.b32.xlu0 %v3367, 112
        %v3940 = vpop.permute.xlu0 %3939
        %3941 = vrot.lane.b32.xlu0 %v3368, 112
        %v3942 = vpop.permute.xlu0 %3941
        %3943 = vrot.lane.b32.xlu0 %v3369, 112
        %v3944 = vpop.permute.xlu0 %3943
        %v3945 = vsel %vm2104, %v3930, %v3932
        %v3946 = vsel %vm2104, %v3934, %v3936
        %v3947 = vsel %vm2104, %v3938, %v3940
        %v3948 = vsel %vm2104, %v3942, %v3944
        %v3961 = vsel %vm2104, %v3932, %v3930
        %v3962 = vsel %vm2104, %v3936, %v3934
        %v3963 = vsel %vm2104, %v3940, %v3938
        %v3964 = vsel %vm2104, %v3944, %v3942
        %v3965 = vld [vmem:[%s2125] ss:$8 sm:$0x3]
        %v3967 = vperm.slane %v3965, 0
        %v3968 = vperm.slane %v3965, 1
        %v3971 = vmul.f32 %v3945, %v3967
        %v3972 = vmul.f32 %v3961, %v3968
        %v3973 = vmul.f32 %v3946, %v3967
        %v3974 = vmul.f32 %v3962, %v3968
        %v3975 = vmul.f32 %v3947, %v3967
        %v3976 = vmul.f32 %v3963, %v3968
        %v3977 = vmul.f32 %v3948, %v3967
        %v3978 = vmul.f32 %v3964, %v3968
        %v3979 = vpack.c.bf16 %v3973, %v3971
        %v3980 = vpack.c.bf16 %v3974, %v3972
        %v3981 = vpack.c.bf16 %v3977, %v3975
        %v3982 = vpack.c.bf16 %v3978, %v3976
        %v3984 = vsel %vm1451, %v3377, 0
        %3986 = vmatpush.bf16.msra.mxu0 0
        %3987 = vmatpush.bf16.msra.mxu0 0
        %3988 = vmatpush.bf16.msra.mxu0 0
        %3989 = vmatpush.bf16.msra.mxu0 0
        %3990 = vmatpush.bf16.msra.mxu0 0
        %3991 = vmatpush.bf16.msra.mxu0 0
        %3992 = vmatpush.bf16.msra.mxu0 %v3981
        %3993 = vmatpush.bf16.msra.mxu0 %v3979
        %3994 = vmatmul.bf16.gmra.mxu0 %v3984
        %v3995 = vpop.f32.mrf.mxu0
        %v3996 = vadd.f32 0.0, %v3995
        %v3997 = vpop.f32.mrf.mxu0
        %3998 = vdwg.mxu0
        %3999 = vmatpush.bf16.msra.mxu0 0
        %4000 = vmatpush.bf16.msra.mxu0 0
        %4001 = vmatpush.bf16.msra.mxu0 0
        %4002 = vmatpush.bf16.msra.mxu0 0
        %4003 = vmatpush.bf16.msra.mxu0 0
        %4004 = vmatpush.bf16.msra.mxu0 0
        %4005 = vmatpush.bf16.msra.mxu0 %v3982
        %4006 = vmatpush.bf16.msra.mxu0 %v3980
        %4007 = vmatmul.bf16.gmra.mxu0 %v3984
        %v4008 = vpop.f32.mrf.mxu0
        %v4009 = vadd.f32 0.0, %v4008
        %v4010 = vpop.f32.mrf.mxu0
        %4011 = vdwg.mxu0
        %v4012 = vadd.f32 %v3927, %v3996
        %v4013 = vadd.f32 %v3928, %v4009
        %4014 = vrot.lane.b32.xlu0 %v3362, 111
        %v4015 = vpop.permute.xlu0 %4014
        %4016 = vrot.lane.b32.xlu0 %v3363, 111
        %v4017 = vpop.permute.xlu0 %4016
        %4018 = vrot.lane.b32.xlu0 %v3364, 111
        %v4019 = vpop.permute.xlu0 %4018
        %4020 = vrot.lane.b32.xlu0 %v3365, 111
        %v4021 = vpop.permute.xlu0 %4020
        %4022 = vrot.lane.b32.xlu0 %v3366, 111
        %v4023 = vpop.permute.xlu0 %4022
        %4024 = vrot.lane.b32.xlu0 %v3367, 111
        %v4025 = vpop.permute.xlu0 %4024
        %4026 = vrot.lane.b32.xlu0 %v3368, 111
        %v4027 = vpop.permute.xlu0 %4026
        %4028 = vrot.lane.b32.xlu0 %v3369, 111
        %v4029 = vpop.permute.xlu0 %4028
        %v4030 = vsel %vm2222, %v4015, %v4017
        %v4031 = vsel %vm2222, %v4019, %v4021
        %v4032 = vsel %vm2222, %v4023, %v4025
        %v4033 = vsel %vm2222, %v4027, %v4029
        %v4046 = vsel %vm2222, %v4017, %v4015
        %v4047 = vsel %vm2222, %v4021, %v4019
        %v4048 = vsel %vm2222, %v4025, %v4023
        %v4049 = vsel %vm2222, %v4029, %v4027
        %v4050 = vld [vmem:[%s2243] ss:$8 sm:$0x3]
        %v4052 = vperm.slane %v4050, 0
        %v4053 = vperm.slane %v4050, 1
        %v4056 = vmul.f32 %v4030, %v4052
        %v4057 = vmul.f32 %v4046, %v4053
        %v4058 = vmul.f32 %v4031, %v4052
        %v4059 = vmul.f32 %v4047, %v4053
        %v4060 = vmul.f32 %v4032, %v4052
        %v4061 = vmul.f32 %v4048, %v4053
        %v4062 = vmul.f32 %v4033, %v4052
        %v4063 = vmul.f32 %v4049, %v4053
        %v4064 = vpack.c.bf16 %v4058, %v4056
        %v4065 = vpack.c.bf16 %v4059, %v4057
        %v4066 = vpack.c.bf16 %v4062, %v4060
        %v4067 = vpack.c.bf16 %v4063, %v4061
        %v4069 = vsel %vm1451, %v3378, 0
        %4071 = vmatpush.bf16.msra.mxu0 0
        %4072 = vmatpush.bf16.msra.mxu0 0
        %4073 = vmatpush.bf16.msra.mxu0 0
        %4074 = vmatpush.bf16.msra.mxu0 0
        %4075 = vmatpush.bf16.msra.mxu0 0
        %4076 = vmatpush.bf16.msra.mxu0 0
        %4077 = vmatpush.bf16.msra.mxu0 %v4066
        %4078 = vmatpush.bf16.msra.mxu0 %v4064
        %4079 = vmatmul.bf16.gmra.mxu0 %v4069
        %v4080 = vpop.f32.mrf.mxu0
        %v4081 = vadd.f32 0.0, %v4080
        %v4082 = vpop.f32.mrf.mxu0
        %4083 = vdwg.mxu0
        %4084 = vmatpush.bf16.msra.mxu0 0
        %4085 = vmatpush.bf16.msra.mxu0 0
        %4086 = vmatpush.bf16.msra.mxu0 0
        %4087 = vmatpush.bf16.msra.mxu0 0
        %4088 = vmatpush.bf16.msra.mxu0 0
        %4089 = vmatpush.bf16.msra.mxu0 0
        %4090 = vmatpush.bf16.msra.mxu0 %v4067
        %4091 = vmatpush.bf16.msra.mxu0 %v4065
        %4092 = vmatmul.bf16.gmra.mxu0 %v4069
        %v4093 = vpop.f32.mrf.mxu0
        %v4094 = vadd.f32 0.0, %v4093
        %v4095 = vpop.f32.mrf.mxu0
        %4096 = vdwg.mxu0
        %v4097 = vadd.f32 %v4012, %v4081
        %v4098 = vadd.f32 %v4013, %v4094
        %4100 = vset.pattern.permute.xlu0 0
        %4101 = vperm.xlu0 %4100, %v3379
        %v4102 = vpop.permute.xlu0 %4101
        %v4104 = vperm.slane %v4102, 0
        %v4105 = vadd.f32 %v4097, %v4104
        %v4106 = vadd.f32 %v4098, %v4104
        %v4109 = vrot.slane %v4106, 7
        %vm4110 = vcmask 1040384
        %v4111 = vsel %vm4110, %v4105, %v4109
        %v4113 = vlaneseq
        %vm4114 = vcmp.ge.s32.totalorder %v4113, 0
        %vm4115 = vcmp.lt.s32.totalorder %v4113, 256
        %vm4116 = vmand %vm4114, %vm4115
        %4117 = vst.msk [vmem:[%s357] sm:$0x3] %vm4116, %v4111
      $region60: #{resnet_shape_forward.1} parent=51 // pred_fallthru
        _
      %p4118 = scmp.lt.s32.totalorder %s25, 1
      %s4119 = scalar_select %p4118, %s25, 1
      %s4120 = smul.addr %s4119, 2
      %s4121 = scalar_lea.vmem %s8, %s4120
      // Predicated region
      $region61: #{resnet_shape_forward.1} parent=51 // pred_check
        %p4122 = pneg %p234
      $region62: #{resnet_shape_forward.1} parent=51 // pred_check_branch
        %4124 = sbr.rel (%p4122) target = $region64
      $region63: #{resnet_shape_forward.1} parent=51 // pred_region
        _
      $region64: #{resnet_shape_forward.1} parent=51 // pred_fallthru
        _
    $region52: #{resnet_shape_forward.1} parent=5 // pred_fallthru
      _
    %p4125 = scmp.le.s32.totalorder 2, %s16
    // Predicated region
    $region65: #{resnet_shape_forward.1} parent=5 // pred_check
      %p4126 = pneg %p4125
    $region66: #{resnet_shape_forward.1} parent=5 // pred_check_branch
      %4128 = sbr.rel (%p4126) target = $region68
    $region67: #{resnet_shape_forward.1} parent=5 // pred_region
      %s4129 = ssub.s32 %s16, 2
      // Predicated region
      $region69: #{resnet_shape_forward.1} parent=67 // pred_check
        %p4130 = pneg %p240
      $region70: #{resnet_shape_forward.1} parent=67 // pred_check_branch
        %4132 = sbr.rel (%p4130) target = $region72
      $region71: #{resnet_shape_forward.1} parent=67 // pred_region
        %p4133 = scmp.lt.s32.totalorder %s27, 1
        %s4134 = scalar_select %p4133, %s27, 1
        %s4135 = smul.addr %s4134, 2
        %s4136 = scalar_lea.vmem %s8, %s4135
      $region72: #{resnet_shape_forward.1} parent=67 // pred_fallthru
        _
    $region68: #{resnet_shape_forward.1} parent=5 // pred_fallthru
      _
  $region6: #{resnet_shape_forward.1} parent=0 // loop_footer
    %s20 = sadd.s32 1, %s16
  $region7: #{resnet_shape_forward.1} parent=0 // loop_footer_branch
    %15 = sbr.rel target = $region3
  $region8: #{resnet_shape_forward.1} parent=0 // loop_exit
    _

</llo_original>
